<compile_context>
chip_gen: v7x
topology: tpu7x:2x2x1
jax: 0.10.0
libtpu: 0.0.40
codegen_flags: <defaults>
</compile_context>

<pallas_src>
import jax
import jax.numpy as jnp
from jax.experimental import pallas as pl
from jax.experimental.pallas import tpu as pltpu  # noqa: F401  (TPU backend import)


# ----------------------------------------------------------------------------- kernel

def _build_semantic_kernel(T, B, H, num_layers):
    """Build the fused kernel for static (T, B, H, num_layers)."""

    def kernel(x_ref, *refs):
        out_ref = refs[-1]
        w_refs = refs[:-1]          # per layer: wih_f, whh_f, b_f, wih_b, whh_b, b_b

        def run_direction(x_flat, wih, whh, bias, reverse):
            # Hoisted input projection: one MXU matmul over all T*B rows, bias folded.
            gates_x = (
                jnp.dot(x_flat, wih, preferred_element_type=jnp.float32) + bias
            )  # (T*B, 4H)
            h = jnp.zeros((B, H), jnp.float32)
            c = jnp.zeros((B, H), jnp.float32)
            outs = [None] * T
            order = range(T - 1, -1, -1) if reverse else range(T)
            for t in order:  # static, fully unrolled; only h@W_hh on the serial path
                gates = gates_x[t * B:(t + 1) * B, :] + jnp.dot(
                    h, whh, preferred_element_type=jnp.float32)
                i_g = jax.nn.sigmoid(gates[:, 0 * H:1 * H])
                f_g = jax.nn.sigmoid(gates[:, 1 * H:2 * H])
                g_g = jnp.tanh(gates[:, 2 * H:3 * H])
                o_g = jax.nn.sigmoid(gates[:, 3 * H:4 * H])
                c = f_g * c + i_g * g_g
                h = o_g * jnp.tanh(c)
                outs[t] = h
            return outs

        x_flat = x_ref[...]  # (T*B, D) time-major rows
        for layer in range(num_layers):
            wih_f, whh_f, b_f, wih_b, whh_b, b_b = (
                w_refs[6 * layer + k][...] for k in range(6))
            outs_f = run_direction(x_flat, wih_f, whh_f, b_f, reverse=False)
            outs_b = run_direction(x_flat, wih_b, whh_b, b_b, reverse=True)
            if layer + 1 < num_layers:
                # Next layer's time-major input, assembled entirely in VMEM.
                x_flat = jnp.concatenate(
                    [jnp.concatenate([outs_f[t], outs_b[t]], axis=-1)
                     for t in range(T)], axis=0)  # (T*B, 2H)
            else:
                # Fused mean over time: only the (B, 2H) average leaves the kernel.
                acc = jnp.zeros((B, 2 * H), jnp.float32)
                for t in range(T):
                    acc = acc + jnp.concatenate([outs_f[t], outs_b[t]], axis=-1)
                out_ref[...] = (acc * (1.0 / T)).astype(out_ref.dtype)

    return kernel


# ----------------------------------------------------------------------------- wrapper

@jax.jit
def semantic_model_forward(x, params):
    """x: (B, T, input_dim) batch-first (as in the PyTorch module).

    params: list (per layer) of dicts with keys
      w_ih_f (D_in,4H), w_hh_f (H,4H), b_f (1,4H), w_ih_b, w_hh_b, b_b
    Returns (B, 2*H) = mean over time of the bidirectional LSTM output.
    """
    B, T, D = x.shape
    num_layers = len(params)
    H = params[0]["w_hh_f"].shape[0]

    # Batch-first -> time-major rows: row (t*B + b) = x[b, t, :].
    x_flat = jnp.transpose(x, (1, 0, 2)).reshape(T * B, D).astype(jnp.float32)

    flat_w = []
    for layer in params:
        flat_w += [layer["w_ih_f"], layer["w_hh_f"], layer["b_f"],
                   layer["w_ih_b"], layer["w_hh_b"], layer["b_b"]]

    kernel = _build_semantic_kernel(T=T, B=B, H=H, num_layers=num_layers)
    return pl.pallas_call(
        kernel,
        out_shape=jax.ShapeDtypeStruct((B, 2 * H), jnp.float32),
    )(x_flat, *flat_w)


# ----------------------------------------------------------------------------- reference

def _reference_forward(x, params):
    """Pure-JAX (non-Pallas) reference with identical math, for validation."""
    h = jnp.transpose(x, (1, 0, 2)).astype(jnp.float32)  # (T, B, D)
    T, B, _ = h.shape
    HIGH = jax.lax.Precision.HIGHEST

    def run(xs, wih, whh, b, reverse):
        Hd = whh.shape[0]

        def step(carry, x_t):
            h_prev, c_prev = carry
            g = (jnp.dot(x_t, wih, precision=HIGH)
                 + jnp.dot(h_prev, whh, precision=HIGH) + b[0])
            i = jax.nn.sigmoid(g[:, :Hd])
            f = jax.nn.sigmoid(g[:, Hd:2 * Hd])
            gg = jnp.tanh(g[:, 2 * Hd:3 * Hd])
            o = jax.nn.sigmoid(g[:, 3 * Hd:])
            c = f * c_prev + i * gg
            hh = o * jnp.tanh(c)
            return (hh, c), hh

        xs_dir = xs[::-1] if reverse else xs
        init = (jnp.zeros((B, Hd), jnp.float32), jnp.zeros((B, Hd), jnp.float32))
        _, ys = jax.lax.scan(step, init, xs_dir)
        return ys[::-1] if reverse else ys

    for layer in params:
        of = run(h, layer["w_ih_f"], layer["w_hh_f"], layer["b_f"], False)
        ob = run(h, layer["w_ih_b"], layer["w_hh_b"], layer["b_b"], True)
        h = jnp.concatenate([of, ob], axis=-1)
    return jnp.mean(h, axis=0)


# ----------------------------------------------------------------------------- params

def _xavier_uniform(key, shape):
    fan_out, fan_in = shape  # PyTorch weight shape (4H, D)
    bound = jnp.sqrt(6.0 / (fan_in + fan_out))
    return jax.random.uniform(key, shape, jnp.float32, -bound, bound)


def _orthogonal(key, shape):
    rows, cols = shape  # (4H, H), rows >= cols
    a = jax.random.normal(key, (rows, cols), jnp.float32)
    q, r = jnp.linalg.qr(a)
    q = q * jnp.sign(jnp.diag(r))  # match torch.nn.init.orthogonal_ sign convention
    return q


def init_semantic_model_params(key, num_layers, input_dim, hidden_dim):
    """Mirror nn.LSTM(bidirectional=True) parameters (xavier W_ih, orthogonal W_hh,
    zero biases, as in the module's __init_weights).  Weights stored transposed for
    the kernel; the two zero biases are folded into one."""
    params = []
    H = hidden_dim
    for layer in range(num_layers):
        d_in = input_dim if layer == 0 else 2 * hidden_dim
        key, k1, k2, k3, k4 = jax.random.split(key, 5)
        params.append({
            "w_ih_f": _xavier_uniform(k1, (4 * H, d_in)).T,   # (d_in, 4H)
            "w_hh_f": _orthogonal(k2, (4 * H, H)).T,          # (H, 4H)
            "b_f": jnp.zeros((1, 4 * H), jnp.float32),        # b_ih + b_hh = 0
            "w_ih_b": _xavier_uniform(k3, (4 * H, d_in)).T,
            "w_hh_b": _orthogonal(k4, (4 * H, H)).T,
            "b_b": jnp.zeros((1, 4 * H), jnp.float32),
        })
    return params


# ----------------------------------------------------------------------------- main

if __name__ == "__main__":
    B, T = 2, 8
    INPUT_DIM = 50      # matches module-level input_dim
    HIDDEN_DIM = 32     # small hidden size for the example
    NUM_LAYERS = 2      # matches module-level num_layers

    key = jax.random.PRNGKey(0)
    k_x, k_p = jax.random.split(key)

    x = jax.random.normal(k_x, (B, T, INPUT_DIM), jnp.float32)   # (B, T, D) batch-first
    params = init_semantic_model_params(k_p, NUM_LAYERS, INPUT_DIM, HIDDEN_DIM)

    out = semantic_model_forward(x, params)   # (B, 2*HIDDEN_DIM)
    jax.block_until_ready(out)

    ref = _reference_forward(x, params)
    assert out.shape == (B, 2 * HIDDEN_DIM), out.shape
    assert jnp.all(jnp.isfinite(out))
    assert jnp.allclose(out, ref, atol=2e-3, rtol=2e-3), float(jnp.max(jnp.abs(out - ref)))
    print("KERNEL_OK")
</pallas_src>

<mosaic_0001>
module attributes {stable_mosaic.version = 11 : i64} {
  func.func @kernel(%arg0: memref<16x50xf32, #tpu.memory_space<vmem>>, %arg1: memref<50x128xf32, #tpu.memory_space<vmem>>, %arg2: memref<32x128xf32, #tpu.memory_space<vmem>>, %arg3: memref<1x128xf32, #tpu.memory_space<vmem>>, %arg4: memref<50x128xf32, #tpu.memory_space<vmem>>, %arg5: memref<32x128xf32, #tpu.memory_space<vmem>>, %arg6: memref<1x128xf32, #tpu.memory_space<vmem>>, %arg7: memref<64x128xf32, #tpu.memory_space<vmem>>, %arg8: memref<32x128xf32, #tpu.memory_space<vmem>>, %arg9: memref<1x128xf32, #tpu.memory_space<vmem>>, %arg10: memref<64x128xf32, #tpu.memory_space<vmem>>, %arg11: memref<32x128xf32, #tpu.memory_space<vmem>>, %arg12: memref<1x128xf32, #tpu.memory_space<vmem>>, %arg13: memref<2x64xf32, #tpu.memory_space<vmem>>) attributes {dimension_semantics = [], scalar_prefetch = 0 : i64, scratch_operands = 0 : i64, tpu.core_type = #tpu.core_type<tc>} {
    %c0 = arith.constant 0 : index
    %c0_0 = arith.constant 0 : index
    %0 = vector.load %arg0[%c0, %c0_0] : memref<16x50xf32, #tpu.memory_space<vmem>>, vector<16x50xf32>
    %c0_1 = arith.constant 0 : index
    %c0_2 = arith.constant 0 : index
    %1 = vector.load %arg1[%c0_1, %c0_2] : memref<50x128xf32, #tpu.memory_space<vmem>>, vector<50x128xf32>
    %c0_3 = arith.constant 0 : index
    %c0_4 = arith.constant 0 : index
    %2 = vector.load %arg2[%c0_3, %c0_4] : memref<32x128xf32, #tpu.memory_space<vmem>>, vector<32x128xf32>
    %c0_5 = arith.constant 0 : index
    %c0_6 = arith.constant 0 : index
    %3 = vector.load %arg3[%c0_5, %c0_6] : memref<1x128xf32, #tpu.memory_space<vmem>>, vector<1x128xf32>
    %c0_7 = arith.constant 0 : index
    %c0_8 = arith.constant 0 : index
    %4 = vector.load %arg4[%c0_7, %c0_8] : memref<50x128xf32, #tpu.memory_space<vmem>>, vector<50x128xf32>
    %c0_9 = arith.constant 0 : index
    %c0_10 = arith.constant 0 : index
    %5 = vector.load %arg5[%c0_9, %c0_10] : memref<32x128xf32, #tpu.memory_space<vmem>>, vector<32x128xf32>
    %c0_11 = arith.constant 0 : index
    %c0_12 = arith.constant 0 : index
    %6 = vector.load %arg6[%c0_11, %c0_12] : memref<1x128xf32, #tpu.memory_space<vmem>>, vector<1x128xf32>
    %cst = arith.constant dense<0.000000e+00> : vector<16x128xf32>
    %7 = tpu.matmul %0, %1, %cst {dimension_numbers = #tpu.dot_dimension_numbers<[1], [0], [0], [1], [0, 0, 1, 1], [], []>} : vector<16x50xf32>, vector<50x128xf32>, vector<16x128xf32> -> vector<16x128xf32>
    %8 = vector.broadcast %3 : vector<1x128xf32> to vector<16x128xf32>
    %9 = arith.addf %7, %8 : vector<16x128xf32>
    %cst_13 = arith.constant 0.000000e+00 : f32
    %10 = vector.broadcast %cst_13 : f32 to vector<2x32xf32>
    %cst_14 = arith.constant 0.000000e+00 : f32
    %11 = vector.broadcast %cst_14 : f32 to vector<2x32xf32>
    %12 = vector.extract_strided_slice %9 {offsets = [0, 0], sizes = [2, 128], strides = [1, 1]} : vector<16x128xf32> to vector<2x128xf32>
    %cst_15 = arith.constant dense<0.000000e+00> : vector<2x128xf32>
    %13 = tpu.matmul %10, %2, %cst_15 {dimension_numbers = #tpu.dot_dimension_numbers<[1], [0], [0], [1], [0, 0, 1, 1], [], []>} : vector<2x32xf32>, vector<32x128xf32>, vector<2x128xf32> -> vector<2x128xf32>
    %14 = arith.addf %12, %13 : vector<2x128xf32>
    %15 = vector.extract_strided_slice %14 {offsets = [0, 0], sizes = [2, 32], strides = [1, 1]} : vector<2x128xf32> to vector<2x32xf32>
    %16 = arith.negf %15 : vector<2x32xf32>
    %17 = math.exp %16 : vector<2x32xf32>
    %cst_16 = arith.constant 1.000000e+00 : f32
    %18 = vector.broadcast %cst_16 : f32 to vector<2x32xf32>
    %19 = arith.addf %18, %17 : vector<2x32xf32>
    %20 = arith.divf %18, %19 : vector<2x32xf32>
    %21 = vector.extract_strided_slice %14 {offsets = [0, 32], sizes = [2, 32], strides = [1, 1]} : vector<2x128xf32> to vector<2x32xf32>
    %22 = arith.negf %21 : vector<2x32xf32>
    %23 = math.exp %22 : vector<2x32xf32>
    %cst_17 = arith.constant 1.000000e+00 : f32
    %24 = vector.broadcast %cst_17 : f32 to vector<2x32xf32>
    %25 = arith.addf %24, %23 : vector<2x32xf32>
    %26 = arith.divf %24, %25 : vector<2x32xf32>
    %27 = vector.extract_strided_slice %14 {offsets = [0, 64], sizes = [2, 32], strides = [1, 1]} : vector<2x128xf32> to vector<2x32xf32>
    %28 = math.tanh %27 : vector<2x32xf32>
    %29 = vector.extract_strided_slice %14 {offsets = [0, 96], sizes = [2, 32], strides = [1, 1]} : vector<2x128xf32> to vector<2x32xf32>
    %30 = arith.negf %29 : vector<2x32xf32>
    %31 = math.exp %30 : vector<2x32xf32>
    %cst_18 = arith.constant 1.000000e+00 : f32
    %32 = vector.broadcast %cst_18 : f32 to vector<2x32xf32>
    %33 = arith.addf %32, %31 : vector<2x32xf32>
    %34 = arith.divf %32, %33 : vector<2x32xf32>
    %35 = arith.mulf %26, %11 : vector<2x32xf32>
    %36 = arith.mulf %20, %28 : vector<2x32xf32>
    %37 = arith.addf %35, %36 : vector<2x32xf32>
    %38 = math.tanh %37 : vector<2x32xf32>
    %39 = arith.mulf %34, %38 : vector<2x32xf32>
    %40 = vector.extract_strided_slice %9 {offsets = [2, 0], sizes = [2, 128], strides = [1, 1]} : vector<16x128xf32> to vector<2x128xf32>
    %cst_19 = arith.constant dense<0.000000e+00> : vector<2x128xf32>
    %41 = tpu.matmul %39, %2, %cst_19 {dimension_numbers = #tpu.dot_dimension_numbers<[1], [0], [0], [1], [0, 0, 1, 1], [], []>} : vector<2x32xf32>, vector<32x128xf32>, vector<2x128xf32> -> vector<2x128xf32>
    %42 = arith.addf %40, %41 : vector<2x128xf32>
    %43 = vector.extract_strided_slice %42 {offsets = [0, 0], sizes = [2, 32], strides = [1, 1]} : vector<2x128xf32> to vector<2x32xf32>
    %44 = arith.negf %43 : vector<2x32xf32>
    %45 = math.exp %44 : vector<2x32xf32>
    %cst_20 = arith.constant 1.000000e+00 : f32
    %46 = vector.broadcast %cst_20 : f32 to vector<2x32xf32>
    %47 = arith.addf %46, %45 : vector<2x32xf32>
    %48 = arith.divf %46, %47 : vector<2x32xf32>
    %49 = vector.extract_strided_slice %42 {offsets = [0, 32], sizes = [2, 32], strides = [1, 1]} : vector<2x128xf32> to vector<2x32xf32>
    %50 = arith.negf %49 : vector<2x32xf32>
    %51 = math.exp %50 : vector<2x32xf32>
    %cst_21 = arith.constant 1.000000e+00 : f32
    %52 = vector.broadcast %cst_21 : f32 to vector<2x32xf32>
    %53 = arith.addf %52, %51 : vector<2x32xf32>
    %54 = arith.divf %52, %53 : vector<2x32xf32>
    %55 = vector.extract_strided_slice %42 {offsets = [0, 64], sizes = [2, 32], strides = [1, 1]} : vector<2x128xf32> to vector<2x32xf32>
    %56 = math.tanh %55 : vector<2x32xf32>
    %57 = vector.extract_strided_slice %42 {offsets = [0, 96], sizes = [2, 32], strides = [1, 1]} : vector<2x128xf32> to vector<2x32xf32>
    %58 = arith.negf %57 : vector<2x32xf32>
    %59 = math.exp %58 : vector<2x32xf32>
    %cst_22 = arith.constant 1.000000e+00 : f32
    %60 = vector.broadcast %cst_22 : f32 to vector<2x32xf32>
    %61 = arith.addf %60, %59 : vector<2x32xf32>
    %62 = arith.divf %60, %61 : vector<2x32xf32>
    %63 = arith.mulf %54, %37 : vector<2x32xf32>
    %64 = arith.mulf %48, %56 : vector<2x32xf32>
    %65 = arith.addf %63, %64 : vector<2x32xf32>
    %66 = math.tanh %65 : vector<2x32xf32>
    %67 = arith.mulf %62, %66 : vector<2x32xf32>
    %68 = vector.extract_strided_slice %9 {offsets = [4, 0], sizes = [2, 128], strides = [1, 1]} : vector<16x128xf32> to vector<2x128xf32>
    %cst_23 = arith.constant dense<0.000000e+00> : vector<2x128xf32>
    %69 = tpu.matmul %67, %2, %cst_23 {dimension_numbers = #tpu.dot_dimension_numbers<[1], [0], [0], [1], [0, 0, 1, 1], [], []>} : vector<2x32xf32>, vector<32x128xf32>, vector<2x128xf32> -> vector<2x128xf32>
    %70 = arith.addf %68, %69 : vector<2x128xf32>
    %71 = vector.extract_strided_slice %70 {offsets = [0, 0], sizes = [2, 32], strides = [1, 1]} : vector<2x128xf32> to vector<2x32xf32>
    %72 = arith.negf %71 : vector<2x32xf32>
    %73 = math.exp %72 : vector<2x32xf32>
    %cst_24 = arith.constant 1.000000e+00 : f32
    %74 = vector.broadcast %cst_24 : f32 to vector<2x32xf32>
    %75 = arith.addf %74, %73 : vector<2x32xf32>
    %76 = arith.divf %74, %75 : vector<2x32xf32>
    %77 = vector.extract_strided_slice %70 {offsets = [0, 32], sizes = [2, 32], strides = [1, 1]} : vector<2x128xf32> to vector<2x32xf32>
    %78 = arith.negf %77 : vector<2x32xf32>
    %79 = math.exp %78 : vector<2x32xf32>
    %cst_25 = arith.constant 1.000000e+00 : f32
    %80 = vector.broadcast %cst_25 : f32 to vector<2x32xf32>
    %81 = arith.addf %80, %79 : vector<2x32xf32>
    %82 = arith.divf %80, %81 : vector<2x32xf32>
    %83 = vector.extract_strided_slice %70 {offsets = [0, 64], sizes = [2, 32], strides = [1, 1]} : vector<2x128xf32> to vector<2x32xf32>
    %84 = math.tanh %83 : vector<2x32xf32>
    %85 = vector.extract_strided_slice %70 {offsets = [0, 96], sizes = [2, 32], strides = [1, 1]} : vector<2x128xf32> to vector<2x32xf32>
    %86 = arith.negf %85 : vector<2x32xf32>
    %87 = math.exp %86 : vector<2x32xf32>
    %cst_26 = arith.constant 1.000000e+00 : f32
    %88 = vector.broadcast %cst_26 : f32 to vector<2x32xf32>
    %89 = arith.addf %88, %87 : vector<2x32xf32>
    %90 = arith.divf %88, %89 : vector<2x32xf32>
    %91 = arith.mulf %82, %65 : vector<2x32xf32>
    %92 = arith.mulf %76, %84 : vector<2x32xf32>
    %93 = arith.addf %91, %92 : vector<2x32xf32>
    %94 = math.tanh %93 : vector<2x32xf32>
    %95 = arith.mulf %90, %94 : vector<2x32xf32>
    %96 = vector.extract_strided_slice %9 {offsets = [6, 0], sizes = [2, 128], strides = [1, 1]} : vector<16x128xf32> to vector<2x128xf32>
    %cst_27 = arith.constant dense<0.000000e+00> : vector<2x128xf32>
    %97 = tpu.matmul %95, %2, %cst_27 {dimension_numbers = #tpu.dot_dimension_numbers<[1], [0], [0], [1], [0, 0, 1, 1], [], []>} : vector<2x32xf32>, vector<32x128xf32>, vector<2x128xf32> -> vector<2x128xf32>
    %98 = arith.addf %96, %97 : vector<2x128xf32>
    %99 = vector.extract_strided_slice %98 {offsets = [0, 0], sizes = [2, 32], strides = [1, 1]} : vector<2x128xf32> to vector<2x32xf32>
    %100 = arith.negf %99 : vector<2x32xf32>
    %101 = math.exp %100 : vector<2x32xf32>
    %cst_28 = arith.constant 1.000000e+00 : f32
    %102 = vector.broadcast %cst_28 : f32 to vector<2x32xf32>
    %103 = arith.addf %102, %101 : vector<2x32xf32>
    %104 = arith.divf %102, %103 : vector<2x32xf32>
    %105 = vector.extract_strided_slice %98 {offsets = [0, 32], sizes = [2, 32], strides = [1, 1]} : vector<2x128xf32> to vector<2x32xf32>
    %106 = arith.negf %105 : vector<2x32xf32>
    %107 = math.exp %106 : vector<2x32xf32>
    %cst_29 = arith.constant 1.000000e+00 : f32
    %108 = vector.broadcast %cst_29 : f32 to vector<2x32xf32>
    %109 = arith.addf %108, %107 : vector<2x32xf32>
    %110 = arith.divf %108, %109 : vector<2x32xf32>
    %111 = vector.extract_strided_slice %98 {offsets = [0, 64], sizes = [2, 32], strides = [1, 1]} : vector<2x128xf32> to vector<2x32xf32>
    %112 = math.tanh %111 : vector<2x32xf32>
    %113 = vector.extract_strided_slice %98 {offsets = [0, 96], sizes = [2, 32], strides = [1, 1]} : vector<2x128xf32> to vector<2x32xf32>
    %114 = arith.negf %113 : vector<2x32xf32>
    %115 = math.exp %114 : vector<2x32xf32>
    %cst_30 = arith.constant 1.000000e+00 : f32
    %116 = vector.broadcast %cst_30 : f32 to vector<2x32xf32>
    %117 = arith.addf %116, %115 : vector<2x32xf32>
    %118 = arith.divf %116, %117 : vector<2x32xf32>
    %119 = arith.mulf %110, %93 : vector<2x32xf32>
    %120 = arith.mulf %104, %112 : vector<2x32xf32>
    %121 = arith.addf %119, %120 : vector<2x32xf32>
    %122 = math.tanh %121 : vector<2x32xf32>
    %123 = arith.mulf %118, %122 : vector<2x32xf32>
    %124 = vector.extract_strided_slice %9 {offsets = [8, 0], sizes = [2, 128], strides = [1, 1]} : vector<16x128xf32> to vector<2x128xf32>
    %cst_31 = arith.constant dense<0.000000e+00> : vector<2x128xf32>
    %125 = tpu.matmul %123, %2, %cst_31 {dimension_numbers = #tpu.dot_dimension_numbers<[1], [0], [0], [1], [0, 0, 1, 1], [], []>} : vector<2x32xf32>, vector<32x128xf32>, vector<2x128xf32> -> vector<2x128xf32>
    %126 = arith.addf %124, %125 : vector<2x128xf32>
    %127 = vector.extract_strided_slice %126 {offsets = [0, 0], sizes = [2, 32], strides = [1, 1]} : vector<2x128xf32> to vector<2x32xf32>
    %128 = arith.negf %127 : vector<2x32xf32>
    %129 = math.exp %128 : vector<2x32xf32>
    %cst_32 = arith.constant 1.000000e+00 : f32
    %130 = vector.broadcast %cst_32 : f32 to vector<2x32xf32>
    %131 = arith.addf %130, %129 : vector<2x32xf32>
    %132 = arith.divf %130, %131 : vector<2x32xf32>
    %133 = vector.extract_strided_slice %126 {offsets = [0, 32], sizes = [2, 32], strides = [1, 1]} : vector<2x128xf32> to vector<2x32xf32>
    %134 = arith.negf %133 : vector<2x32xf32>
    %135 = math.exp %134 : vector<2x32xf32>
    %cst_33 = arith.constant 1.000000e+00 : f32
    %136 = vector.broadcast %cst_33 : f32 to vector<2x32xf32>
    %137 = arith.addf %136, %135 : vector<2x32xf32>
    %138 = arith.divf %136, %137 : vector<2x32xf32>
    %139 = vector.extract_strided_slice %126 {offsets = [0, 64], sizes = [2, 32], strides = [1, 1]} : vector<2x128xf32> to vector<2x32xf32>
    %140 = math.tanh %139 : vector<2x32xf32>
    %141 = vector.extract_strided_slice %126 {offsets = [0, 96], sizes = [2, 32], strides = [1, 1]} : vector<2x128xf32> to vector<2x32xf32>
    %142 = arith.negf %141 : vector<2x32xf32>
    %143 = math.exp %142 : vector<2x32xf32>
    %cst_34 = arith.constant 1.000000e+00 : f32
    %144 = vector.broadcast %cst_34 : f32 to vector<2x32xf32>
    %145 = arith.addf %144, %143 : vector<2x32xf32>
    %146 = arith.divf %144, %145 : vector<2x32xf32>
    %147 = arith.mulf %138, %121 : vector<2x32xf32>
    %148 = arith.mulf %132, %140 : vector<2x32xf32>
    %149 = arith.addf %147, %148 : vector<2x32xf32>
    %150 = math.tanh %149 : vector<2x32xf32>
    %151 = arith.mulf %146, %150 : vector<2x32xf32>
    %152 = vector.extract_strided_slice %9 {offsets = [10, 0], sizes = [2, 128], strides = [1, 1]} : vector<16x128xf32> to vector<2x128xf32>
    %cst_35 = arith.constant dense<0.000000e+00> : vector<2x128xf32>
    %153 = tpu.matmul %151, %2, %cst_35 {dimension_numbers = #tpu.dot_dimension_numbers<[1], [0], [0], [1], [0, 0, 1, 1], [], []>} : vector<2x32xf32>, vector<32x128xf32>, vector<2x128xf32> -> vector<2x128xf32>
    %154 = arith.addf %152, %153 : vector<2x128xf32>
    %155 = vector.extract_strided_slice %154 {offsets = [0, 0], sizes = [2, 32], strides = [1, 1]} : vector<2x128xf32> to vector<2x32xf32>
    %156 = arith.negf %155 : vector<2x32xf32>
    %157 = math.exp %156 : vector<2x32xf32>
    %cst_36 = arith.constant 1.000000e+00 : f32
    %158 = vector.broadcast %cst_36 : f32 to vector<2x32xf32>
    %159 = arith.addf %158, %157 : vector<2x32xf32>
    %160 = arith.divf %158, %159 : vector<2x32xf32>
    %161 = vector.extract_strided_slice %154 {offsets = [0, 32], sizes = [2, 32], strides = [1, 1]} : vector<2x128xf32> to vector<2x32xf32>
    %162 = arith.negf %161 : vector<2x32xf32>
    %163 = math.exp %162 : vector<2x32xf32>
    %cst_37 = arith.constant 1.000000e+00 : f32
    %164 = vector.broadcast %cst_37 : f32 to vector<2x32xf32>
    %165 = arith.addf %164, %163 : vector<2x32xf32>
    %166 = arith.divf %164, %165 : vector<2x32xf32>
    %167 = vector.extract_strided_slice %154 {offsets = [0, 64], sizes = [2, 32], strides = [1, 1]} : vector<2x128xf32> to vector<2x32xf32>
    %168 = math.tanh %167 : vector<2x32xf32>
    %169 = vector.extract_strided_slice %154 {offsets = [0, 96], sizes = [2, 32], strides = [1, 1]} : vector<2x128xf32> to vector<2x32xf32>
    %170 = arith.negf %169 : vector<2x32xf32>
    %171 = math.exp %170 : vector<2x32xf32>
    %cst_38 = arith.constant 1.000000e+00 : f32
    %172 = vector.broadcast %cst_38 : f32 to vector<2x32xf32>
    %173 = arith.addf %172, %171 : vector<2x32xf32>
    %174 = arith.divf %172, %173 : vector<2x32xf32>
    %175 = arith.mulf %166, %149 : vector<2x32xf32>
    %176 = arith.mulf %160, %168 : vector<2x32xf32>
    %177 = arith.addf %175, %176 : vector<2x32xf32>
    %178 = math.tanh %177 : vector<2x32xf32>
    %179 = arith.mulf %174, %178 : vector<2x32xf32>
    %180 = vector.extract_strided_slice %9 {offsets = [12, 0], sizes = [2, 128], strides = [1, 1]} : vector<16x128xf32> to vector<2x128xf32>
    %cst_39 = arith.constant dense<0.000000e+00> : vector<2x128xf32>
    %181 = tpu.matmul %179, %2, %cst_39 {dimension_numbers = #tpu.dot_dimension_numbers<[1], [0], [0], [1], [0, 0, 1, 1], [], []>} : vector<2x32xf32>, vector<32x128xf32>, vector<2x128xf32> -> vector<2x128xf32>
    %182 = arith.addf %180, %181 : vector<2x128xf32>
    %183 = vector.extract_strided_slice %182 {offsets = [0, 0], sizes = [2, 32], strides = [1, 1]} : vector<2x128xf32> to vector<2x32xf32>
    %184 = arith.negf %183 : vector<2x32xf32>
    %185 = math.exp %184 : vector<2x32xf32>
    %cst_40 = arith.constant 1.000000e+00 : f32
    %186 = vector.broadcast %cst_40 : f32 to vector<2x32xf32>
    %187 = arith.addf %186, %185 : vector<2x32xf32>
    %188 = arith.divf %186, %187 : vector<2x32xf32>
    %189 = vector.extract_strided_slice %182 {offsets = [0, 32], sizes = [2, 32], strides = [1, 1]} : vector<2x128xf32> to vector<2x32xf32>
    %190 = arith.negf %189 : vector<2x32xf32>
    %191 = math.exp %190 : vector<2x32xf32>
    %cst_41 = arith.constant 1.000000e+00 : f32
    %192 = vector.broadcast %cst_41 : f32 to vector<2x32xf32>
    %193 = arith.addf %192, %191 : vector<2x32xf32>
    %194 = arith.divf %192, %193 : vector<2x32xf32>
    %195 = vector.extract_strided_slice %182 {offsets = [0, 64], sizes = [2, 32], strides = [1, 1]} : vector<2x128xf32> to vector<2x32xf32>
    %196 = math.tanh %195 : vector<2x32xf32>
    %197 = vector.extract_strided_slice %182 {offsets = [0, 96], sizes = [2, 32], strides = [1, 1]} : vector<2x128xf32> to vector<2x32xf32>
    %198 = arith.negf %197 : vector<2x32xf32>
    %199 = math.exp %198 : vector<2x32xf32>
    %cst_42 = arith.constant 1.000000e+00 : f32
    %200 = vector.broadcast %cst_42 : f32 to vector<2x32xf32>
    %201 = arith.addf %200, %199 : vector<2x32xf32>
    %202 = arith.divf %200, %201 : vector<2x32xf32>
    %203 = arith.mulf %194, %177 : vector<2x32xf32>
    %204 = arith.mulf %188, %196 : vector<2x32xf32>
    %205 = arith.addf %203, %204 : vector<2x32xf32>
    %206 = math.tanh %205 : vector<2x32xf32>
    %207 = arith.mulf %202, %206 : vector<2x32xf32>
    %208 = vector.extract_strided_slice %9 {offsets = [14, 0], sizes = [2, 128], strides = [1, 1]} : vector<16x128xf32> to vector<2x128xf32>
    %cst_43 = arith.constant dense<0.000000e+00> : vector<2x128xf32>
    %209 = tpu.matmul %207, %2, %cst_43 {dimension_numbers = #tpu.dot_dimension_numbers<[1], [0], [0], [1], [0, 0, 1, 1], [], []>} : vector<2x32xf32>, vector<32x128xf32>, vector<2x128xf32> -> vector<2x128xf32>
    %210 = arith.addf %208, %209 : vector<2x128xf32>
    %211 = vector.extract_strided_slice %210 {offsets = [0, 0], sizes = [2, 32], strides = [1, 1]} : vector<2x128xf32> to vector<2x32xf32>
    %212 = arith.negf %211 : vector<2x32xf32>
    %213 = math.exp %212 : vector<2x32xf32>
    %cst_44 = arith.constant 1.000000e+00 : f32
    %214 = vector.broadcast %cst_44 : f32 to vector<2x32xf32>
    %215 = arith.addf %214, %213 : vector<2x32xf32>
    %216 = arith.divf %214, %215 : vector<2x32xf32>
    %217 = vector.extract_strided_slice %210 {offsets = [0, 32], sizes = [2, 32], strides = [1, 1]} : vector<2x128xf32> to vector<2x32xf32>
    %218 = arith.negf %217 : vector<2x32xf32>
    %219 = math.exp %218 : vector<2x32xf32>
    %cst_45 = arith.constant 1.000000e+00 : f32
    %220 = vector.broadcast %cst_45 : f32 to vector<2x32xf32>
    %221 = arith.addf %220, %219 : vector<2x32xf32>
    %222 = arith.divf %220, %221 : vector<2x32xf32>
    %223 = vector.extract_strided_slice %210 {offsets = [0, 64], sizes = [2, 32], strides = [1, 1]} : vector<2x128xf32> to vector<2x32xf32>
    %224 = math.tanh %223 : vector<2x32xf32>
    %225 = vector.extract_strided_slice %210 {offsets = [0, 96], sizes = [2, 32], strides = [1, 1]} : vector<2x128xf32> to vector<2x32xf32>
    %226 = arith.negf %225 : vector<2x32xf32>
    %227 = math.exp %226 : vector<2x32xf32>
    %cst_46 = arith.constant 1.000000e+00 : f32
    %228 = vector.broadcast %cst_46 : f32 to vector<2x32xf32>
    %229 = arith.addf %228, %227 : vector<2x32xf32>
    %230 = arith.divf %228, %229 : vector<2x32xf32>
    %231 = arith.mulf %222, %205 : vector<2x32xf32>
    %232 = arith.mulf %216, %224 : vector<2x32xf32>
    %233 = arith.addf %231, %232 : vector<2x32xf32>
    %234 = math.tanh %233 : vector<2x32xf32>
    %235 = arith.mulf %230, %234 : vector<2x32xf32>
    %cst_47 = arith.constant dense<0.000000e+00> : vector<16x128xf32>
    %236 = tpu.matmul %0, %4, %cst_47 {dimension_numbers = #tpu.dot_dimension_numbers<[1], [0], [0], [1], [0, 0, 1, 1], [], []>} : vector<16x50xf32>, vector<50x128xf32>, vector<16x128xf32> -> vector<16x128xf32>
    %237 = vector.broadcast %6 : vector<1x128xf32> to vector<16x128xf32>
    %238 = arith.addf %236, %237 : vector<16x128xf32>
    %cst_48 = arith.constant 0.000000e+00 : f32
    %239 = vector.broadcast %cst_48 : f32 to vector<2x32xf32>
    %cst_49 = arith.constant 0.000000e+00 : f32
    %240 = vector.broadcast %cst_49 : f32 to vector<2x32xf32>
    %241 = vector.extract_strided_slice %238 {offsets = [14, 0], sizes = [2, 128], strides = [1, 1]} : vector<16x128xf32> to vector<2x128xf32>
    %cst_50 = arith.constant dense<0.000000e+00> : vector<2x128xf32>
    %242 = tpu.matmul %239, %5, %cst_50 {dimension_numbers = #tpu.dot_dimension_numbers<[1], [0], [0], [1], [0, 0, 1, 1], [], []>} : vector<2x32xf32>, vector<32x128xf32>, vector<2x128xf32> -> vector<2x128xf32>
    %243 = arith.addf %241, %242 : vector<2x128xf32>
    %244 = vector.extract_strided_slice %243 {offsets = [0, 0], sizes = [2, 32], strides = [1, 1]} : vector<2x128xf32> to vector<2x32xf32>
    %245 = arith.negf %244 : vector<2x32xf32>
    %246 = math.exp %245 : vector<2x32xf32>
    %cst_51 = arith.constant 1.000000e+00 : f32
    %247 = vector.broadcast %cst_51 : f32 to vector<2x32xf32>
    %248 = arith.addf %247, %246 : vector<2x32xf32>
    %249 = arith.divf %247, %248 : vector<2x32xf32>
    %250 = vector.extract_strided_slice %243 {offsets = [0, 32], sizes = [2, 32], strides = [1, 1]} : vector<2x128xf32> to vector<2x32xf32>
    %251 = arith.negf %250 : vector<2x32xf32>
    %252 = math.exp %251 : vector<2x32xf32>
    %cst_52 = arith.constant 1.000000e+00 : f32
    %253 = vector.broadcast %cst_52 : f32 to vector<2x32xf32>
    %254 = arith.addf %253, %252 : vector<2x32xf32>
    %255 = arith.divf %253, %254 : vector<2x32xf32>
    %256 = vector.extract_strided_slice %243 {offsets = [0, 64], sizes = [2, 32], strides = [1, 1]} : vector<2x128xf32> to vector<2x32xf32>
    %257 = math.tanh %256 : vector<2x32xf32>
    %258 = vector.extract_strided_slice %243 {offsets = [0, 96], sizes = [2, 32], strides = [1, 1]} : vector<2x128xf32> to vector<2x32xf32>
    %259 = arith.negf %258 : vector<2x32xf32>
    %260 = math.exp %259 : vector<2x32xf32>
    %cst_53 = arith.constant 1.000000e+00 : f32
    %261 = vector.broadcast %cst_53 : f32 to vector<2x32xf32>
    %262 = arith.addf %261, %260 : vector<2x32xf32>
    %263 = arith.divf %261, %262 : vector<2x32xf32>
    %264 = arith.mulf %255, %240 : vector<2x32xf32>
    %265 = arith.mulf %249, %257 : vector<2x32xf32>
    %266 = arith.addf %264, %265 : vector<2x32xf32>
    %267 = math.tanh %266 : vector<2x32xf32>
    %268 = arith.mulf %263, %267 : vector<2x32xf32>
    %269 = vector.extract_strided_slice %238 {offsets = [12, 0], sizes = [2, 128], strides = [1, 1]} : vector<16x128xf32> to vector<2x128xf32>
    %cst_54 = arith.constant dense<0.000000e+00> : vector<2x128xf32>
    %270 = tpu.matmul %268, %5, %cst_54 {dimension_numbers = #tpu.dot_dimension_numbers<[1], [0], [0], [1], [0, 0, 1, 1], [], []>} : vector<2x32xf32>, vector<32x128xf32>, vector<2x128xf32> -> vector<2x128xf32>
    %271 = arith.addf %269, %270 : vector<2x128xf32>
    %272 = vector.extract_strided_slice %271 {offsets = [0, 0], sizes = [2, 32], strides = [1, 1]} : vector<2x128xf32> to vector<2x32xf32>
    %273 = arith.negf %272 : vector<2x32xf32>
    %274 = math.exp %273 : vector<2x32xf32>
    %cst_55 = arith.constant 1.000000e+00 : f32
    %275 = vector.broadcast %cst_55 : f32 to vector<2x32xf32>
    %276 = arith.addf %275, %274 : vector<2x32xf32>
    %277 = arith.divf %275, %276 : vector<2x32xf32>
    %278 = vector.extract_strided_slice %271 {offsets = [0, 32], sizes = [2, 32], strides = [1, 1]} : vector<2x128xf32> to vector<2x32xf32>
    %279 = arith.negf %278 : vector<2x32xf32>
    %280 = math.exp %279 : vector<2x32xf32>
    %cst_56 = arith.constant 1.000000e+00 : f32
    %281 = vector.broadcast %cst_56 : f32 to vector<2x32xf32>
    %282 = arith.addf %281, %280 : vector<2x32xf32>
    %283 = arith.divf %281, %282 : vector<2x32xf32>
    %284 = vector.extract_strided_slice %271 {offsets = [0, 64], sizes = [2, 32], strides = [1, 1]} : vector<2x128xf32> to vector<2x32xf32>
    %285 = math.tanh %284 : vector<2x32xf32>
    %286 = vector.extract_strided_slice %271 {offsets = [0, 96], sizes = [2, 32], strides = [1, 1]} : vector<2x128xf32> to vector<2x32xf32>
    %287 = arith.negf %286 : vector<2x32xf32>
    %288 = math.exp %287 : vector<2x32xf32>
    %cst_57 = arith.constant 1.000000e+00 : f32
    %289 = vector.broadcast %cst_57 : f32 to vector<2x32xf32>
    %290 = arith.addf %289, %288 : vector<2x32xf32>
    %291 = arith.divf %289, %290 : vector<2x32xf32>
    %292 = arith.mulf %283, %266 : vector<2x32xf32>
    %293 = arith.mulf %277, %285 : vector<2x32xf32>
    %294 = arith.addf %292, %293 : vector<2x32xf32>
    %295 = math.tanh %294 : vector<2x32xf32>
    %296 = arith.mulf %291, %295 : vector<2x32xf32>
    %297 = vector.extract_strided_slice %238 {offsets = [10, 0], sizes = [2, 128], strides = [1, 1]} : vector<16x128xf32> to vector<2x128xf32>
    %cst_58 = arith.constant dense<0.000000e+00> : vector<2x128xf32>
    %298 = tpu.matmul %296, %5, %cst_58 {dimension_numbers = #tpu.dot_dimension_numbers<[1], [0], [0], [1], [0, 0, 1, 1], [], []>} : vector<2x32xf32>, vector<32x128xf32>, vector<2x128xf32> -> vector<2x128xf32>
    %299 = arith.addf %297, %298 : vector<2x128xf32>
    %300 = vector.extract_strided_slice %299 {offsets = [0, 0], sizes = [2, 32], strides = [1, 1]} : vector<2x128xf32> to vector<2x32xf32>
    %301 = arith.negf %300 : vector<2x32xf32>
    %302 = math.exp %301 : vector<2x32xf32>
    %cst_59 = arith.constant 1.000000e+00 : f32
    %303 = vector.broadcast %cst_59 : f32 to vector<2x32xf32>
    %304 = arith.addf %303, %302 : vector<2x32xf32>
    %305 = arith.divf %303, %304 : vector<2x32xf32>
    %306 = vector.extract_strided_slice %299 {offsets = [0, 32], sizes = [2, 32], strides = [1, 1]} : vector<2x128xf32> to vector<2x32xf32>
    %307 = arith.negf %306 : vector<2x32xf32>
    %308 = math.exp %307 : vector<2x32xf32>
    %cst_60 = arith.constant 1.000000e+00 : f32
    %309 = vector.broadcast %cst_60 : f32 to vector<2x32xf32>
    %310 = arith.addf %309, %308 : vector<2x32xf32>
    %311 = arith.divf %309, %310 : vector<2x32xf32>
    %312 = vector.extract_strided_slice %299 {offsets = [0, 64], sizes = [2, 32], strides = [1, 1]} : vector<2x128xf32> to vector<2x32xf32>
    %313 = math.tanh %312 : vector<2x32xf32>
    %314 = vector.extract_strided_slice %299 {offsets = [0, 96], sizes = [2, 32], strides = [1, 1]} : vector<2x128xf32> to vector<2x32xf32>
    %315 = arith.negf %314 : vector<2x32xf32>
    %316 = math.exp %315 : vector<2x32xf32>
    %cst_61 = arith.constant 1.000000e+00 : f32
    %317 = vector.broadcast %cst_61 : f32 to vector<2x32xf32>
    %318 = arith.addf %317, %316 : vector<2x32xf32>
    %319 = arith.divf %317, %318 : vector<2x32xf32>
    %320 = arith.mulf %311, %294 : vector<2x32xf32>
    %321 = arith.mulf %305, %313 : vector<2x32xf32>
    %322 = arith.addf %320, %321 : vector<2x32xf32>
    %323 = math.tanh %322 : vector<2x32xf32>
    %324 = arith.mulf %319, %323 : vector<2x32xf32>
    %325 = vector.extract_strided_slice %238 {offsets = [8, 0], sizes = [2, 128], strides = [1, 1]} : vector<16x128xf32> to vector<2x128xf32>
    %cst_62 = arith.constant dense<0.000000e+00> : vector<2x128xf32>
    %326 = tpu.matmul %324, %5, %cst_62 {dimension_numbers = #tpu.dot_dimension_numbers<[1], [0], [0], [1], [0, 0, 1, 1], [], []>} : vector<2x32xf32>, vector<32x128xf32>, vector<2x128xf32> -> vector<2x128xf32>
    %327 = arith.addf %325, %326 : vector<2x128xf32>
    %328 = vector.extract_strided_slice %327 {offsets = [0, 0], sizes = [2, 32], strides = [1, 1]} : vector<2x128xf32> to vector<2x32xf32>
    %329 = arith.negf %328 : vector<2x32xf32>
    %330 = math.exp %329 : vector<2x32xf32>
    %cst_63 = arith.constant 1.000000e+00 : f32
    %331 = vector.broadcast %cst_63 : f32 to vector<2x32xf32>
    %332 = arith.addf %331, %330 : vector<2x32xf32>
    %333 = arith.divf %331, %332 : vector<2x32xf32>
    %334 = vector.extract_strided_slice %327 {offsets = [0, 32], sizes = [2, 32], strides = [1, 1]} : vector<2x128xf32> to vector<2x32xf32>
    %335 = arith.negf %334 : vector<2x32xf32>
    %336 = math.exp %335 : vector<2x32xf32>
    %cst_64 = arith.constant 1.000000e+00 : f32
    %337 = vector.broadcast %cst_64 : f32 to vector<2x32xf32>
    %338 = arith.addf %337, %336 : vector<2x32xf32>
    %339 = arith.divf %337, %338 : vector<2x32xf32>
    %340 = vector.extract_strided_slice %327 {offsets = [0, 64], sizes = [2, 32], strides = [1, 1]} : vector<2x128xf32> to vector<2x32xf32>
    %341 = math.tanh %340 : vector<2x32xf32>
    %342 = vector.extract_strided_slice %327 {offsets = [0, 96], sizes = [2, 32], strides = [1, 1]} : vector<2x128xf32> to vector<2x32xf32>
    %343 = arith.negf %342 : vector<2x32xf32>
    %344 = math.exp %343 : vector<2x32xf32>
    %cst_65 = arith.constant 1.000000e+00 : f32
    %345 = vector.broadcast %cst_65 : f32 to vector<2x32xf32>
    %346 = arith.addf %345, %344 : vector<2x32xf32>
    %347 = arith.divf %345, %346 : vector<2x32xf32>
    %348 = arith.mulf %339, %322 : vector<2x32xf32>
    %349 = arith.mulf %333, %341 : vector<2x32xf32>
    %350 = arith.addf %348, %349 : vector<2x32xf32>
    %351 = math.tanh %350 : vector<2x32xf32>
    %352 = arith.mulf %347, %351 : vector<2x32xf32>
    %353 = vector.extract_strided_slice %238 {offsets = [6, 0], sizes = [2, 128], strides = [1, 1]} : vector<16x128xf32> to vector<2x128xf32>
    %cst_66 = arith.constant dense<0.000000e+00> : vector<2x128xf32>
    %354 = tpu.matmul %352, %5, %cst_66 {dimension_numbers = #tpu.dot_dimension_numbers<[1], [0], [0], [1], [0, 0, 1, 1], [], []>} : vector<2x32xf32>, vector<32x128xf32>, vector<2x128xf32> -> vector<2x128xf32>
    %355 = arith.addf %353, %354 : vector<2x128xf32>
    %356 = vector.extract_strided_slice %355 {offsets = [0, 0], sizes = [2, 32], strides = [1, 1]} : vector<2x128xf32> to vector<2x32xf32>
    %357 = arith.negf %356 : vector<2x32xf32>
    %358 = math.exp %357 : vector<2x32xf32>
    %cst_67 = arith.constant 1.000000e+00 : f32
    %359 = vector.broadcast %cst_67 : f32 to vector<2x32xf32>
    %360 = arith.addf %359, %358 : vector<2x32xf32>
    %361 = arith.divf %359, %360 : vector<2x32xf32>
    %362 = vector.extract_strided_slice %355 {offsets = [0, 32], sizes = [2, 32], strides = [1, 1]} : vector<2x128xf32> to vector<2x32xf32>
    %363 = arith.negf %362 : vector<2x32xf32>
    %364 = math.exp %363 : vector<2x32xf32>
    %cst_68 = arith.constant 1.000000e+00 : f32
    %365 = vector.broadcast %cst_68 : f32 to vector<2x32xf32>
    %366 = arith.addf %365, %364 : vector<2x32xf32>
    %367 = arith.divf %365, %366 : vector<2x32xf32>
    %368 = vector.extract_strided_slice %355 {offsets = [0, 64], sizes = [2, 32], strides = [1, 1]} : vector<2x128xf32> to vector<2x32xf32>
    %369 = math.tanh %368 : vector<2x32xf32>
    %370 = vector.extract_strided_slice %355 {offsets = [0, 96], sizes = [2, 32], strides = [1, 1]} : vector<2x128xf32> to vector<2x32xf32>
    %371 = arith.negf %370 : vector<2x32xf32>
    %372 = math.exp %371 : vector<2x32xf32>
    %cst_69 = arith.constant 1.000000e+00 : f32
    %373 = vector.broadcast %cst_69 : f32 to vector<2x32xf32>
    %374 = arith.addf %373, %372 : vector<2x32xf32>
    %375 = arith.divf %373, %374 : vector<2x32xf32>
    %376 = arith.mulf %367, %350 : vector<2x32xf32>
    %377 = arith.mulf %361, %369 : vector<2x32xf32>
    %378 = arith.addf %376, %377 : vector<2x32xf32>
    %379 = math.tanh %378 : vector<2x32xf32>
    %380 = arith.mulf %375, %379 : vector<2x32xf32>
    %381 = vector.extract_strided_slice %238 {offsets = [4, 0], sizes = [2, 128], strides = [1, 1]} : vector<16x128xf32> to vector<2x128xf32>
    %cst_70 = arith.constant dense<0.000000e+00> : vector<2x128xf32>
    %382 = tpu.matmul %380, %5, %cst_70 {dimension_numbers = #tpu.dot_dimension_numbers<[1], [0], [0], [1], [0, 0, 1, 1], [], []>} : vector<2x32xf32>, vector<32x128xf32>, vector<2x128xf32> -> vector<2x128xf32>
    %383 = arith.addf %381, %382 : vector<2x128xf32>
    %384 = vector.extract_strided_slice %383 {offsets = [0, 0], sizes = [2, 32], strides = [1, 1]} : vector<2x128xf32> to vector<2x32xf32>
    %385 = arith.negf %384 : vector<2x32xf32>
    %386 = math.exp %385 : vector<2x32xf32>
    %cst_71 = arith.constant 1.000000e+00 : f32
    %387 = vector.broadcast %cst_71 : f32 to vector<2x32xf32>
    %388 = arith.addf %387, %386 : vector<2x32xf32>
    %389 = arith.divf %387, %388 : vector<2x32xf32>
    %390 = vector.extract_strided_slice %383 {offsets = [0, 32], sizes = [2, 32], strides = [1, 1]} : vector<2x128xf32> to vector<2x32xf32>
    %391 = arith.negf %390 : vector<2x32xf32>
    %392 = math.exp %391 : vector<2x32xf32>
    %cst_72 = arith.constant 1.000000e+00 : f32
    %393 = vector.broadcast %cst_72 : f32 to vector<2x32xf32>
    %394 = arith.addf %393, %392 : vector<2x32xf32>
    %395 = arith.divf %393, %394 : vector<2x32xf32>
    %396 = vector.extract_strided_slice %383 {offsets = [0, 64], sizes = [2, 32], strides = [1, 1]} : vector<2x128xf32> to vector<2x32xf32>
    %397 = math.tanh %396 : vector<2x32xf32>
    %398 = vector.extract_strided_slice %383 {offsets = [0, 96], sizes = [2, 32], strides = [1, 1]} : vector<2x128xf32> to vector<2x32xf32>
    %399 = arith.negf %398 : vector<2x32xf32>
    %400 = math.exp %399 : vector<2x32xf32>
    %cst_73 = arith.constant 1.000000e+00 : f32
    %401 = vector.broadcast %cst_73 : f32 to vector<2x32xf32>
    %402 = arith.addf %401, %400 : vector<2x32xf32>
    %403 = arith.divf %401, %402 : vector<2x32xf32>
    %404 = arith.mulf %395, %378 : vector<2x32xf32>
    %405 = arith.mulf %389, %397 : vector<2x32xf32>
    %406 = arith.addf %404, %405 : vector<2x32xf32>
    %407 = math.tanh %406 : vector<2x32xf32>
    %408 = arith.mulf %403, %407 : vector<2x32xf32>
    %409 = vector.extract_strided_slice %238 {offsets = [2, 0], sizes = [2, 128], strides = [1, 1]} : vector<16x128xf32> to vector<2x128xf32>
    %cst_74 = arith.constant dense<0.000000e+00> : vector<2x128xf32>
    %410 = tpu.matmul %408, %5, %cst_74 {dimension_numbers = #tpu.dot_dimension_numbers<[1], [0], [0], [1], [0, 0, 1, 1], [], []>} : vector<2x32xf32>, vector<32x128xf32>, vector<2x128xf32> -> vector<2x128xf32>
    %411 = arith.addf %409, %410 : vector<2x128xf32>
    %412 = vector.extract_strided_slice %411 {offsets = [0, 0], sizes = [2, 32], strides = [1, 1]} : vector<2x128xf32> to vector<2x32xf32>
    %413 = arith.negf %412 : vector<2x32xf32>
    %414 = math.exp %413 : vector<2x32xf32>
    %cst_75 = arith.constant 1.000000e+00 : f32
    %415 = vector.broadcast %cst_75 : f32 to vector<2x32xf32>
    %416 = arith.addf %415, %414 : vector<2x32xf32>
    %417 = arith.divf %415, %416 : vector<2x32xf32>
    %418 = vector.extract_strided_slice %411 {offsets = [0, 32], sizes = [2, 32], strides = [1, 1]} : vector<2x128xf32> to vector<2x32xf32>
    %419 = arith.negf %418 : vector<2x32xf32>
    %420 = math.exp %419 : vector<2x32xf32>
    %cst_76 = arith.constant 1.000000e+00 : f32
    %421 = vector.broadcast %cst_76 : f32 to vector<2x32xf32>
    %422 = arith.addf %421, %420 : vector<2x32xf32>
    %423 = arith.divf %421, %422 : vector<2x32xf32>
    %424 = vector.extract_strided_slice %411 {offsets = [0, 64], sizes = [2, 32], strides = [1, 1]} : vector<2x128xf32> to vector<2x32xf32>
    %425 = math.tanh %424 : vector<2x32xf32>
    %426 = vector.extract_strided_slice %411 {offsets = [0, 96], sizes = [2, 32], strides = [1, 1]} : vector<2x128xf32> to vector<2x32xf32>
    %427 = arith.negf %426 : vector<2x32xf32>
    %428 = math.exp %427 : vector<2x32xf32>
    %cst_77 = arith.constant 1.000000e+00 : f32
    %429 = vector.broadcast %cst_77 : f32 to vector<2x32xf32>
    %430 = arith.addf %429, %428 : vector<2x32xf32>
    %431 = arith.divf %429, %430 : vector<2x32xf32>
    %432 = arith.mulf %423, %406 : vector<2x32xf32>
    %433 = arith.mulf %417, %425 : vector<2x32xf32>
    %434 = arith.addf %432, %433 : vector<2x32xf32>
    %435 = math.tanh %434 : vector<2x32xf32>
    %436 = arith.mulf %431, %435 : vector<2x32xf32>
    %437 = vector.extract_strided_slice %238 {offsets = [0, 0], sizes = [2, 128], strides = [1, 1]} : vector<16x128xf32> to vector<2x128xf32>
    %cst_78 = arith.constant dense<0.000000e+00> : vector<2x128xf32>
    %438 = tpu.matmul %436, %5, %cst_78 {dimension_numbers = #tpu.dot_dimension_numbers<[1], [0], [0], [1], [0, 0, 1, 1], [], []>} : vector<2x32xf32>, vector<32x128xf32>, vector<2x128xf32> -> vector<2x128xf32>
    %439 = arith.addf %437, %438 : vector<2x128xf32>
    %440 = vector.extract_strided_slice %439 {offsets = [0, 0], sizes = [2, 32], strides = [1, 1]} : vector<2x128xf32> to vector<2x32xf32>
    %441 = arith.negf %440 : vector<2x32xf32>
    %442 = math.exp %441 : vector<2x32xf32>
    %cst_79 = arith.constant 1.000000e+00 : f32
    %443 = vector.broadcast %cst_79 : f32 to vector<2x32xf32>
    %444 = arith.addf %443, %442 : vector<2x32xf32>
    %445 = arith.divf %443, %444 : vector<2x32xf32>
    %446 = vector.extract_strided_slice %439 {offsets = [0, 32], sizes = [2, 32], strides = [1, 1]} : vector<2x128xf32> to vector<2x32xf32>
    %447 = arith.negf %446 : vector<2x32xf32>
    %448 = math.exp %447 : vector<2x32xf32>
    %cst_80 = arith.constant 1.000000e+00 : f32
    %449 = vector.broadcast %cst_80 : f32 to vector<2x32xf32>
    %450 = arith.addf %449, %448 : vector<2x32xf32>
    %451 = arith.divf %449, %450 : vector<2x32xf32>
    %452 = vector.extract_strided_slice %439 {offsets = [0, 64], sizes = [2, 32], strides = [1, 1]} : vector<2x128xf32> to vector<2x32xf32>
    %453 = math.tanh %452 : vector<2x32xf32>
    %454 = vector.extract_strided_slice %439 {offsets = [0, 96], sizes = [2, 32], strides = [1, 1]} : vector<2x128xf32> to vector<2x32xf32>
    %455 = arith.negf %454 : vector<2x32xf32>
    %456 = math.exp %455 : vector<2x32xf32>
    %cst_81 = arith.constant 1.000000e+00 : f32
    %457 = vector.broadcast %cst_81 : f32 to vector<2x32xf32>
    %458 = arith.addf %457, %456 : vector<2x32xf32>
    %459 = arith.divf %457, %458 : vector<2x32xf32>
    %460 = arith.mulf %451, %434 : vector<2x32xf32>
    %461 = arith.mulf %445, %453 : vector<2x32xf32>
    %462 = arith.addf %460, %461 : vector<2x32xf32>
    %463 = math.tanh %462 : vector<2x32xf32>
    %464 = arith.mulf %459, %463 : vector<2x32xf32>
    %465 = tpu.concatenate %39, %464 in 1 : vector<2x32xf32>, vector<2x32xf32> -> vector<2x64xf32>
    %466 = tpu.concatenate %67, %436 in 1 : vector<2x32xf32>, vector<2x32xf32> -> vector<2x64xf32>
    %467 = tpu.concatenate %95, %408 in 1 : vector<2x32xf32>, vector<2x32xf32> -> vector<2x64xf32>
    %468 = tpu.concatenate %123, %380 in 1 : vector<2x32xf32>, vector<2x32xf32> -> vector<2x64xf32>
    %469 = tpu.concatenate %151, %352 in 1 : vector<2x32xf32>, vector<2x32xf32> -> vector<2x64xf32>
    %470 = tpu.concatenate %179, %324 in 1 : vector<2x32xf32>, vector<2x32xf32> -> vector<2x64xf32>
    %471 = tpu.concatenate %207, %296 in 1 : vector<2x32xf32>, vector<2x32xf32> -> vector<2x64xf32>
    %472 = tpu.concatenate %235, %268 in 1 : vector<2x32xf32>, vector<2x32xf32> -> vector<2x64xf32>
    %473 = tpu.concatenate %465, %466, %467, %468, %469, %470, %471, %472 in 0 : vector<2x64xf32>, vector<2x64xf32>, vector<2x64xf32>, vector<2x64xf32>, vector<2x64xf32>, vector<2x64xf32>, vector<2x64xf32>, vector<2x64xf32> -> vector<16x64xf32>
    %c0_82 = arith.constant 0 : index
    %c0_83 = arith.constant 0 : index
    %474 = vector.load %arg7[%c0_82, %c0_83] : memref<64x128xf32, #tpu.memory_space<vmem>>, vector<64x128xf32>
    %c0_84 = arith.constant 0 : index
    %c0_85 = arith.constant 0 : index
    %475 = vector.load %arg8[%c0_84, %c0_85] : memref<32x128xf32, #tpu.memory_space<vmem>>, vector<32x128xf32>
    %c0_86 = arith.constant 0 : index
    %c0_87 = arith.constant 0 : index
    %476 = vector.load %arg9[%c0_86, %c0_87] : memref<1x128xf32, #tpu.memory_space<vmem>>, vector<1x128xf32>
    %c0_88 = arith.constant 0 : index
    %c0_89 = arith.constant 0 : index
    %477 = vector.load %arg10[%c0_88, %c0_89] : memref<64x128xf32, #tpu.memory_space<vmem>>, vector<64x128xf32>
    %c0_90 = arith.constant 0 : index
    %c0_91 = arith.constant 0 : index
    %478 = vector.load %arg11[%c0_90, %c0_91] : memref<32x128xf32, #tpu.memory_space<vmem>>, vector<32x128xf32>
    %c0_92 = arith.constant 0 : index
    %c0_93 = arith.constant 0 : index
    %479 = vector.load %arg12[%c0_92, %c0_93] : memref<1x128xf32, #tpu.memory_space<vmem>>, vector<1x128xf32>
    %cst_94 = arith.constant dense<0.000000e+00> : vector<16x128xf32>
    %480 = tpu.matmul %473, %474, %cst_94 {dimension_numbers = #tpu.dot_dimension_numbers<[1], [0], [0], [1], [0, 0, 1, 1], [], []>} : vector<16x64xf32>, vector<64x128xf32>, vector<16x128xf32> -> vector<16x128xf32>
    %481 = vector.broadcast %476 : vector<1x128xf32> to vector<16x128xf32>
    %482 = arith.addf %480, %481 : vector<16x128xf32>
    %cst_95 = arith.constant 0.000000e+00 : f32
    %483 = vector.broadcast %cst_95 : f32 to vector<2x32xf32>
    %cst_96 = arith.constant 0.000000e+00 : f32
    %484 = vector.broadcast %cst_96 : f32 to vector<2x32xf32>
    %485 = vector.extract_strided_slice %482 {offsets = [0, 0], sizes = [2, 128], strides = [1, 1]} : vector<16x128xf32> to vector<2x128xf32>
    %cst_97 = arith.constant dense<0.000000e+00> : vector<2x128xf32>
    %486 = tpu.matmul %483, %475, %cst_97 {dimension_numbers = #tpu.dot_dimension_numbers<[1], [0], [0], [1], [0, 0, 1, 1], [], []>} : vector<2x32xf32>, vector<32x128xf32>, vector<2x128xf32> -> vector<2x128xf32>
    %487 = arith.addf %485, %486 : vector<2x128xf32>
    %488 = vector.extract_strided_slice %487 {offsets = [0, 0], sizes = [2, 32], strides = [1, 1]} : vector<2x128xf32> to vector<2x32xf32>
    %489 = arith.negf %488 : vector<2x32xf32>
    %490 = math.exp %489 : vector<2x32xf32>
    %cst_98 = arith.constant 1.000000e+00 : f32
    %491 = vector.broadcast %cst_98 : f32 to vector<2x32xf32>
    %492 = arith.addf %491, %490 : vector<2x32xf32>
    %493 = arith.divf %491, %492 : vector<2x32xf32>
    %494 = vector.extract_strided_slice %487 {offsets = [0, 32], sizes = [2, 32], strides = [1, 1]} : vector<2x128xf32> to vector<2x32xf32>
    %495 = arith.negf %494 : vector<2x32xf32>
    %496 = math.exp %495 : vector<2x32xf32>
    %cst_99 = arith.constant 1.000000e+00 : f32
    %497 = vector.broadcast %cst_99 : f32 to vector<2x32xf32>
    %498 = arith.addf %497, %496 : vector<2x32xf32>
    %499 = arith.divf %497, %498 : vector<2x32xf32>
    %500 = vector.extract_strided_slice %487 {offsets = [0, 64], sizes = [2, 32], strides = [1, 1]} : vector<2x128xf32> to vector<2x32xf32>
    %501 = math.tanh %500 : vector<2x32xf32>
    %502 = vector.extract_strided_slice %487 {offsets = [0, 96], sizes = [2, 32], strides = [1, 1]} : vector<2x128xf32> to vector<2x32xf32>
    %503 = arith.negf %502 : vector<2x32xf32>
    %504 = math.exp %503 : vector<2x32xf32>
    %cst_100 = arith.constant 1.000000e+00 : f32
    %505 = vector.broadcast %cst_100 : f32 to vector<2x32xf32>
    %506 = arith.addf %505, %504 : vector<2x32xf32>
    %507 = arith.divf %505, %506 : vector<2x32xf32>
    %508 = arith.mulf %499, %484 : vector<2x32xf32>
    %509 = arith.mulf %493, %501 : vector<2x32xf32>
    %510 = arith.addf %508, %509 : vector<2x32xf32>
    %511 = math.tanh %510 : vector<2x32xf32>
    %512 = arith.mulf %507, %511 : vector<2x32xf32>
    %513 = vector.extract_strided_slice %482 {offsets = [2, 0], sizes = [2, 128], strides = [1, 1]} : vector<16x128xf32> to vector<2x128xf32>
    %cst_101 = arith.constant dense<0.000000e+00> : vector<2x128xf32>
    %514 = tpu.matmul %512, %475, %cst_101 {dimension_numbers = #tpu.dot_dimension_numbers<[1], [0], [0], [1], [0, 0, 1, 1], [], []>} : vector<2x32xf32>, vector<32x128xf32>, vector<2x128xf32> -> vector<2x128xf32>
    %515 = arith.addf %513, %514 : vector<2x128xf32>
    %516 = vector.extract_strided_slice %515 {offsets = [0, 0], sizes = [2, 32], strides = [1, 1]} : vector<2x128xf32> to vector<2x32xf32>
    %517 = arith.negf %516 : vector<2x32xf32>
    %518 = math.exp %517 : vector<2x32xf32>
    %cst_102 = arith.constant 1.000000e+00 : f32
    %519 = vector.broadcast %cst_102 : f32 to vector<2x32xf32>
    %520 = arith.addf %519, %518 : vector<2x32xf32>
    %521 = arith.divf %519, %520 : vector<2x32xf32>
    %522 = vector.extract_strided_slice %515 {offsets = [0, 32], sizes = [2, 32], strides = [1, 1]} : vector<2x128xf32> to vector<2x32xf32>
    %523 = arith.negf %522 : vector<2x32xf32>
    %524 = math.exp %523 : vector<2x32xf32>
    %cst_103 = arith.constant 1.000000e+00 : f32
    %525 = vector.broadcast %cst_103 : f32 to vector<2x32xf32>
    %526 = arith.addf %525, %524 : vector<2x32xf32>
    %527 = arith.divf %525, %526 : vector<2x32xf32>
    %528 = vector.extract_strided_slice %515 {offsets = [0, 64], sizes = [2, 32], strides = [1, 1]} : vector<2x128xf32> to vector<2x32xf32>
    %529 = math.tanh %528 : vector<2x32xf32>
    %530 = vector.extract_strided_slice %515 {offsets = [0, 96], sizes = [2, 32], strides = [1, 1]} : vector<2x128xf32> to vector<2x32xf32>
    %531 = arith.negf %530 : vector<2x32xf32>
    %532 = math.exp %531 : vector<2x32xf32>
    %cst_104 = arith.constant 1.000000e+00 : f32
    %533 = vector.broadcast %cst_104 : f32 to vector<2x32xf32>
    %534 = arith.addf %533, %532 : vector<2x32xf32>
    %535 = arith.divf %533, %534 : vector<2x32xf32>
    %536 = arith.mulf %527, %510 : vector<2x32xf32>
    %537 = arith.mulf %521, %529 : vector<2x32xf32>
    %538 = arith.addf %536, %537 : vector<2x32xf32>
    %539 = math.tanh %538 : vector<2x32xf32>
    %540 = arith.mulf %535, %539 : vector<2x32xf32>
    %541 = vector.extract_strided_slice %482 {offsets = [4, 0], sizes = [2, 128], strides = [1, 1]} : vector<16x128xf32> to vector<2x128xf32>
    %cst_105 = arith.constant dense<0.000000e+00> : vector<2x128xf32>
    %542 = tpu.matmul %540, %475, %cst_105 {dimension_numbers = #tpu.dot_dimension_numbers<[1], [0], [0], [1], [0, 0, 1, 1], [], []>} : vector<2x32xf32>, vector<32x128xf32>, vector<2x128xf32> -> vector<2x128xf32>
    %543 = arith.addf %541, %542 : vector<2x128xf32>
    %544 = vector.extract_strided_slice %543 {offsets = [0, 0], sizes = [2, 32], strides = [1, 1]} : vector<2x128xf32> to vector<2x32xf32>
    %545 = arith.negf %544 : vector<2x32xf32>
    %546 = math.exp %545 : vector<2x32xf32>
    %cst_106 = arith.constant 1.000000e+00 : f32
    %547 = vector.broadcast %cst_106 : f32 to vector<2x32xf32>
    %548 = arith.addf %547, %546 : vector<2x32xf32>
    %549 = arith.divf %547, %548 : vector<2x32xf32>
    %550 = vector.extract_strided_slice %543 {offsets = [0, 32], sizes = [2, 32], strides = [1, 1]} : vector<2x128xf32> to vector<2x32xf32>
    %551 = arith.negf %550 : vector<2x32xf32>
    %552 = math.exp %551 : vector<2x32xf32>
    %cst_107 = arith.constant 1.000000e+00 : f32
    %553 = vector.broadcast %cst_107 : f32 to vector<2x32xf32>
    %554 = arith.addf %553, %552 : vector<2x32xf32>
    %555 = arith.divf %553, %554 : vector<2x32xf32>
    %556 = vector.extract_strided_slice %543 {offsets = [0, 64], sizes = [2, 32], strides = [1, 1]} : vector<2x128xf32> to vector<2x32xf32>
    %557 = math.tanh %556 : vector<2x32xf32>
    %558 = vector.extract_strided_slice %543 {offsets = [0, 96], sizes = [2, 32], strides = [1, 1]} : vector<2x128xf32> to vector<2x32xf32>
    %559 = arith.negf %558 : vector<2x32xf32>
    %560 = math.exp %559 : vector<2x32xf32>
    %cst_108 = arith.constant 1.000000e+00 : f32
    %561 = vector.broadcast %cst_108 : f32 to vector<2x32xf32>
    %562 = arith.addf %561, %560 : vector<2x32xf32>
    %563 = arith.divf %561, %562 : vector<2x32xf32>
    %564 = arith.mulf %555, %538 : vector<2x32xf32>
    %565 = arith.mulf %549, %557 : vector<2x32xf32>
    %566 = arith.addf %564, %565 : vector<2x32xf32>
    %567 = math.tanh %566 : vector<2x32xf32>
    %568 = arith.mulf %563, %567 : vector<2x32xf32>
    %569 = vector.extract_strided_slice %482 {offsets = [6, 0], sizes = [2, 128], strides = [1, 1]} : vector<16x128xf32> to vector<2x128xf32>
    %cst_109 = arith.constant dense<0.000000e+00> : vector<2x128xf32>
    %570 = tpu.matmul %568, %475, %cst_109 {dimension_numbers = #tpu.dot_dimension_numbers<[1], [0], [0], [1], [0, 0, 1, 1], [], []>} : vector<2x32xf32>, vector<32x128xf32>, vector<2x128xf32> -> vector<2x128xf32>
    %571 = arith.addf %569, %570 : vector<2x128xf32>
    %572 = vector.extract_strided_slice %571 {offsets = [0, 0], sizes = [2, 32], strides = [1, 1]} : vector<2x128xf32> to vector<2x32xf32>
    %573 = arith.negf %572 : vector<2x32xf32>
    %574 = math.exp %573 : vector<2x32xf32>
    %cst_110 = arith.constant 1.000000e+00 : f32
    %575 = vector.broadcast %cst_110 : f32 to vector<2x32xf32>
    %576 = arith.addf %575, %574 : vector<2x32xf32>
    %577 = arith.divf %575, %576 : vector<2x32xf32>
    %578 = vector.extract_strided_slice %571 {offsets = [0, 32], sizes = [2, 32], strides = [1, 1]} : vector<2x128xf32> to vector<2x32xf32>
    %579 = arith.negf %578 : vector<2x32xf32>
    %580 = math.exp %579 : vector<2x32xf32>
    %cst_111 = arith.constant 1.000000e+00 : f32
    %581 = vector.broadcast %cst_111 : f32 to vector<2x32xf32>
    %582 = arith.addf %581, %580 : vector<2x32xf32>
    %583 = arith.divf %581, %582 : vector<2x32xf32>
    %584 = vector.extract_strided_slice %571 {offsets = [0, 64], sizes = [2, 32], strides = [1, 1]} : vector<2x128xf32> to vector<2x32xf32>
    %585 = math.tanh %584 : vector<2x32xf32>
    %586 = vector.extract_strided_slice %571 {offsets = [0, 96], sizes = [2, 32], strides = [1, 1]} : vector<2x128xf32> to vector<2x32xf32>
    %587 = arith.negf %586 : vector<2x32xf32>
    %588 = math.exp %587 : vector<2x32xf32>
    %cst_112 = arith.constant 1.000000e+00 : f32
    %589 = vector.broadcast %cst_112 : f32 to vector<2x32xf32>
    %590 = arith.addf %589, %588 : vector<2x32xf32>
    %591 = arith.divf %589, %590 : vector<2x32xf32>
    %592 = arith.mulf %583, %566 : vector<2x32xf32>
    %593 = arith.mulf %577, %585 : vector<2x32xf32>
    %594 = arith.addf %592, %593 : vector<2x32xf32>
    %595 = math.tanh %594 : vector<2x32xf32>
    %596 = arith.mulf %591, %595 : vector<2x32xf32>
    %597 = vector.extract_strided_slice %482 {offsets = [8, 0], sizes = [2, 128], strides = [1, 1]} : vector<16x128xf32> to vector<2x128xf32>
    %cst_113 = arith.constant dense<0.000000e+00> : vector<2x128xf32>
    %598 = tpu.matmul %596, %475, %cst_113 {dimension_numbers = #tpu.dot_dimension_numbers<[1], [0], [0], [1], [0, 0, 1, 1], [], []>} : vector<2x32xf32>, vector<32x128xf32>, vector<2x128xf32> -> vector<2x128xf32>
    %599 = arith.addf %597, %598 : vector<2x128xf32>
    %600 = vector.extract_strided_slice %599 {offsets = [0, 0], sizes = [2, 32], strides = [1, 1]} : vector<2x128xf32> to vector<2x32xf32>
    %601 = arith.negf %600 : vector<2x32xf32>
    %602 = math.exp %601 : vector<2x32xf32>
    %cst_114 = arith.constant 1.000000e+00 : f32
    %603 = vector.broadcast %cst_114 : f32 to vector<2x32xf32>
    %604 = arith.addf %603, %602 : vector<2x32xf32>
    %605 = arith.divf %603, %604 : vector<2x32xf32>
    %606 = vector.extract_strided_slice %599 {offsets = [0, 32], sizes = [2, 32], strides = [1, 1]} : vector<2x128xf32> to vector<2x32xf32>
    %607 = arith.negf %606 : vector<2x32xf32>
    %608 = math.exp %607 : vector<2x32xf32>
    %cst_115 = arith.constant 1.000000e+00 : f32
    %609 = vector.broadcast %cst_115 : f32 to vector<2x32xf32>
    %610 = arith.addf %609, %608 : vector<2x32xf32>
    %611 = arith.divf %609, %610 : vector<2x32xf32>
    %612 = vector.extract_strided_slice %599 {offsets = [0, 64], sizes = [2, 32], strides = [1, 1]} : vector<2x128xf32> to vector<2x32xf32>
    %613 = math.tanh %612 : vector<2x32xf32>
    %614 = vector.extract_strided_slice %599 {offsets = [0, 96], sizes = [2, 32], strides = [1, 1]} : vector<2x128xf32> to vector<2x32xf32>
    %615 = arith.negf %614 : vector<2x32xf32>
    %616 = math.exp %615 : vector<2x32xf32>
    %cst_116 = arith.constant 1.000000e+00 : f32
    %617 = vector.broadcast %cst_116 : f32 to vector<2x32xf32>
    %618 = arith.addf %617, %616 : vector<2x32xf32>
    %619 = arith.divf %617, %618 : vector<2x32xf32>
    %620 = arith.mulf %611, %594 : vector<2x32xf32>
    %621 = arith.mulf %605, %613 : vector<2x32xf32>
    %622 = arith.addf %620, %621 : vector<2x32xf32>
    %623 = math.tanh %622 : vector<2x32xf32>
    %624 = arith.mulf %619, %623 : vector<2x32xf32>
    %625 = vector.extract_strided_slice %482 {offsets = [10, 0], sizes = [2, 128], strides = [1, 1]} : vector<16x128xf32> to vector<2x128xf32>
    %cst_117 = arith.constant dense<0.000000e+00> : vector<2x128xf32>
    %626 = tpu.matmul %624, %475, %cst_117 {dimension_numbers = #tpu.dot_dimension_numbers<[1], [0], [0], [1], [0, 0, 1, 1], [], []>} : vector<2x32xf32>, vector<32x128xf32>, vector<2x128xf32> -> vector<2x128xf32>
    %627 = arith.addf %625, %626 : vector<2x128xf32>
    %628 = vector.extract_strided_slice %627 {offsets = [0, 0], sizes = [2, 32], strides = [1, 1]} : vector<2x128xf32> to vector<2x32xf32>
    %629 = arith.negf %628 : vector<2x32xf32>
    %630 = math.exp %629 : vector<2x32xf32>
    %cst_118 = arith.constant 1.000000e+00 : f32
    %631 = vector.broadcast %cst_118 : f32 to vector<2x32xf32>
    %632 = arith.addf %631, %630 : vector<2x32xf32>
    %633 = arith.divf %631, %632 : vector<2x32xf32>
    %634 = vector.extract_strided_slice %627 {offsets = [0, 32], sizes = [2, 32], strides = [1, 1]} : vector<2x128xf32> to vector<2x32xf32>
    %635 = arith.negf %634 : vector<2x32xf32>
    %636 = math.exp %635 : vector<2x32xf32>
    %cst_119 = arith.constant 1.000000e+00 : f32
    %637 = vector.broadcast %cst_119 : f32 to vector<2x32xf32>
    %638 = arith.addf %637, %636 : vector<2x32xf32>
    %639 = arith.divf %637, %638 : vector<2x32xf32>
    %640 = vector.extract_strided_slice %627 {offsets = [0, 64], sizes = [2, 32], strides = [1, 1]} : vector<2x128xf32> to vector<2x32xf32>
    %641 = math.tanh %640 : vector<2x32xf32>
    %642 = vector.extract_strided_slice %627 {offsets = [0, 96], sizes = [2, 32], strides = [1, 1]} : vector<2x128xf32> to vector<2x32xf32>
    %643 = arith.negf %642 : vector<2x32xf32>
    %644 = math.exp %643 : vector<2x32xf32>
    %cst_120 = arith.constant 1.000000e+00 : f32
    %645 = vector.broadcast %cst_120 : f32 to vector<2x32xf32>
    %646 = arith.addf %645, %644 : vector<2x32xf32>
    %647 = arith.divf %645, %646 : vector<2x32xf32>
    %648 = arith.mulf %639, %622 : vector<2x32xf32>
    %649 = arith.mulf %633, %641 : vector<2x32xf32>
    %650 = arith.addf %648, %649 : vector<2x32xf32>
    %651 = math.tanh %650 : vector<2x32xf32>
    %652 = arith.mulf %647, %651 : vector<2x32xf32>
    %653 = vector.extract_strided_slice %482 {offsets = [12, 0], sizes = [2, 128], strides = [1, 1]} : vector<16x128xf32> to vector<2x128xf32>
    %cst_121 = arith.constant dense<0.000000e+00> : vector<2x128xf32>
    %654 = tpu.matmul %652, %475, %cst_121 {dimension_numbers = #tpu.dot_dimension_numbers<[1], [0], [0], [1], [0, 0, 1, 1], [], []>} : vector<2x32xf32>, vector<32x128xf32>, vector<2x128xf32> -> vector<2x128xf32>
    %655 = arith.addf %653, %654 : vector<2x128xf32>
    %656 = vector.extract_strided_slice %655 {offsets = [0, 0], sizes = [2, 32], strides = [1, 1]} : vector<2x128xf32> to vector<2x32xf32>
    %657 = arith.negf %656 : vector<2x32xf32>
    %658 = math.exp %657 : vector<2x32xf32>
    %cst_122 = arith.constant 1.000000e+00 : f32
    %659 = vector.broadcast %cst_122 : f32 to vector<2x32xf32>
    %660 = arith.addf %659, %658 : vector<2x32xf32>
    %661 = arith.divf %659, %660 : vector<2x32xf32>
    %662 = vector.extract_strided_slice %655 {offsets = [0, 32], sizes = [2, 32], strides = [1, 1]} : vector<2x128xf32> to vector<2x32xf32>
    %663 = arith.negf %662 : vector<2x32xf32>
    %664 = math.exp %663 : vector<2x32xf32>
    %cst_123 = arith.constant 1.000000e+00 : f32
    %665 = vector.broadcast %cst_123 : f32 to vector<2x32xf32>
    %666 = arith.addf %665, %664 : vector<2x32xf32>
    %667 = arith.divf %665, %666 : vector<2x32xf32>
    %668 = vector.extract_strided_slice %655 {offsets = [0, 64], sizes = [2, 32], strides = [1, 1]} : vector<2x128xf32> to vector<2x32xf32>
    %669 = math.tanh %668 : vector<2x32xf32>
    %670 = vector.extract_strided_slice %655 {offsets = [0, 96], sizes = [2, 32], strides = [1, 1]} : vector<2x128xf32> to vector<2x32xf32>
    %671 = arith.negf %670 : vector<2x32xf32>
    %672 = math.exp %671 : vector<2x32xf32>
    %cst_124 = arith.constant 1.000000e+00 : f32
    %673 = vector.broadcast %cst_124 : f32 to vector<2x32xf32>
    %674 = arith.addf %673, %672 : vector<2x32xf32>
    %675 = arith.divf %673, %674 : vector<2x32xf32>
    %676 = arith.mulf %667, %650 : vector<2x32xf32>
    %677 = arith.mulf %661, %669 : vector<2x32xf32>
    %678 = arith.addf %676, %677 : vector<2x32xf32>
    %679 = math.tanh %678 : vector<2x32xf32>
    %680 = arith.mulf %675, %679 : vector<2x32xf32>
    %681 = vector.extract_strided_slice %482 {offsets = [14, 0], sizes = [2, 128], strides = [1, 1]} : vector<16x128xf32> to vector<2x128xf32>
    %cst_125 = arith.constant dense<0.000000e+00> : vector<2x128xf32>
    %682 = tpu.matmul %680, %475, %cst_125 {dimension_numbers = #tpu.dot_dimension_numbers<[1], [0], [0], [1], [0, 0, 1, 1], [], []>} : vector<2x32xf32>, vector<32x128xf32>, vector<2x128xf32> -> vector<2x128xf32>
    %683 = arith.addf %681, %682 : vector<2x128xf32>
    %684 = vector.extract_strided_slice %683 {offsets = [0, 0], sizes = [2, 32], strides = [1, 1]} : vector<2x128xf32> to vector<2x32xf32>
    %685 = arith.negf %684 : vector<2x32xf32>
    %686 = math.exp %685 : vector<2x32xf32>
    %cst_126 = arith.constant 1.000000e+00 : f32
    %687 = vector.broadcast %cst_126 : f32 to vector<2x32xf32>
    %688 = arith.addf %687, %686 : vector<2x32xf32>
    %689 = arith.divf %687, %688 : vector<2x32xf32>
    %690 = vector.extract_strided_slice %683 {offsets = [0, 32], sizes = [2, 32], strides = [1, 1]} : vector<2x128xf32> to vector<2x32xf32>
    %691 = arith.negf %690 : vector<2x32xf32>
    %692 = math.exp %691 : vector<2x32xf32>
    %cst_127 = arith.constant 1.000000e+00 : f32
    %693 = vector.broadcast %cst_127 : f32 to vector<2x32xf32>
    %694 = arith.addf %693, %692 : vector<2x32xf32>
    %695 = arith.divf %693, %694 : vector<2x32xf32>
    %696 = vector.extract_strided_slice %683 {offsets = [0, 64], sizes = [2, 32], strides = [1, 1]} : vector<2x128xf32> to vector<2x32xf32>
    %697 = math.tanh %696 : vector<2x32xf32>
    %698 = vector.extract_strided_slice %683 {offsets = [0, 96], sizes = [2, 32], strides = [1, 1]} : vector<2x128xf32> to vector<2x32xf32>
    %699 = arith.negf %698 : vector<2x32xf32>
    %700 = math.exp %699 : vector<2x32xf32>
    %cst_128 = arith.constant 1.000000e+00 : f32
    %701 = vector.broadcast %cst_128 : f32 to vector<2x32xf32>
    %702 = arith.addf %701, %700 : vector<2x32xf32>
    %703 = arith.divf %701, %702 : vector<2x32xf32>
    %704 = arith.mulf %695, %678 : vector<2x32xf32>
    %705 = arith.mulf %689, %697 : vector<2x32xf32>
    %706 = arith.addf %704, %705 : vector<2x32xf32>
    %707 = math.tanh %706 : vector<2x32xf32>
    %708 = arith.mulf %703, %707 : vector<2x32xf32>
    %cst_129 = arith.constant dense<0.000000e+00> : vector<16x128xf32>
    %709 = tpu.matmul %473, %477, %cst_129 {dimension_numbers = #tpu.dot_dimension_numbers<[1], [0], [0], [1], [0, 0, 1, 1], [], []>} : vector<16x64xf32>, vector<64x128xf32>, vector<16x128xf32> -> vector<16x128xf32>
    %710 = vector.broadcast %479 : vector<1x128xf32> to vector<16x128xf32>
    %711 = arith.addf %709, %710 : vector<16x128xf32>
    %cst_130 = arith.constant 0.000000e+00 : f32
    %712 = vector.broadcast %cst_130 : f32 to vector<2x32xf32>
    %cst_131 = arith.constant 0.000000e+00 : f32
    %713 = vector.broadcast %cst_131 : f32 to vector<2x32xf32>
    %714 = vector.extract_strided_slice %711 {offsets = [14, 0], sizes = [2, 128], strides = [1, 1]} : vector<16x128xf32> to vector<2x128xf32>
    %cst_132 = arith.constant dense<0.000000e+00> : vector<2x128xf32>
    %715 = tpu.matmul %712, %478, %cst_132 {dimension_numbers = #tpu.dot_dimension_numbers<[1], [0], [0], [1], [0, 0, 1, 1], [], []>} : vector<2x32xf32>, vector<32x128xf32>, vector<2x128xf32> -> vector<2x128xf32>
    %716 = arith.addf %714, %715 : vector<2x128xf32>
    %717 = vector.extract_strided_slice %716 {offsets = [0, 0], sizes = [2, 32], strides = [1, 1]} : vector<2x128xf32> to vector<2x32xf32>
    %718 = arith.negf %717 : vector<2x32xf32>
    %719 = math.exp %718 : vector<2x32xf32>
    %cst_133 = arith.constant 1.000000e+00 : f32
    %720 = vector.broadcast %cst_133 : f32 to vector<2x32xf32>
    %721 = arith.addf %720, %719 : vector<2x32xf32>
    %722 = arith.divf %720, %721 : vector<2x32xf32>
    %723 = vector.extract_strided_slice %716 {offsets = [0, 32], sizes = [2, 32], strides = [1, 1]} : vector<2x128xf32> to vector<2x32xf32>
    %724 = arith.negf %723 : vector<2x32xf32>
    %725 = math.exp %724 : vector<2x32xf32>
    %cst_134 = arith.constant 1.000000e+00 : f32
    %726 = vector.broadcast %cst_134 : f32 to vector<2x32xf32>
    %727 = arith.addf %726, %725 : vector<2x32xf32>
    %728 = arith.divf %726, %727 : vector<2x32xf32>
    %729 = vector.extract_strided_slice %716 {offsets = [0, 64], sizes = [2, 32], strides = [1, 1]} : vector<2x128xf32> to vector<2x32xf32>
    %730 = math.tanh %729 : vector<2x32xf32>
    %731 = vector.extract_strided_slice %716 {offsets = [0, 96], sizes = [2, 32], strides = [1, 1]} : vector<2x128xf32> to vector<2x32xf32>
    %732 = arith.negf %731 : vector<2x32xf32>
    %733 = math.exp %732 : vector<2x32xf32>
    %cst_135 = arith.constant 1.000000e+00 : f32
    %734 = vector.broadcast %cst_135 : f32 to vector<2x32xf32>
    %735 = arith.addf %734, %733 : vector<2x32xf32>
    %736 = arith.divf %734, %735 : vector<2x32xf32>
    %737 = arith.mulf %728, %713 : vector<2x32xf32>
    %738 = arith.mulf %722, %730 : vector<2x32xf32>
    %739 = arith.addf %737, %738 : vector<2x32xf32>
    %740 = math.tanh %739 : vector<2x32xf32>
    %741 = arith.mulf %736, %740 : vector<2x32xf32>
    %742 = vector.extract_strided_slice %711 {offsets = [12, 0], sizes = [2, 128], strides = [1, 1]} : vector<16x128xf32> to vector<2x128xf32>
    %cst_136 = arith.constant dense<0.000000e+00> : vector<2x128xf32>
    %743 = tpu.matmul %741, %478, %cst_136 {dimension_numbers = #tpu.dot_dimension_numbers<[1], [0], [0], [1], [0, 0, 1, 1], [], []>} : vector<2x32xf32>, vector<32x128xf32>, vector<2x128xf32> -> vector<2x128xf32>
    %744 = arith.addf %742, %743 : vector<2x128xf32>
    %745 = vector.extract_strided_slice %744 {offsets = [0, 0], sizes = [2, 32], strides = [1, 1]} : vector<2x128xf32> to vector<2x32xf32>
    %746 = arith.negf %745 : vector<2x32xf32>
    %747 = math.exp %746 : vector<2x32xf32>
    %cst_137 = arith.constant 1.000000e+00 : f32
    %748 = vector.broadcast %cst_137 : f32 to vector<2x32xf32>
    %749 = arith.addf %748, %747 : vector<2x32xf32>
    %750 = arith.divf %748, %749 : vector<2x32xf32>
    %751 = vector.extract_strided_slice %744 {offsets = [0, 32], sizes = [2, 32], strides = [1, 1]} : vector<2x128xf32> to vector<2x32xf32>
    %752 = arith.negf %751 : vector<2x32xf32>
    %753 = math.exp %752 : vector<2x32xf32>
    %cst_138 = arith.constant 1.000000e+00 : f32
    %754 = vector.broadcast %cst_138 : f32 to vector<2x32xf32>
    %755 = arith.addf %754, %753 : vector<2x32xf32>
    %756 = arith.divf %754, %755 : vector<2x32xf32>
    %757 = vector.extract_strided_slice %744 {offsets = [0, 64], sizes = [2, 32], strides = [1, 1]} : vector<2x128xf32> to vector<2x32xf32>
    %758 = math.tanh %757 : vector<2x32xf32>
    %759 = vector.extract_strided_slice %744 {offsets = [0, 96], sizes = [2, 32], strides = [1, 1]} : vector<2x128xf32> to vector<2x32xf32>
    %760 = arith.negf %759 : vector<2x32xf32>
    %761 = math.exp %760 : vector<2x32xf32>
    %cst_139 = arith.constant 1.000000e+00 : f32
    %762 = vector.broadcast %cst_139 : f32 to vector<2x32xf32>
    %763 = arith.addf %762, %761 : vector<2x32xf32>
    %764 = arith.divf %762, %763 : vector<2x32xf32>
    %765 = arith.mulf %756, %739 : vector<2x32xf32>
    %766 = arith.mulf %750, %758 : vector<2x32xf32>
    %767 = arith.addf %765, %766 : vector<2x32xf32>
    %768 = math.tanh %767 : vector<2x32xf32>
    %769 = arith.mulf %764, %768 : vector<2x32xf32>
    %770 = vector.extract_strided_slice %711 {offsets = [10, 0], sizes = [2, 128], strides = [1, 1]} : vector<16x128xf32> to vector<2x128xf32>
    %cst_140 = arith.constant dense<0.000000e+00> : vector<2x128xf32>
    %771 = tpu.matmul %769, %478, %cst_140 {dimension_numbers = #tpu.dot_dimension_numbers<[1], [0], [0], [1], [0, 0, 1, 1], [], []>} : vector<2x32xf32>, vector<32x128xf32>, vector<2x128xf32> -> vector<2x128xf32>
    %772 = arith.addf %770, %771 : vector<2x128xf32>
    %773 = vector.extract_strided_slice %772 {offsets = [0, 0], sizes = [2, 32], strides = [1, 1]} : vector<2x128xf32> to vector<2x32xf32>
    %774 = arith.negf %773 : vector<2x32xf32>
    %775 = math.exp %774 : vector<2x32xf32>
    %cst_141 = arith.constant 1.000000e+00 : f32
    %776 = vector.broadcast %cst_141 : f32 to vector<2x32xf32>
    %777 = arith.addf %776, %775 : vector<2x32xf32>
    %778 = arith.divf %776, %777 : vector<2x32xf32>
    %779 = vector.extract_strided_slice %772 {offsets = [0, 32], sizes = [2, 32], strides = [1, 1]} : vector<2x128xf32> to vector<2x32xf32>
    %780 = arith.negf %779 : vector<2x32xf32>
    %781 = math.exp %780 : vector<2x32xf32>
    %cst_142 = arith.constant 1.000000e+00 : f32
    %782 = vector.broadcast %cst_142 : f32 to vector<2x32xf32>
    %783 = arith.addf %782, %781 : vector<2x32xf32>
    %784 = arith.divf %782, %783 : vector<2x32xf32>
    %785 = vector.extract_strided_slice %772 {offsets = [0, 64], sizes = [2, 32], strides = [1, 1]} : vector<2x128xf32> to vector<2x32xf32>
    %786 = math.tanh %785 : vector<2x32xf32>
    %787 = vector.extract_strided_slice %772 {offsets = [0, 96], sizes = [2, 32], strides = [1, 1]} : vector<2x128xf32> to vector<2x32xf32>
    %788 = arith.negf %787 : vector<2x32xf32>
    %789 = math.exp %788 : vector<2x32xf32>
    %cst_143 = arith.constant 1.000000e+00 : f32
    %790 = vector.broadcast %cst_143 : f32 to vector<2x32xf32>
    %791 = arith.addf %790, %789 : vector<2x32xf32>
    %792 = arith.divf %790, %791 : vector<2x32xf32>
    %793 = arith.mulf %784, %767 : vector<2x32xf32>
    %794 = arith.mulf %778, %786 : vector<2x32xf32>
    %795 = arith.addf %793, %794 : vector<2x32xf32>
    %796 = math.tanh %795 : vector<2x32xf32>
    %797 = arith.mulf %792, %796 : vector<2x32xf32>
    %798 = vector.extract_strided_slice %711 {offsets = [8, 0], sizes = [2, 128], strides = [1, 1]} : vector<16x128xf32> to vector<2x128xf32>
    %cst_144 = arith.constant dense<0.000000e+00> : vector<2x128xf32>
    %799 = tpu.matmul %797, %478, %cst_144 {dimension_numbers = #tpu.dot_dimension_numbers<[1], [0], [0], [1], [0, 0, 1, 1], [], []>} : vector<2x32xf32>, vector<32x128xf32>, vector<2x128xf32> -> vector<2x128xf32>
    %800 = arith.addf %798, %799 : vector<2x128xf32>
    %801 = vector.extract_strided_slice %800 {offsets = [0, 0], sizes = [2, 32], strides = [1, 1]} : vector<2x128xf32> to vector<2x32xf32>
    %802 = arith.negf %801 : vector<2x32xf32>
    %803 = math.exp %802 : vector<2x32xf32>
    %cst_145 = arith.constant 1.000000e+00 : f32
    %804 = vector.broadcast %cst_145 : f32 to vector<2x32xf32>
    %805 = arith.addf %804, %803 : vector<2x32xf32>
    %806 = arith.divf %804, %805 : vector<2x32xf32>
    %807 = vector.extract_strided_slice %800 {offsets = [0, 32], sizes = [2, 32], strides = [1, 1]} : vector<2x128xf32> to vector<2x32xf32>
    %808 = arith.negf %807 : vector<2x32xf32>
    %809 = math.exp %808 : vector<2x32xf32>
    %cst_146 = arith.constant 1.000000e+00 : f32
    %810 = vector.broadcast %cst_146 : f32 to vector<2x32xf32>
    %811 = arith.addf %810, %809 : vector<2x32xf32>
    %812 = arith.divf %810, %811 : vector<2x32xf32>
    %813 = vector.extract_strided_slice %800 {offsets = [0, 64], sizes = [2, 32], strides = [1, 1]} : vector<2x128xf32> to vector<2x32xf32>
    %814 = math.tanh %813 : vector<2x32xf32>
    %815 = vector.extract_strided_slice %800 {offsets = [0, 96], sizes = [2, 32], strides = [1, 1]} : vector<2x128xf32> to vector<2x32xf32>
    %816 = arith.negf %815 : vector<2x32xf32>
    %817 = math.exp %816 : vector<2x32xf32>
    %cst_147 = arith.constant 1.000000e+00 : f32
    %818 = vector.broadcast %cst_147 : f32 to vector<2x32xf32>
    %819 = arith.addf %818, %817 : vector<2x32xf32>
    %820 = arith.divf %818, %819 : vector<2x32xf32>
    %821 = arith.mulf %812, %795 : vector<2x32xf32>
    %822 = arith.mulf %806, %814 : vector<2x32xf32>
    %823 = arith.addf %821, %822 : vector<2x32xf32>
    %824 = math.tanh %823 : vector<2x32xf32>
    %825 = arith.mulf %820, %824 : vector<2x32xf32>
    %826 = vector.extract_strided_slice %711 {offsets = [6, 0], sizes = [2, 128], strides = [1, 1]} : vector<16x128xf32> to vector<2x128xf32>
    %cst_148 = arith.constant dense<0.000000e+00> : vector<2x128xf32>
    %827 = tpu.matmul %825, %478, %cst_148 {dimension_numbers = #tpu.dot_dimension_numbers<[1], [0], [0], [1], [0, 0, 1, 1], [], []>} : vector<2x32xf32>, vector<32x128xf32>, vector<2x128xf32> -> vector<2x128xf32>
    %828 = arith.addf %826, %827 : vector<2x128xf32>
    %829 = vector.extract_strided_slice %828 {offsets = [0, 0], sizes = [2, 32], strides = [1, 1]} : vector<2x128xf32> to vector<2x32xf32>
    %830 = arith.negf %829 : vector<2x32xf32>
    %831 = math.exp %830 : vector<2x32xf32>
    %cst_149 = arith.constant 1.000000e+00 : f32
    %832 = vector.broadcast %cst_149 : f32 to vector<2x32xf32>
    %833 = arith.addf %832, %831 : vector<2x32xf32>
    %834 = arith.divf %832, %833 : vector<2x32xf32>
    %835 = vector.extract_strided_slice %828 {offsets = [0, 32], sizes = [2, 32], strides = [1, 1]} : vector<2x128xf32> to vector<2x32xf32>
    %836 = arith.negf %835 : vector<2x32xf32>
    %837 = math.exp %836 : vector<2x32xf32>
    %cst_150 = arith.constant 1.000000e+00 : f32
    %838 = vector.broadcast %cst_150 : f32 to vector<2x32xf32>
    %839 = arith.addf %838, %837 : vector<2x32xf32>
    %840 = arith.divf %838, %839 : vector<2x32xf32>
    %841 = vector.extract_strided_slice %828 {offsets = [0, 64], sizes = [2, 32], strides = [1, 1]} : vector<2x128xf32> to vector<2x32xf32>
    %842 = math.tanh %841 : vector<2x32xf32>
    %843 = vector.extract_strided_slice %828 {offsets = [0, 96], sizes = [2, 32], strides = [1, 1]} : vector<2x128xf32> to vector<2x32xf32>
    %844 = arith.negf %843 : vector<2x32xf32>
    %845 = math.exp %844 : vector<2x32xf32>
    %cst_151 = arith.constant 1.000000e+00 : f32
    %846 = vector.broadcast %cst_151 : f32 to vector<2x32xf32>
    %847 = arith.addf %846, %845 : vector<2x32xf32>
    %848 = arith.divf %846, %847 : vector<2x32xf32>
    %849 = arith.mulf %840, %823 : vector<2x32xf32>
    %850 = arith.mulf %834, %842 : vector<2x32xf32>
    %851 = arith.addf %849, %850 : vector<2x32xf32>
    %852 = math.tanh %851 : vector<2x32xf32>
    %853 = arith.mulf %848, %852 : vector<2x32xf32>
    %854 = vector.extract_strided_slice %711 {offsets = [4, 0], sizes = [2, 128], strides = [1, 1]} : vector<16x128xf32> to vector<2x128xf32>
    %cst_152 = arith.constant dense<0.000000e+00> : vector<2x128xf32>
    %855 = tpu.matmul %853, %478, %cst_152 {dimension_numbers = #tpu.dot_dimension_numbers<[1], [0], [0], [1], [0, 0, 1, 1], [], []>} : vector<2x32xf32>, vector<32x128xf32>, vector<2x128xf32> -> vector<2x128xf32>
    %856 = arith.addf %854, %855 : vector<2x128xf32>
    %857 = vector.extract_strided_slice %856 {offsets = [0, 0], sizes = [2, 32], strides = [1, 1]} : vector<2x128xf32> to vector<2x32xf32>
    %858 = arith.negf %857 : vector<2x32xf32>
    %859 = math.exp %858 : vector<2x32xf32>
    %cst_153 = arith.constant 1.000000e+00 : f32
    %860 = vector.broadcast %cst_153 : f32 to vector<2x32xf32>
    %861 = arith.addf %860, %859 : vector<2x32xf32>
    %862 = arith.divf %860, %861 : vector<2x32xf32>
    %863 = vector.extract_strided_slice %856 {offsets = [0, 32], sizes = [2, 32], strides = [1, 1]} : vector<2x128xf32> to vector<2x32xf32>
    %864 = arith.negf %863 : vector<2x32xf32>
    %865 = math.exp %864 : vector<2x32xf32>
    %cst_154 = arith.constant 1.000000e+00 : f32
    %866 = vector.broadcast %cst_154 : f32 to vector<2x32xf32>
    %867 = arith.addf %866, %865 : vector<2x32xf32>
    %868 = arith.divf %866, %867 : vector<2x32xf32>
    %869 = vector.extract_strided_slice %856 {offsets = [0, 64], sizes = [2, 32], strides = [1, 1]} : vector<2x128xf32> to vector<2x32xf32>
    %870 = math.tanh %869 : vector<2x32xf32>
    %871 = vector.extract_strided_slice %856 {offsets = [0, 96], sizes = [2, 32], strides = [1, 1]} : vector<2x128xf32> to vector<2x32xf32>
    %872 = arith.negf %871 : vector<2x32xf32>
    %873 = math.exp %872 : vector<2x32xf32>
    %cst_155 = arith.constant 1.000000e+00 : f32
    %874 = vector.broadcast %cst_155 : f32 to vector<2x32xf32>
    %875 = arith.addf %874, %873 : vector<2x32xf32>
    %876 = arith.divf %874, %875 : vector<2x32xf32>
    %877 = arith.mulf %868, %851 : vector<2x32xf32>
    %878 = arith.mulf %862, %870 : vector<2x32xf32>
    %879 = arith.addf %877, %878 : vector<2x32xf32>
    %880 = math.tanh %879 : vector<2x32xf32>
    %881 = arith.mulf %876, %880 : vector<2x32xf32>
    %882 = vector.extract_strided_slice %711 {offsets = [2, 0], sizes = [2, 128], strides = [1, 1]} : vector<16x128xf32> to vector<2x128xf32>
    %cst_156 = arith.constant dense<0.000000e+00> : vector<2x128xf32>
    %883 = tpu.matmul %881, %478, %cst_156 {dimension_numbers = #tpu.dot_dimension_numbers<[1], [0], [0], [1], [0, 0, 1, 1], [], []>} : vector<2x32xf32>, vector<32x128xf32>, vector<2x128xf32> -> vector<2x128xf32>
    %884 = arith.addf %882, %883 : vector<2x128xf32>
    %885 = vector.extract_strided_slice %884 {offsets = [0, 0], sizes = [2, 32], strides = [1, 1]} : vector<2x128xf32> to vector<2x32xf32>
    %886 = arith.negf %885 : vector<2x32xf32>
    %887 = math.exp %886 : vector<2x32xf32>
    %cst_157 = arith.constant 1.000000e+00 : f32
    %888 = vector.broadcast %cst_157 : f32 to vector<2x32xf32>
    %889 = arith.addf %888, %887 : vector<2x32xf32>
    %890 = arith.divf %888, %889 : vector<2x32xf32>
    %891 = vector.extract_strided_slice %884 {offsets = [0, 32], sizes = [2, 32], strides = [1, 1]} : vector<2x128xf32> to vector<2x32xf32>
    %892 = arith.negf %891 : vector<2x32xf32>
    %893 = math.exp %892 : vector<2x32xf32>
    %cst_158 = arith.constant 1.000000e+00 : f32
    %894 = vector.broadcast %cst_158 : f32 to vector<2x32xf32>
    %895 = arith.addf %894, %893 : vector<2x32xf32>
    %896 = arith.divf %894, %895 : vector<2x32xf32>
    %897 = vector.extract_strided_slice %884 {offsets = [0, 64], sizes = [2, 32], strides = [1, 1]} : vector<2x128xf32> to vector<2x32xf32>
    %898 = math.tanh %897 : vector<2x32xf32>
    %899 = vector.extract_strided_slice %884 {offsets = [0, 96], sizes = [2, 32], strides = [1, 1]} : vector<2x128xf32> to vector<2x32xf32>
    %900 = arith.negf %899 : vector<2x32xf32>
    %901 = math.exp %900 : vector<2x32xf32>
    %cst_159 = arith.constant 1.000000e+00 : f32
    %902 = vector.broadcast %cst_159 : f32 to vector<2x32xf32>
    %903 = arith.addf %902, %901 : vector<2x32xf32>
    %904 = arith.divf %902, %903 : vector<2x32xf32>
    %905 = arith.mulf %896, %879 : vector<2x32xf32>
    %906 = arith.mulf %890, %898 : vector<2x32xf32>
    %907 = arith.addf %905, %906 : vector<2x32xf32>
    %908 = math.tanh %907 : vector<2x32xf32>
    %909 = arith.mulf %904, %908 : vector<2x32xf32>
    %910 = vector.extract_strided_slice %711 {offsets = [0, 0], sizes = [2, 128], strides = [1, 1]} : vector<16x128xf32> to vector<2x128xf32>
    %cst_160 = arith.constant dense<0.000000e+00> : vector<2x128xf32>
    %911 = tpu.matmul %909, %478, %cst_160 {dimension_numbers = #tpu.dot_dimension_numbers<[1], [0], [0], [1], [0, 0, 1, 1], [], []>} : vector<2x32xf32>, vector<32x128xf32>, vector<2x128xf32> -> vector<2x128xf32>
    %912 = arith.addf %910, %911 : vector<2x128xf32>
    %913 = vector.extract_strided_slice %912 {offsets = [0, 0], sizes = [2, 32], strides = [1, 1]} : vector<2x128xf32> to vector<2x32xf32>
    %914 = arith.negf %913 : vector<2x32xf32>
    %915 = math.exp %914 : vector<2x32xf32>
    %cst_161 = arith.constant 1.000000e+00 : f32
    %916 = vector.broadcast %cst_161 : f32 to vector<2x32xf32>
    %917 = arith.addf %916, %915 : vector<2x32xf32>
    %918 = arith.divf %916, %917 : vector<2x32xf32>
    %919 = vector.extract_strided_slice %912 {offsets = [0, 32], sizes = [2, 32], strides = [1, 1]} : vector<2x128xf32> to vector<2x32xf32>
    %920 = arith.negf %919 : vector<2x32xf32>
    %921 = math.exp %920 : vector<2x32xf32>
    %cst_162 = arith.constant 1.000000e+00 : f32
    %922 = vector.broadcast %cst_162 : f32 to vector<2x32xf32>
    %923 = arith.addf %922, %921 : vector<2x32xf32>
    %924 = arith.divf %922, %923 : vector<2x32xf32>
    %925 = vector.extract_strided_slice %912 {offsets = [0, 64], sizes = [2, 32], strides = [1, 1]} : vector<2x128xf32> to vector<2x32xf32>
    %926 = math.tanh %925 : vector<2x32xf32>
    %927 = vector.extract_strided_slice %912 {offsets = [0, 96], sizes = [2, 32], strides = [1, 1]} : vector<2x128xf32> to vector<2x32xf32>
    %928 = arith.negf %927 : vector<2x32xf32>
    %929 = math.exp %928 : vector<2x32xf32>
    %cst_163 = arith.constant 1.000000e+00 : f32
    %930 = vector.broadcast %cst_163 : f32 to vector<2x32xf32>
    %931 = arith.addf %930, %929 : vector<2x32xf32>
    %932 = arith.divf %930, %931 : vector<2x32xf32>
    %933 = arith.mulf %924, %907 : vector<2x32xf32>
    %934 = arith.mulf %918, %926 : vector<2x32xf32>
    %935 = arith.addf %933, %934 : vector<2x32xf32>
    %936 = math.tanh %935 : vector<2x32xf32>
    %937 = arith.mulf %932, %936 : vector<2x32xf32>
    %cst_164 = arith.constant 0.000000e+00 : f32
    %938 = vector.broadcast %cst_164 : f32 to vector<2x64xf32>
    %939 = tpu.concatenate %512, %937 in 1 : vector<2x32xf32>, vector<2x32xf32> -> vector<2x64xf32>
    %940 = arith.addf %938, %939 : vector<2x64xf32>
    %941 = tpu.concatenate %540, %909 in 1 : vector<2x32xf32>, vector<2x32xf32> -> vector<2x64xf32>
    %942 = arith.addf %940, %941 : vector<2x64xf32>
    %943 = tpu.concatenate %568, %881 in 1 : vector<2x32xf32>, vector<2x32xf32> -> vector<2x64xf32>
    %944 = arith.addf %942, %943 : vector<2x64xf32>
    %945 = tpu.concatenate %596, %853 in 1 : vector<2x32xf32>, vector<2x32xf32> -> vector<2x64xf32>
    %946 = arith.addf %944, %945 : vector<2x64xf32>
    %947 = tpu.concatenate %624, %825 in 1 : vector<2x32xf32>, vector<2x32xf32> -> vector<2x64xf32>
    %948 = arith.addf %946, %947 : vector<2x64xf32>
    %949 = tpu.concatenate %652, %797 in 1 : vector<2x32xf32>, vector<2x32xf32> -> vector<2x64xf32>
    %950 = arith.addf %948, %949 : vector<2x64xf32>
    %951 = tpu.concatenate %680, %769 in 1 : vector<2x32xf32>, vector<2x32xf32> -> vector<2x64xf32>
    %952 = arith.addf %950, %951 : vector<2x64xf32>
    %953 = tpu.concatenate %708, %741 in 1 : vector<2x32xf32>, vector<2x32xf32> -> vector<2x64xf32>
    %954 = arith.addf %952, %953 : vector<2x64xf32>
    %cst_165 = arith.constant 1.250000e-01 : f32
    %955 = vector.broadcast %cst_165 : f32 to vector<2x64xf32>
    %956 = arith.mulf %954, %955 : vector<2x64xf32>
    %c0_166 = arith.constant 0 : index
    %c0_167 = arith.constant 0 : index
    %957 = vector.load %arg13[%c0_166, %c0_167] : memref<2x64xf32, #tpu.memory_space<vmem>>, vector<2x64xf32>
    tpu.vector_store %arg13[%c0_166, %c0_167], %956 {strides = array<i32>} : memref<2x64xf32, #tpu.memory_space<vmem>>, vector<2x64xf32>,
    return
  }
}

</mosaic_0001>

<llo_original>
// kernel: semantic_model_forward.1
$region0: #{semantic_model_forward.1}
  #allocation0 [shape = 'u32[]', space=smem, size = 0x4, offset = 0x4, fixed_abs, tag = 'smem constant byte address 0x4 - core index']
  #allocation1 [shape = 'u32[144,128]{1,0:T(1,128)}', space=vmem, size = 0x12000, scoped, tag = 'internal scratch']
  %s0 = inlined_call_operand.vmem [shape: f32[16,50], index: 0, kind: input, shape index: {}]
  %s1 = inlined_call_operand.hbm [shape: f32[50,128], index: 1, kind: input, shape index: {}]
  %s2 = inlined_call_operand.hbm [shape: f32[32,128], index: 2, kind: input, shape index: {}]
  %s3 = inlined_call_operand.vmem [shape: f32[1,128], index: 3, kind: input, shape index: {}]
  %s4 = inlined_call_operand.hbm [shape: f32[50,128], index: 4, kind: input, shape index: {}]
  %s5 = inlined_call_operand.hbm [shape: f32[32,128], index: 5, kind: input, shape index: {}]
  %s6 = inlined_call_operand.vmem [shape: f32[1,128], index: 6, kind: input, shape index: {}]
  %s7 = inlined_call_operand.vmem [shape: f32[64,128], index: 7, kind: input, shape index: {}]
  %s8 = inlined_call_operand.hbm [shape: f32[32,128], index: 8, kind: input, shape index: {}]
  %s9 = inlined_call_operand.vmem [shape: f32[1,128], index: 9, kind: input, shape index: {}]
  %s10 = inlined_call_operand.hbm [shape: f32[64,128], index: 10, kind: input, shape index: {}]
  %s11 = inlined_call_operand.hbm [shape: f32[32,128], index: 11, kind: input, shape index: {}]
  %s12 = inlined_call_operand.vmem [shape: f32[1,128], index: 12, kind: input, shape index: {}]
  %s13 = inlined_call_operand.hbm [shape: f32[2,64], index: 13, kind: output, shape index: {}]
  %s14 = sld [smem:[#allocation0]]
  $region90: #{semantic_model_forward.1} parent=0
    _
  %s16 = ssub.s32 1, %s14
  %s17 = scalar_select 0, %s16, %s14
  $region1: #{semantic_model_forward.1} parent=0
    #allocation2 [shape = 'u8[28672]{0}', space=vmem, size = 0x7000, scoped, tag = 'input window, operand 1, single buffered']
    #allocation3 [shape = 's32[1]{0}', space=sflag, size = 0x4, scoped, tag = 'scoped memory for semantic_model_forward.1']
    #allocation4 [shape = 's32[1]{0}', space=sflag, size = 0x4, scoped, tag = 'scoped memory for semantic_model_forward.1']
    #allocation5 [shape = 'u8[16384]{0}', space=vmem, size = 0x4000, scoped, tag = 'input window, operand 2, single buffered']
    #allocation6 [shape = 's32[1]{0}', space=sflag, size = 0x4, scoped, tag = 'scoped memory for semantic_model_forward.1']
    #allocation7 [shape = 'u8[28672]{0}', space=vmem, size = 0x7000, scoped, tag = 'input window, operand 4, single buffered']
    #allocation8 [shape = 'u8[16384]{0}', space=vmem, size = 0x4000, scoped, tag = 'input window, operand 5, single buffered']
    #allocation9 [shape = 's32[1]{0}', space=sflag, size = 0x4, scoped, tag = 'scoped memory for semantic_model_forward.1']
    #allocation10 [shape = 'u8[16384]{0}', space=vmem, size = 0x4000, scoped, tag = 'input window, operand 8, single buffered']
    #allocation11 [shape = 'u8[32768]{0}', space=vmem, size = 0x8000, scoped, tag = 'input window, operand 10, single buffered']
    #allocation12 [shape = 's32[1]{0}', space=sflag, size = 0x4, scoped, tag = 'scoped memory for semantic_model_forward.1']
    #allocation13 [shape = 'u8[16384]{0}', space=vmem, size = 0x4000, scoped, tag = 'input window, operand 11, single buffered']
    #allocation14 [shape = 'u8[1024]{0}', space=vmem, size = 0x400, scoped, tag = 'output window, operand 0, single buffered']
    %18 = vsyncpa [#allocation3], 0
    %19 = vsyncpa [#allocation6], 0
    %20 = vsyncpa [#allocation9], 0
    %21 = vsyncpa [#allocation12], 0
    %22 = vsyncpa [#allocation4], 0
    // Predicated region
    $region2: #{semantic_model_forward.1} parent=1 // pred_check
      _
    $region3: #{semantic_model_forward.1} parent=1 // pred_check_branch
      %24 = sbr.rel (0) target = $region5
    $region4: #{semantic_model_forward.1} parent=1 // pred_region
      _
    $region5: #{semantic_model_forward.1} parent=1 // pred_fallthru
      _
    // Predicated region
    $region6: #{semantic_model_forward.1} parent=1 // pred_check
      _
    $region7: #{semantic_model_forward.1} parent=1 // pred_check_branch
      %26 = sbr.rel (0) target = $region9
    $region8: #{semantic_model_forward.1} parent=1 // pred_region
      %s28 = ssub.s32 896, 896
      %29 = vsyncadd [#allocation3], %s28
      %s30 = sshll.u32 [#allocation2], 4
      %s31 = int_to_ptr.vmem [resolvable:$true] %s30
      %36 = dma.hbm_to_vmem [thread:$0]  %s1, 896, %s31, [#allocation3], 128, 128, 8
    $region9: #{semantic_model_forward.1} parent=1 // pred_fallthru
      _
    // Predicated region
    $region10: #{semantic_model_forward.1} parent=1 // pred_check
      _
    $region11: #{semantic_model_forward.1} parent=1 // pred_check_branch
      %38 = sbr.rel (0) target = $region13
    $region12: #{semantic_model_forward.1} parent=1 // pred_region
      %s40 = ssub.s32 512, 512
      %41 = vsyncadd [#allocation6], %s40
      %s42 = sshll.u32 [#allocation5], 4
      %s43 = int_to_ptr.vmem [resolvable:$true] %s42
      %48 = dma.hbm_to_vmem [thread:$0]  %s2, 512, %s43, [#allocation6], 128, 128, 8
    $region13: #{semantic_model_forward.1} parent=1 // pred_fallthru
      _
    // Predicated region
    $region14: #{semantic_model_forward.1} parent=1 // pred_check
      _
    $region15: #{semantic_model_forward.1} parent=1 // pred_check_branch
      %50 = sbr.rel (0) target = $region17
    $region16: #{semantic_model_forward.1} parent=1 // pred_region
      _
    $region17: #{semantic_model_forward.1} parent=1 // pred_fallthru
      _
    // Predicated region
    $region18: #{semantic_model_forward.1} parent=1 // pred_check
      _
    $region19: #{semantic_model_forward.1} parent=1 // pred_check_branch
      %52 = sbr.rel (0) target = $region21
    $region20: #{semantic_model_forward.1} parent=1 // pred_region
      %s54 = ssub.s32 896, 896
      %55 = vsyncadd [#allocation6], %s54
      %s56 = sshll.u32 [#allocation7], 4
      %s57 = int_to_ptr.vmem [resolvable:$true] %s56
      %62 = dma.hbm_to_vmem [thread:$0]  %s4, 896, %s57, [#allocation6], 128, 128, 8
    $region21: #{semantic_model_forward.1} parent=1 // pred_fallthru
      _
    // Predicated region
    $region22: #{semantic_model_forward.1} parent=1 // pred_check
      _
    $region23: #{semantic_model_forward.1} parent=1 // pred_check_branch
      %64 = sbr.rel (0) target = $region25
    $region24: #{semantic_model_forward.1} parent=1 // pred_region
      %s66 = ssub.s32 512, 512
      %67 = vsyncadd [#allocation9], %s66
      %s68 = sshll.u32 [#allocation8], 4
      %s69 = int_to_ptr.vmem [resolvable:$true] %s68
      %74 = dma.hbm_to_vmem [thread:$0]  %s5, 512, %s69, [#allocation9], 128, 128, 8
    $region25: #{semantic_model_forward.1} parent=1 // pred_fallthru
      _
    // Predicated region
    $region26: #{semantic_model_forward.1} parent=1 // pred_check
      _
    $region27: #{semantic_model_forward.1} parent=1 // pred_check_branch
      %76 = sbr.rel (0) target = $region29
    $region28: #{semantic_model_forward.1} parent=1 // pred_region
      _
    $region29: #{semantic_model_forward.1} parent=1 // pred_fallthru
      _
    // Predicated region
    $region30: #{semantic_model_forward.1} parent=1 // pred_check
      _
    $region31: #{semantic_model_forward.1} parent=1 // pred_check_branch
      %78 = sbr.rel (0) target = $region33
    $region32: #{semantic_model_forward.1} parent=1 // pred_region
      _
    $region33: #{semantic_model_forward.1} parent=1 // pred_fallthru
      _
    // Predicated region
    $region34: #{semantic_model_forward.1} parent=1 // pred_check
      _
    $region35: #{semantic_model_forward.1} parent=1 // pred_check_branch
      %80 = sbr.rel (0) target = $region37
    $region36: #{semantic_model_forward.1} parent=1 // pred_region
      %s82 = ssub.s32 512, 512
      %83 = vsyncadd [#allocation9], %s82
      %s84 = sshll.u32 [#allocation10], 4
      %s85 = int_to_ptr.vmem [resolvable:$true] %s84
      %90 = dma.hbm_to_vmem [thread:$0]  %s8, 512, %s85, [#allocation9], 128, 128, 8
    $region37: #{semantic_model_forward.1} parent=1 // pred_fallthru
      _
    // Predicated region
    $region38: #{semantic_model_forward.1} parent=1 // pred_check
      _
    $region39: #{semantic_model_forward.1} parent=1 // pred_check_branch
      %92 = sbr.rel (0) target = $region41
    $region40: #{semantic_model_forward.1} parent=1 // pred_region
      _
    $region41: #{semantic_model_forward.1} parent=1 // pred_fallthru
      _
    // Predicated region
    $region42: #{semantic_model_forward.1} parent=1 // pred_check
      _
    $region43: #{semantic_model_forward.1} parent=1 // pred_check_branch
      %94 = sbr.rel (0) target = $region45
    $region44: #{semantic_model_forward.1} parent=1 // pred_region
      %s96 = ssub.s32 1024, 1024
      %97 = vsyncadd [#allocation12], %s96
      %s98 = sshll.u32 [#allocation11], 4
      %s99 = int_to_ptr.vmem [resolvable:$true] %s98
      %104 = dma.hbm_to_vmem [thread:$0]  %s10, 1024, %s99, [#allocation12], 128, 128, 8
    $region45: #{semantic_model_forward.1} parent=1 // pred_fallthru
      _
    // Predicated region
    $region46: #{semantic_model_forward.1} parent=1 // pred_check
      _
    $region47: #{semantic_model_forward.1} parent=1 // pred_check_branch
      %106 = sbr.rel (0) target = $region49
    $region48: #{semantic_model_forward.1} parent=1 // pred_region
      %s108 = ssub.s32 512, 512
      %109 = vsyncadd [#allocation12], %s108
      %s110 = sshll.u32 [#allocation13], 4
      %s111 = int_to_ptr.vmem [resolvable:$true] %s110
      %116 = dma.hbm_to_vmem [thread:$0]  %s11, 512, %s111, [#allocation12], 128, 128, 8
    $region49: #{semantic_model_forward.1} parent=1 // pred_fallthru
      _
    // Predicated region
    $region50: #{semantic_model_forward.1} parent=1 // pred_check
      _
    $region51: #{semantic_model_forward.1} parent=1 // pred_check_branch
      %118 = sbr.rel (0) target = $region53
    $region52: #{semantic_model_forward.1} parent=1 // pred_region
      _
    $region53: #{semantic_model_forward.1} parent=1 // pred_fallthru
      _
    // Predicated region
    $region54: #{semantic_model_forward.1} parent=1 // pred_check
      _
    $region55: #{semantic_model_forward.1} parent=1 // pred_check_branch
      %120 = sbr.rel (0) target = $region57
    $region56: #{semantic_model_forward.1} parent=1 // pred_region
      %121 = dma.done [#allocation3], 896
    $region57: #{semantic_model_forward.1} parent=1 // pred_fallthru
      _
    // Predicated region
    $region58: #{semantic_model_forward.1} parent=1 // pred_check
      _
    $region59: #{semantic_model_forward.1} parent=1 // pred_check_branch
      %123 = sbr.rel (0) target = $region61
    $region60: #{semantic_model_forward.1} parent=1 // pred_region
      %124 = dma.done [#allocation6], 512
    $region61: #{semantic_model_forward.1} parent=1 // pred_fallthru
      _
    // Predicated region
    $region62: #{semantic_model_forward.1} parent=1 // pred_check
      _
    $region63: #{semantic_model_forward.1} parent=1 // pred_check_branch
      %126 = sbr.rel (0) target = $region65
    $region64: #{semantic_model_forward.1} parent=1 // pred_region
      %127 = dma.done [#allocation6], 896
    $region65: #{semantic_model_forward.1} parent=1 // pred_fallthru
      _
    // Predicated region
    $region66: #{semantic_model_forward.1} parent=1 // pred_check
      _
    $region67: #{semantic_model_forward.1} parent=1 // pred_check_branch
      %129 = sbr.rel (0) target = $region69
    $region68: #{semantic_model_forward.1} parent=1 // pred_region
      %130 = dma.done [#allocation9], 512
    $region69: #{semantic_model_forward.1} parent=1 // pred_fallthru
      _
    // Predicated region
    $region70: #{semantic_model_forward.1} parent=1 // pred_check
      _
    $region71: #{semantic_model_forward.1} parent=1 // pred_check_branch
      %132 = sbr.rel (0) target = $region73
    $region72: #{semantic_model_forward.1} parent=1 // pred_region
      %133 = dma.done [#allocation9], 512
    $region73: #{semantic_model_forward.1} parent=1 // pred_fallthru
      _
    // Predicated region
    $region74: #{semantic_model_forward.1} parent=1 // pred_check
      _
    $region75: #{semantic_model_forward.1} parent=1 // pred_check_branch
      %135 = sbr.rel (0) target = $region77
    $region76: #{semantic_model_forward.1} parent=1 // pred_region
      %136 = dma.done [#allocation12], 1024
    $region77: #{semantic_model_forward.1} parent=1 // pred_fallthru
      _
    // Predicated region
    $region78: #{semantic_model_forward.1} parent=1 // pred_check
      _
    $region79: #{semantic_model_forward.1} parent=1 // pred_check_branch
      %138 = sbr.rel (0) target = $region81
    $region80: #{semantic_model_forward.1} parent=1 // pred_region
      %139 = dma.done [#allocation12], 512
    $region81: #{semantic_model_forward.1} parent=1 // pred_fallthru
      _
    %v140 = vld [vmem:[%s0] sm:$0xff]
    %v141 = vld [vmem:[%s0 + $0x8] sm:$0xff]
    %v142 = vld [vmem:[#allocation2] sm:$0xff]
    %v143 = vld [vmem:[#allocation2 + $0x8] sm:$0xff]
    %v144 = vld [vmem:[#allocation2 + $0x10] sm:$0xff]
    %v145 = vld [vmem:[#allocation2 + $0x18] sm:$0xff]
    %v146 = vld [vmem:[#allocation2 + $0x20] sm:$0xff]
    %v147 = vld [vmem:[#allocation2 + $0x28] sm:$0xff]
    %v148 = vld [vmem:[#allocation2 + $0x30] sm:$0x3]
    %v149 = vld [vmem:[#allocation5] sm:$0xff]
    %v150 = vld [vmem:[#allocation5 + $0x8] sm:$0xff]
    %v151 = vld [vmem:[#allocation5 + $0x10] sm:$0xff]
    %v152 = vld [vmem:[#allocation5 + $0x18] sm:$0xff]
    %v153 = vld [vmem:[%s3] sm:$0x1]
    %v154 = vld [vmem:[#allocation7] sm:$0xff]
    %v155 = vld [vmem:[#allocation7 + $0x8] sm:$0xff]
    %v156 = vld [vmem:[#allocation7 + $0x10] sm:$0xff]
    %v157 = vld [vmem:[#allocation7 + $0x18] sm:$0xff]
    %v158 = vld [vmem:[#allocation7 + $0x20] sm:$0xff]
    %v159 = vld [vmem:[#allocation7 + $0x28] sm:$0xff]
    %v160 = vld [vmem:[#allocation7 + $0x30] sm:$0x3]
    %v161 = vld [vmem:[#allocation8] sm:$0xff]
    %v162 = vld [vmem:[#allocation8 + $0x8] sm:$0xff]
    %v163 = vld [vmem:[#allocation8 + $0x10] sm:$0xff]
    %v164 = vld [vmem:[#allocation8 + $0x18] sm:$0xff]
    %v165 = vld [vmem:[%s6] sm:$0x1]
    %v167 = vlaneseq
    %v168 = vshrl.u32 %v167, 7
    %v169 = vsub.s32 0, %v168
    %v170 = vrot.slane %v153, %v169
    %vm172 = vcmask 408576
    %v174 = vsel %vm172, %v140, 0
    %v177 = vsel %vm172, %v141, 0
    %vm179 = vcmask 1041408
    %v181 = vsel %vm179, %v148, 0
    %183 = vmatprep.subr.mxu0 0.0
    %184 = vmatpush1.msra.mxu0 %v142
    %185 = vmatprep.subr.mxu0 0.0
    %186 = vmatpush1.msra.mxu0 %v143
    %187 = vmatprep.subr.mxu0 0.0
    %188 = vmatpush1.msra.mxu0 %v144
    %189 = vmatprep.subr.mxu0 0.0
    %190 = vmatpush1.msra.mxu0 %v145
    %191 = vmatprep.subr.mxu0 0.0
    %192 = vmatpush1.msra.mxu0 %v146
    %193 = vmatprep.subr.mxu0 0.0
    %194 = vmatpush1.msra.mxu0 %v147
    %195 = vmatprep.subr.mxu0 0.0
    %196 = vmatpush1.msra.mxu0 %v181
    %197 = vmatprep.subr.mxu0 0.0
    %198 = vmatpush1.msra.mxu0 0.0
    %199 = vmatprep.subr.mxu0 0.0
    %200 = vmatpush1.msra.mxu0 0.0
    %201 = vmatprep.subr.mxu0 0.0
    %202 = vmatpush1.msra.mxu0 0.0
    %203 = vmatprep.subr.mxu0 0.0
    %204 = vmatpush1.msra.mxu0 0.0
    %205 = vmatprep.subr.mxu0 0.0
    %206 = vmatpush1.msra.mxu0 0.0
    %207 = vmatprep.subr.mxu0 0.0
    %208 = vmatpush1.msra.mxu0 0.0
    %209 = vmatprep.subr.mxu0 0.0
    %210 = vmatpush1.msra.mxu0 0.0
    %211 = vmatprep.subr.mxu0 0.0
    %212 = vmatpush1.msra.mxu0 0.0
    %213 = vmatprep.subr.mxu0 0.0
    %214 = vmatpush1.msra.mxu0 0.0
    %215 = vmatprep.subr.mxu0 0.0
    %216 = vmatpush1.msra.mxu0 0.0
    %217 = vmatprep.subr.mxu0 0.0
    %218 = vmatpush1.msra.mxu0 0.0
    %219 = vmatprep.subr.mxu0 0.0
    %220 = vmatpush1.msra.mxu0 0.0
    %221 = vmatprep.subr.mxu0 0.0
    %222 = vmatpush1.msra.mxu0 0.0
    %223 = vmatprep.subr.mxu0 0.0
    %224 = vmatpush1.msra.mxu0 0.0
    %225 = vmatprep.subr.mxu0 0.0
    %226 = vmatpush1.msra.mxu0 0.0
    %227 = vmatprep.subr.mxu0 0.0
    %228 = vmatpush1.msra.mxu0 0.0
    %229 = vmatprep.subr.mxu0 0.0
    %230 = vmatpush1.msra.mxu0 0.0
    %231 = vmatprep.subr.mxu0 0.0
    %232 = vmatpush1.msra.mxu0 0.0
    %233 = vmatprep.subr.mxu0 0.0
    %234 = vmatpush1.msra.mxu0 0.0
    %235 = vmatprep.subr.mxu0 0.0
    %236 = vmatpush1.msra.mxu0 0.0
    %237 = vmatprep.subr.mxu0 0.0
    %238 = vmatpush1.msra.mxu0 0.0
    %239 = vmatprep.subr.mxu0 0.0
    %240 = vmatpush1.msra.mxu0 0.0
    %241 = vmatprep.subr.mxu0 0.0
    %242 = vmatpush1.msra.mxu0 0.0
    %243 = vmatprep.subr.mxu0 0.0
    %244 = vmatpush1.msra.mxu0 0.0
    %245 = vmatprep.subr.mxu0 0.0
    %246 = vmatpush1.msra.mxu0 0.0
    %247 = vmatprep.mubr.f32.mxu0 0.0
    %248 = vmatmul.mubr.f32.gmra.mrb[0].mxu0 %v174
    %v249 = vpop.f32.mrb[0].mxu0
    %v250 = vadd.f32 %v170, %v249
    %v251 = vpop.f32.mrb[0].mxu0
    %252 = vmatprep.mubr.f32.mxu0 0.0
    %253 = vmatmul.mubr.f32.gmra.mrb[0].mxu0 %v177
    %v254 = vpop.f32.mrb[0].mxu0
    %v255 = vadd.f32 %v170, %v254
    %v256 = vpop.f32.mrb[0].mxu0
    %257 = vdwg.mxu0
    %vm258 = vcmask 261120
    %v260 = vsel %vm258, 0.0, 0
    %262 = vmatprep.subr.mxu0 0.0
    %263 = vmatpush1.msra.mxu0 %v149
    %264 = vmatprep.subr.mxu0 0.0
    %265 = vmatpush1.msra.mxu0 %v150
    %266 = vmatprep.subr.mxu0 0.0
    %267 = vmatpush1.msra.mxu0 %v151
    %268 = vmatprep.subr.mxu0 0.0
    %269 = vmatpush1.msra.mxu0 %v152
    %270 = vmatprep.subr.mxu0 0.0
    %271 = vmatpush1.msra.mxu0 0.0
    %272 = vmatprep.subr.mxu0 0.0
    %273 = vmatpush1.msra.mxu0 0.0
    %274 = vmatprep.subr.mxu0 0.0
    %275 = vmatpush1.msra.mxu0 0.0
    %276 = vmatprep.subr.mxu0 0.0
    %277 = vmatpush1.msra.mxu0 0.0
    %278 = vmatprep.subr.mxu0 0.0
    %279 = vmatpush1.msra.mxu0 0.0
    %280 = vmatprep.subr.mxu0 0.0
    %281 = vmatpush1.msra.mxu0 0.0
    %282 = vmatprep.subr.mxu0 0.0
    %283 = vmatpush1.msra.mxu0 0.0
    %284 = vmatprep.subr.mxu0 0.0
    %285 = vmatpush1.msra.mxu0 0.0
    %286 = vmatprep.subr.mxu0 0.0
    %287 = vmatpush1.msra.mxu0 0.0
    %288 = vmatprep.subr.mxu0 0.0
    %289 = vmatpush1.msra.mxu0 0.0
    %290 = vmatprep.subr.mxu0 0.0
    %291 = vmatpush1.msra.mxu0 0.0
    %292 = vmatprep.subr.mxu0 0.0
    %293 = vmatpush1.msra.mxu0 0.0
    %294 = vmatprep.subr.mxu0 0.0
    %295 = vmatpush1.msra.mxu0 0.0
    %296 = vmatprep.subr.mxu0 0.0
    %297 = vmatpush1.msra.mxu0 0.0
    %298 = vmatprep.subr.mxu0 0.0
    %299 = vmatpush1.msra.mxu0 0.0
    %300 = vmatprep.subr.mxu0 0.0
    %301 = vmatpush1.msra.mxu0 0.0
    %302 = vmatprep.subr.mxu0 0.0
    %303 = vmatpush1.msra.mxu0 0.0
    %304 = vmatprep.subr.mxu0 0.0
    %305 = vmatpush1.msra.mxu0 0.0
    %306 = vmatprep.subr.mxu0 0.0
    %307 = vmatpush1.msra.mxu0 0.0
    %308 = vmatprep.subr.mxu0 0.0
    %309 = vmatpush1.msra.mxu0 0.0
    %310 = vmatprep.subr.mxu0 0.0
    %311 = vmatpush1.msra.mxu0 0.0
    %312 = vmatprep.subr.mxu0 0.0
    %313 = vmatpush1.msra.mxu0 0.0
    %314 = vmatprep.subr.mxu0 0.0
    %315 = vmatpush1.msra.mxu0 0.0
    %316 = vmatprep.subr.mxu0 0.0
    %317 = vmatpush1.msra.mxu0 0.0
    %318 = vmatprep.subr.mxu0 0.0
    %319 = vmatpush1.msra.mxu0 0.0
    %320 = vmatprep.subr.mxu0 0.0
    %321 = vmatpush1.msra.mxu0 0.0
    %322 = vmatprep.subr.mxu0 0.0
    %323 = vmatpush1.msra.mxu0 0.0
    %324 = vmatprep.subr.mxu0 0.0
    %325 = vmatpush1.msra.mxu0 0.0
    %326 = vmatprep.mubr.f32.mxu0 0.0
    %327 = vmatmul.mubr.f32.gmra.mrb[0].mxu0 %v260
    %v328 = vpop.f32.mrb[0].mxu0
    %v329 = vadd.f32 0.0, %v328
    %v330 = vpop.f32.mrb[0].mxu0
    %331 = vdwg.mxu0
    %v332 = vadd.f32 %v250, %v329
    %v333 = vxor.u32 %v332, 2147483648
    %v334 = vmul.f32 %v333, 1.442695
    %v335 = vpow.pop %v334
    %v336 = vadd.f32 %v335, 1.0
    %v337 = vrcp.pop %v336
    %v338 = vmul.f32 1.0, %v337
    %v339 = vtanh.pop %v332
    %v340 = vmul.f32 %v338, 0.0
    %342 = vrot.lane.b32.xlu0 %v339, 64
    %v343 = vpop.permute.xlu0 %342
    %v345 = vmul.f32 %v338, %v343
    %347 = vrot.lane.b32.xlu0 %v345, 32
    %v348 = vpop.permute.xlu0 %347
    %v350 = vadd.f32 %v340, %v348
    %v351 = vtanh.pop %v350
    %353 = vrot.lane.b32.xlu0 %v351, 64
    %v354 = vpop.permute.xlu0 %353
    %v356 = vmul.f32 %v338, %v354
    %358 = vrot.lane.b32.xlu0 %v356, 32
    %v359 = vpop.permute.xlu0 %358
    %v360 = vsel %vm258, %v359, 0
    %362 = vmatprep.subr.mxu0 0.0
    %363 = vmatpush1.msra.mxu0 %v149
    %364 = vmatprep.subr.mxu0 0.0
    %365 = vmatpush1.msra.mxu0 %v150
    %366 = vmatprep.subr.mxu0 0.0
    %367 = vmatpush1.msra.mxu0 %v151
    %368 = vmatprep.subr.mxu0 0.0
    %369 = vmatpush1.msra.mxu0 %v152
    %370 = vmatprep.subr.mxu0 0.0
    %371 = vmatpush1.msra.mxu0 0.0
    %372 = vmatprep.subr.mxu0 0.0
    %373 = vmatpush1.msra.mxu0 0.0
    %374 = vmatprep.subr.mxu0 0.0
    %375 = vmatpush1.msra.mxu0 0.0
    %376 = vmatprep.subr.mxu0 0.0
    %377 = vmatpush1.msra.mxu0 0.0
    %378 = vmatprep.subr.mxu0 0.0
    %379 = vmatpush1.msra.mxu0 0.0
    %380 = vmatprep.subr.mxu0 0.0
    %381 = vmatpush1.msra.mxu0 0.0
    %382 = vmatprep.subr.mxu0 0.0
    %383 = vmatpush1.msra.mxu0 0.0
    %384 = vmatprep.subr.mxu0 0.0
    %385 = vmatpush1.msra.mxu0 0.0
    %386 = vmatprep.subr.mxu0 0.0
    %387 = vmatpush1.msra.mxu0 0.0
    %388 = vmatprep.subr.mxu0 0.0
    %389 = vmatpush1.msra.mxu0 0.0
    %390 = vmatprep.subr.mxu0 0.0
    %391 = vmatpush1.msra.mxu0 0.0
    %392 = vmatprep.subr.mxu0 0.0
    %393 = vmatpush1.msra.mxu0 0.0
    %394 = vmatprep.subr.mxu0 0.0
    %395 = vmatpush1.msra.mxu0 0.0
    %396 = vmatprep.subr.mxu0 0.0
    %397 = vmatpush1.msra.mxu0 0.0
    %398 = vmatprep.subr.mxu0 0.0
    %399 = vmatpush1.msra.mxu0 0.0
    %400 = vmatprep.subr.mxu0 0.0
    %401 = vmatpush1.msra.mxu0 0.0
    %402 = vmatprep.subr.mxu0 0.0
    %403 = vmatpush1.msra.mxu0 0.0
    %404 = vmatprep.subr.mxu0 0.0
    %405 = vmatpush1.msra.mxu0 0.0
    %406 = vmatprep.subr.mxu0 0.0
    %407 = vmatpush1.msra.mxu0 0.0
    %408 = vmatprep.subr.mxu0 0.0
    %409 = vmatpush1.msra.mxu0 0.0
    %410 = vmatprep.subr.mxu0 0.0
    %411 = vmatpush1.msra.mxu0 0.0
    %412 = vmatprep.subr.mxu0 0.0
    %413 = vmatpush1.msra.mxu0 0.0
    %414 = vmatprep.subr.mxu0 0.0
    %415 = vmatpush1.msra.mxu0 0.0
    %416 = vmatprep.subr.mxu0 0.0
    %417 = vmatpush1.msra.mxu0 0.0
    %418 = vmatprep.subr.mxu0 0.0
    %419 = vmatpush1.msra.mxu0 0.0
    %420 = vmatprep.subr.mxu0 0.0
    %421 = vmatpush1.msra.mxu0 0.0
    %422 = vmatprep.subr.mxu0 0.0
    %423 = vmatpush1.msra.mxu0 0.0
    %424 = vmatprep.subr.mxu0 0.0
    %425 = vmatpush1.msra.mxu0 0.0
    %426 = vmatprep.mubr.f32.mxu0 0.0
    %427 = vmatmul.mubr.f32.gmra.mrb[0].mxu0 %v360
    %v428 = vpop.f32.mrb[0].mxu0
    %v429 = vadd.f32 0.0, %v428
    %v430 = vpop.f32.mrb[0].mxu0
    %431 = vdwg.mxu0
    %v433 = vrot.slane %v429, 6
    %v435 = vadd.f32 %v250, %v433
    %v436 = vxor.u32 %v435, 2147483648
    %v437 = vmul.f32 %v436, 1.442695
    %v438 = vpow.pop %v437
    %v439 = vadd.f32 %v438, 1.0
    %v440 = vrcp.pop %v439
    %v441 = vmul.f32 1.0, %v440
    %v442 = vtanh.pop %v435
    %v444 = vrot.slane %v350, 6
    %v446 = vmul.f32 %v441, %v444
    %448 = vrot.lane.b32.xlu0 %v442, 64
    %v449 = vpop.permute.xlu0 %448
    %v451 = vmul.f32 %v441, %v449
    %453 = vrot.lane.b32.xlu0 %v451, 32
    %v454 = vpop.permute.xlu0 %453
    %v456 = vadd.f32 %v446, %v454
    %v457 = vtanh.pop %v456
    %459 = vrot.lane.b32.xlu0 %v457, 64
    %v460 = vpop.permute.xlu0 %459
    %v462 = vmul.f32 %v441, %v460
    %v464 = vrot.slane %v462, 2
    %465 = vrot.lane.b32.xlu0 %v464, 32
    %v466 = vpop.permute.xlu0 %465
    %v467 = vsel %vm258, %v466, 0
    %469 = vmatprep.subr.mxu0 0.0
    %470 = vmatpush1.msra.mxu0 %v149
    %471 = vmatprep.subr.mxu0 0.0
    %472 = vmatpush1.msra.mxu0 %v150
    %473 = vmatprep.subr.mxu0 0.0
    %474 = vmatpush1.msra.mxu0 %v151
    %475 = vmatprep.subr.mxu0 0.0
    %476 = vmatpush1.msra.mxu0 %v152
    %477 = vmatprep.subr.mxu0 0.0
    %478 = vmatpush1.msra.mxu0 0.0
    %479 = vmatprep.subr.mxu0 0.0
    %480 = vmatpush1.msra.mxu0 0.0
    %481 = vmatprep.subr.mxu0 0.0
    %482 = vmatpush1.msra.mxu0 0.0
    %483 = vmatprep.subr.mxu0 0.0
    %484 = vmatpush1.msra.mxu0 0.0
    %485 = vmatprep.subr.mxu0 0.0
    %486 = vmatpush1.msra.mxu0 0.0
    %487 = vmatprep.subr.mxu0 0.0
    %488 = vmatpush1.msra.mxu0 0.0
    %489 = vmatprep.subr.mxu0 0.0
    %490 = vmatpush1.msra.mxu0 0.0
    %491 = vmatprep.subr.mxu0 0.0
    %492 = vmatpush1.msra.mxu0 0.0
    %493 = vmatprep.subr.mxu0 0.0
    %494 = vmatpush1.msra.mxu0 0.0
    %495 = vmatprep.subr.mxu0 0.0
    %496 = vmatpush1.msra.mxu0 0.0
    %497 = vmatprep.subr.mxu0 0.0
    %498 = vmatpush1.msra.mxu0 0.0
    %499 = vmatprep.subr.mxu0 0.0
    %500 = vmatpush1.msra.mxu0 0.0
    %501 = vmatprep.subr.mxu0 0.0
    %502 = vmatpush1.msra.mxu0 0.0
    %503 = vmatprep.subr.mxu0 0.0
    %504 = vmatpush1.msra.mxu0 0.0
    %505 = vmatprep.subr.mxu0 0.0
    %506 = vmatpush1.msra.mxu0 0.0
    %507 = vmatprep.subr.mxu0 0.0
    %508 = vmatpush1.msra.mxu0 0.0
    %509 = vmatprep.subr.mxu0 0.0
    %510 = vmatpush1.msra.mxu0 0.0
    %511 = vmatprep.subr.mxu0 0.0
    %512 = vmatpush1.msra.mxu0 0.0
    %513 = vmatprep.subr.mxu0 0.0
    %514 = vmatpush1.msra.mxu0 0.0
    %515 = vmatprep.subr.mxu0 0.0
    %516 = vmatpush1.msra.mxu0 0.0
    %517 = vmatprep.subr.mxu0 0.0
    %518 = vmatpush1.msra.mxu0 0.0
    %519 = vmatprep.subr.mxu0 0.0
    %520 = vmatpush1.msra.mxu0 0.0
    %521 = vmatprep.subr.mxu0 0.0
    %522 = vmatpush1.msra.mxu0 0.0
    %523 = vmatprep.subr.mxu0 0.0
    %524 = vmatpush1.msra.mxu0 0.0
    %525 = vmatprep.subr.mxu0 0.0
    %526 = vmatpush1.msra.mxu0 0.0
    %527 = vmatprep.subr.mxu0 0.0
    %528 = vmatpush1.msra.mxu0 0.0
    %529 = vmatprep.subr.mxu0 0.0
    %530 = vmatpush1.msra.mxu0 0.0
    %531 = vmatprep.subr.mxu0 0.0
    %532 = vmatpush1.msra.mxu0 0.0
    %533 = vmatprep.mubr.f32.mxu0 0.0
    %534 = vmatmul.mubr.f32.gmra.mrb[0].mxu0 %v467
    %v535 = vpop.f32.mrb[0].mxu0
    %v536 = vadd.f32 0.0, %v535
    %v537 = vpop.f32.mrb[0].mxu0
    %538 = vdwg.mxu0
    %v540 = vrot.slane %v536, 4
    %v542 = vadd.f32 %v250, %v540
    %v543 = vxor.u32 %v542, 2147483648
    %v544 = vmul.f32 %v543, 1.442695
    %v545 = vpow.pop %v544
    %v546 = vadd.f32 %v545, 1.0
    %v547 = vrcp.pop %v546
    %v548 = vmul.f32 1.0, %v547
    %v549 = vtanh.pop %v542
    %v551 = vrot.slane %v456, 6
    %v553 = vmul.f32 %v548, %v551
    %555 = vrot.lane.b32.xlu0 %v549, 64
    %v556 = vpop.permute.xlu0 %555
    %v558 = vmul.f32 %v548, %v556
    %560 = vrot.lane.b32.xlu0 %v558, 32
    %v561 = vpop.permute.xlu0 %560
    %v563 = vadd.f32 %v553, %v561
    %v564 = vtanh.pop %v563
    %566 = vrot.lane.b32.xlu0 %v564, 64
    %v567 = vpop.permute.xlu0 %566
    %v569 = vmul.f32 %v548, %v567
    %v571 = vrot.slane %v569, 4
    %572 = vrot.lane.b32.xlu0 %v571, 32
    %v573 = vpop.permute.xlu0 %572
    %v574 = vsel %vm258, %v573, 0
    %576 = vmatprep.subr.mxu0 0.0
    %577 = vmatpush1.msra.mxu0 %v149
    %578 = vmatprep.subr.mxu0 0.0
    %579 = vmatpush1.msra.mxu0 %v150
    %580 = vmatprep.subr.mxu0 0.0
    %581 = vmatpush1.msra.mxu0 %v151
    %582 = vmatprep.subr.mxu0 0.0
    %583 = vmatpush1.msra.mxu0 %v152
    %584 = vmatprep.subr.mxu0 0.0
    %585 = vmatpush1.msra.mxu0 0.0
    %586 = vmatprep.subr.mxu0 0.0
    %587 = vmatpush1.msra.mxu0 0.0
    %588 = vmatprep.subr.mxu0 0.0
    %589 = vmatpush1.msra.mxu0 0.0
    %590 = vmatprep.subr.mxu0 0.0
    %591 = vmatpush1.msra.mxu0 0.0
    %592 = vmatprep.subr.mxu0 0.0
    %593 = vmatpush1.msra.mxu0 0.0
    %594 = vmatprep.subr.mxu0 0.0
    %595 = vmatpush1.msra.mxu0 0.0
    %596 = vmatprep.subr.mxu0 0.0
    %597 = vmatpush1.msra.mxu0 0.0
    %598 = vmatprep.subr.mxu0 0.0
    %599 = vmatpush1.msra.mxu0 0.0
    %600 = vmatprep.subr.mxu0 0.0
    %601 = vmatpush1.msra.mxu0 0.0
    %602 = vmatprep.subr.mxu0 0.0
    %603 = vmatpush1.msra.mxu0 0.0
    %604 = vmatprep.subr.mxu0 0.0
    %605 = vmatpush1.msra.mxu0 0.0
    %606 = vmatprep.subr.mxu0 0.0
    %607 = vmatpush1.msra.mxu0 0.0
    %608 = vmatprep.subr.mxu0 0.0
    %609 = vmatpush1.msra.mxu0 0.0
    %610 = vmatprep.subr.mxu0 0.0
    %611 = vmatpush1.msra.mxu0 0.0
    %612 = vmatprep.subr.mxu0 0.0
    %613 = vmatpush1.msra.mxu0 0.0
    %614 = vmatprep.subr.mxu0 0.0
    %615 = vmatpush1.msra.mxu0 0.0
    %616 = vmatprep.subr.mxu0 0.0
    %617 = vmatpush1.msra.mxu0 0.0
    %618 = vmatprep.subr.mxu0 0.0
    %619 = vmatpush1.msra.mxu0 0.0
    %620 = vmatprep.subr.mxu0 0.0
    %621 = vmatpush1.msra.mxu0 0.0
    %622 = vmatprep.subr.mxu0 0.0
    %623 = vmatpush1.msra.mxu0 0.0
    %624 = vmatprep.subr.mxu0 0.0
    %625 = vmatpush1.msra.mxu0 0.0
    %626 = vmatprep.subr.mxu0 0.0
    %627 = vmatpush1.msra.mxu0 0.0
    %628 = vmatprep.subr.mxu0 0.0
    %629 = vmatpush1.msra.mxu0 0.0
    %630 = vmatprep.subr.mxu0 0.0
    %631 = vmatpush1.msra.mxu0 0.0
    %632 = vmatprep.subr.mxu0 0.0
    %633 = vmatpush1.msra.mxu0 0.0
    %634 = vmatprep.subr.mxu0 0.0
    %635 = vmatpush1.msra.mxu0 0.0
    %636 = vmatprep.subr.mxu0 0.0
    %637 = vmatpush1.msra.mxu0 0.0
    %638 = vmatprep.subr.mxu0 0.0
    %639 = vmatpush1.msra.mxu0 0.0
    %640 = vmatprep.mubr.f32.mxu0 0.0
    %641 = vmatmul.mubr.f32.gmra.mrb[0].mxu0 %v574
    %v642 = vpop.f32.mrb[0].mxu0
    %v643 = vadd.f32 0.0, %v642
    %v644 = vpop.f32.mrb[0].mxu0
    %645 = vdwg.mxu0
    %v647 = vrot.slane %v643, 2
    %v649 = vadd.f32 %v250, %v647
    %v650 = vxor.u32 %v649, 2147483648
    %v651 = vmul.f32 %v650, 1.442695
    %v652 = vpow.pop %v651
    %v653 = vadd.f32 %v652, 1.0
    %v654 = vrcp.pop %v653
    %v655 = vmul.f32 1.0, %v654
    %v656 = vtanh.pop %v649
    %v658 = vrot.slane %v563, 6
    %v660 = vmul.f32 %v655, %v658
    %662 = vrot.lane.b32.xlu0 %v656, 64
    %v663 = vpop.permute.xlu0 %662
    %v665 = vmul.f32 %v655, %v663
    %667 = vrot.lane.b32.xlu0 %v665, 32
    %v668 = vpop.permute.xlu0 %667
    %v670 = vadd.f32 %v660, %v668
    %v671 = vtanh.pop %v670
    %673 = vrot.lane.b32.xlu0 %v671, 64
    %v674 = vpop.permute.xlu0 %673
    %v676 = vmul.f32 %v655, %v674
    %v678 = vrot.slane %v676, 6
    %679 = vrot.lane.b32.xlu0 %v678, 32
    %v680 = vpop.permute.xlu0 %679
    %v681 = vsel %vm258, %v680, 0
    %683 = vmatprep.subr.mxu0 0.0
    %684 = vmatpush1.msra.mxu0 %v149
    %685 = vmatprep.subr.mxu0 0.0
    %686 = vmatpush1.msra.mxu0 %v150
    %687 = vmatprep.subr.mxu0 0.0
    %688 = vmatpush1.msra.mxu0 %v151
    %689 = vmatprep.subr.mxu0 0.0
    %690 = vmatpush1.msra.mxu0 %v152
    %691 = vmatprep.subr.mxu0 0.0
    %692 = vmatpush1.msra.mxu0 0.0
    %693 = vmatprep.subr.mxu0 0.0
    %694 = vmatpush1.msra.mxu0 0.0
    %695 = vmatprep.subr.mxu0 0.0
    %696 = vmatpush1.msra.mxu0 0.0
    %697 = vmatprep.subr.mxu0 0.0
    %698 = vmatpush1.msra.mxu0 0.0
    %699 = vmatprep.subr.mxu0 0.0
    %700 = vmatpush1.msra.mxu0 0.0
    %701 = vmatprep.subr.mxu0 0.0
    %702 = vmatpush1.msra.mxu0 0.0
    %703 = vmatprep.subr.mxu0 0.0
    %704 = vmatpush1.msra.mxu0 0.0
    %705 = vmatprep.subr.mxu0 0.0
    %706 = vmatpush1.msra.mxu0 0.0
    %707 = vmatprep.subr.mxu0 0.0
    %708 = vmatpush1.msra.mxu0 0.0
    %709 = vmatprep.subr.mxu0 0.0
    %710 = vmatpush1.msra.mxu0 0.0
    %711 = vmatprep.subr.mxu0 0.0
    %712 = vmatpush1.msra.mxu0 0.0
    %713 = vmatprep.subr.mxu0 0.0
    %714 = vmatpush1.msra.mxu0 0.0
    %715 = vmatprep.subr.mxu0 0.0
    %716 = vmatpush1.msra.mxu0 0.0
    %717 = vmatprep.subr.mxu0 0.0
    %718 = vmatpush1.msra.mxu0 0.0
    %719 = vmatprep.subr.mxu0 0.0
    %720 = vmatpush1.msra.mxu0 0.0
    %721 = vmatprep.subr.mxu0 0.0
    %722 = vmatpush1.msra.mxu0 0.0
    %723 = vmatprep.subr.mxu0 0.0
    %724 = vmatpush1.msra.mxu0 0.0
    %725 = vmatprep.subr.mxu0 0.0
    %726 = vmatpush1.msra.mxu0 0.0
    %727 = vmatprep.subr.mxu0 0.0
    %728 = vmatpush1.msra.mxu0 0.0
    %729 = vmatprep.subr.mxu0 0.0
    %730 = vmatpush1.msra.mxu0 0.0
    %731 = vmatprep.subr.mxu0 0.0
    %732 = vmatpush1.msra.mxu0 0.0
    %733 = vmatprep.subr.mxu0 0.0
    %734 = vmatpush1.msra.mxu0 0.0
    %735 = vmatprep.subr.mxu0 0.0
    %736 = vmatpush1.msra.mxu0 0.0
    %737 = vmatprep.subr.mxu0 0.0
    %738 = vmatpush1.msra.mxu0 0.0
    %739 = vmatprep.subr.mxu0 0.0
    %740 = vmatpush1.msra.mxu0 0.0
    %741 = vmatprep.subr.mxu0 0.0
    %742 = vmatpush1.msra.mxu0 0.0
    %743 = vmatprep.subr.mxu0 0.0
    %744 = vmatpush1.msra.mxu0 0.0
    %745 = vmatprep.subr.mxu0 0.0
    %746 = vmatpush1.msra.mxu0 0.0
    %747 = vmatprep.mubr.f32.mxu0 0.0
    %748 = vmatmul.mubr.f32.gmra.mrb[0].mxu0 %v681
    %v749 = vpop.f32.mrb[0].mxu0
    %v750 = vadd.f32 0.0, %v749
    %v751 = vpop.f32.mrb[0].mxu0
    %752 = vdwg.mxu0
    %v753 = vadd.f32 %v255, %v750
    %v754 = vxor.u32 %v753, 2147483648
    %v755 = vmul.f32 %v754, 1.442695
    %v756 = vpow.pop %v755
    %v757 = vadd.f32 %v756, 1.0
    %v758 = vrcp.pop %v757
    %v759 = vmul.f32 1.0, %v758
    %v760 = vtanh.pop %v753
    %v762 = vrot.slane %v670, 6
    %v764 = vmul.f32 %v759, %v762
    %766 = vrot.lane.b32.xlu0 %v760, 64
    %v767 = vpop.permute.xlu0 %766
    %v769 = vmul.f32 %v759, %v767
    %771 = vrot.lane.b32.xlu0 %v769, 32
    %v772 = vpop.permute.xlu0 %771
    %v774 = vadd.f32 %v764, %v772
    %v775 = vtanh.pop %v774
    %777 = vrot.lane.b32.xlu0 %v775, 64
    %v778 = vpop.permute.xlu0 %777
    %v780 = vmul.f32 %v759, %v778
    %782 = vrot.lane.b32.xlu0 %v780, 32
    %v783 = vpop.permute.xlu0 %782
    %v784 = vsel %vm258, %v783, 0
    %786 = vmatprep.subr.mxu0 0.0
    %787 = vmatpush1.msra.mxu0 %v149
    %788 = vmatprep.subr.mxu0 0.0
    %789 = vmatpush1.msra.mxu0 %v150
    %790 = vmatprep.subr.mxu0 0.0
    %791 = vmatpush1.msra.mxu0 %v151
    %792 = vmatprep.subr.mxu0 0.0
    %793 = vmatpush1.msra.mxu0 %v152
    %794 = vmatprep.subr.mxu0 0.0
    %795 = vmatpush1.msra.mxu0 0.0
    %796 = vmatprep.subr.mxu0 0.0
    %797 = vmatpush1.msra.mxu0 0.0
    %798 = vmatprep.subr.mxu0 0.0
    %799 = vmatpush1.msra.mxu0 0.0
    %800 = vmatprep.subr.mxu0 0.0
    %801 = vmatpush1.msra.mxu0 0.0
    %802 = vmatprep.subr.mxu0 0.0
    %803 = vmatpush1.msra.mxu0 0.0
    %804 = vmatprep.subr.mxu0 0.0
    %805 = vmatpush1.msra.mxu0 0.0
    %806 = vmatprep.subr.mxu0 0.0
    %807 = vmatpush1.msra.mxu0 0.0
    %808 = vmatprep.subr.mxu0 0.0
    %809 = vmatpush1.msra.mxu0 0.0
    %810 = vmatprep.subr.mxu0 0.0
    %811 = vmatpush1.msra.mxu0 0.0
    %812 = vmatprep.subr.mxu0 0.0
    %813 = vmatpush1.msra.mxu0 0.0
    %814 = vmatprep.subr.mxu0 0.0
    %815 = vmatpush1.msra.mxu0 0.0
    %816 = vmatprep.subr.mxu0 0.0
    %817 = vmatpush1.msra.mxu0 0.0
    %818 = vmatprep.subr.mxu0 0.0
    %819 = vmatpush1.msra.mxu0 0.0
    %820 = vmatprep.subr.mxu0 0.0
    %821 = vmatpush1.msra.mxu0 0.0
    %822 = vmatprep.subr.mxu0 0.0
    %823 = vmatpush1.msra.mxu0 0.0
    %824 = vmatprep.subr.mxu0 0.0
    %825 = vmatpush1.msra.mxu0 0.0
    %826 = vmatprep.subr.mxu0 0.0
    %827 = vmatpush1.msra.mxu0 0.0
    %828 = vmatprep.subr.mxu0 0.0
    %829 = vmatpush1.msra.mxu0 0.0
    %830 = vmatprep.subr.mxu0 0.0
    %831 = vmatpush1.msra.mxu0 0.0
    %832 = vmatprep.subr.mxu0 0.0
    %833 = vmatpush1.msra.mxu0 0.0
    %834 = vmatprep.subr.mxu0 0.0
    %835 = vmatpush1.msra.mxu0 0.0
    %836 = vmatprep.subr.mxu0 0.0
    %837 = vmatpush1.msra.mxu0 0.0
    %838 = vmatprep.subr.mxu0 0.0
    %839 = vmatpush1.msra.mxu0 0.0
    %840 = vmatprep.subr.mxu0 0.0
    %841 = vmatpush1.msra.mxu0 0.0
    %842 = vmatprep.subr.mxu0 0.0
    %843 = vmatpush1.msra.mxu0 0.0
    %844 = vmatprep.subr.mxu0 0.0
    %845 = vmatpush1.msra.mxu0 0.0
    %846 = vmatprep.subr.mxu0 0.0
    %847 = vmatpush1.msra.mxu0 0.0
    %848 = vmatprep.subr.mxu0 0.0
    %849 = vmatpush1.msra.mxu0 0.0
    %850 = vmatprep.mubr.f32.mxu0 0.0
    %851 = vmatmul.mubr.f32.gmra.mrb[0].mxu0 %v784
    %v852 = vpop.f32.mrb[0].mxu0
    %v853 = vadd.f32 0.0, %v852
    %v854 = vpop.f32.mrb[0].mxu0
    %855 = vdwg.mxu0
    %v857 = vrot.slane %v853, 6
    %v859 = vadd.f32 %v255, %v857
    %v860 = vxor.u32 %v859, 2147483648
    %v861 = vmul.f32 %v860, 1.442695
    %v862 = vpow.pop %v861
    %v863 = vadd.f32 %v862, 1.0
    %v864 = vrcp.pop %v863
    %v865 = vmul.f32 1.0, %v864
    %v866 = vtanh.pop %v859
    %v868 = vrot.slane %v774, 6
    %v870 = vmul.f32 %v865, %v868
    %872 = vrot.lane.b32.xlu0 %v866, 64
    %v873 = vpop.permute.xlu0 %872
    %v875 = vmul.f32 %v865, %v873
    %877 = vrot.lane.b32.xlu0 %v875, 32
    %v878 = vpop.permute.xlu0 %877
    %v880 = vadd.f32 %v870, %v878
    %v881 = vtanh.pop %v880
    %883 = vrot.lane.b32.xlu0 %v881, 64
    %v884 = vpop.permute.xlu0 %883
    %v886 = vmul.f32 %v865, %v884
    %v888 = vrot.slane %v886, 2
    %889 = vrot.lane.b32.xlu0 %v888, 32
    %v890 = vpop.permute.xlu0 %889
    %v891 = vsel %vm258, %v890, 0
    %893 = vmatprep.subr.mxu0 0.0
    %894 = vmatpush1.msra.mxu0 %v149
    %895 = vmatprep.subr.mxu0 0.0
    %896 = vmatpush1.msra.mxu0 %v150
    %897 = vmatprep.subr.mxu0 0.0
    %898 = vmatpush1.msra.mxu0 %v151
    %899 = vmatprep.subr.mxu0 0.0
    %900 = vmatpush1.msra.mxu0 %v152
    %901 = vmatprep.subr.mxu0 0.0
    %902 = vmatpush1.msra.mxu0 0.0
    %903 = vmatprep.subr.mxu0 0.0
    %904 = vmatpush1.msra.mxu0 0.0
    %905 = vmatprep.subr.mxu0 0.0
    %906 = vmatpush1.msra.mxu0 0.0
    %907 = vmatprep.subr.mxu0 0.0
    %908 = vmatpush1.msra.mxu0 0.0
    %909 = vmatprep.subr.mxu0 0.0
    %910 = vmatpush1.msra.mxu0 0.0
    %911 = vmatprep.subr.mxu0 0.0
    %912 = vmatpush1.msra.mxu0 0.0
    %913 = vmatprep.subr.mxu0 0.0
    %914 = vmatpush1.msra.mxu0 0.0
    %915 = vmatprep.subr.mxu0 0.0
    %916 = vmatpush1.msra.mxu0 0.0
    %917 = vmatprep.subr.mxu0 0.0
    %918 = vmatpush1.msra.mxu0 0.0
    %919 = vmatprep.subr.mxu0 0.0
    %920 = vmatpush1.msra.mxu0 0.0
    %921 = vmatprep.subr.mxu0 0.0
    %922 = vmatpush1.msra.mxu0 0.0
    %923 = vmatprep.subr.mxu0 0.0
    %924 = vmatpush1.msra.mxu0 0.0
    %925 = vmatprep.subr.mxu0 0.0
    %926 = vmatpush1.msra.mxu0 0.0
    %927 = vmatprep.subr.mxu0 0.0
    %928 = vmatpush1.msra.mxu0 0.0
    %929 = vmatprep.subr.mxu0 0.0
    %930 = vmatpush1.msra.mxu0 0.0
    %931 = vmatprep.subr.mxu0 0.0
    %932 = vmatpush1.msra.mxu0 0.0
    %933 = vmatprep.subr.mxu0 0.0
    %934 = vmatpush1.msra.mxu0 0.0
    %935 = vmatprep.subr.mxu0 0.0
    %936 = vmatpush1.msra.mxu0 0.0
    %937 = vmatprep.subr.mxu0 0.0
    %938 = vmatpush1.msra.mxu0 0.0
    %939 = vmatprep.subr.mxu0 0.0
    %940 = vmatpush1.msra.mxu0 0.0
    %941 = vmatprep.subr.mxu0 0.0
    %942 = vmatpush1.msra.mxu0 0.0
    %943 = vmatprep.subr.mxu0 0.0
    %944 = vmatpush1.msra.mxu0 0.0
    %945 = vmatprep.subr.mxu0 0.0
    %946 = vmatpush1.msra.mxu0 0.0
    %947 = vmatprep.subr.mxu0 0.0
    %948 = vmatpush1.msra.mxu0 0.0
    %949 = vmatprep.subr.mxu0 0.0
    %950 = vmatpush1.msra.mxu0 0.0
    %951 = vmatprep.subr.mxu0 0.0
    %952 = vmatpush1.msra.mxu0 0.0
    %953 = vmatprep.subr.mxu0 0.0
    %954 = vmatpush1.msra.mxu0 0.0
    %955 = vmatprep.subr.mxu0 0.0
    %956 = vmatpush1.msra.mxu0 0.0
    %957 = vmatprep.mubr.f32.mxu0 0.0
    %958 = vmatmul.mubr.f32.gmra.mrb[0].mxu0 %v891
    %v959 = vpop.f32.mrb[0].mxu0
    %v960 = vadd.f32 0.0, %v959
    %v961 = vpop.f32.mrb[0].mxu0
    %962 = vdwg.mxu0
    %v964 = vrot.slane %v960, 4
    %v966 = vadd.f32 %v255, %v964
    %v967 = vxor.u32 %v966, 2147483648
    %v968 = vmul.f32 %v967, 1.442695
    %v969 = vpow.pop %v968
    %v970 = vadd.f32 %v969, 1.0
    %v971 = vrcp.pop %v970
    %v972 = vmul.f32 1.0, %v971
    %v973 = vtanh.pop %v966
    %v975 = vrot.slane %v880, 6
    %v977 = vmul.f32 %v972, %v975
    %979 = vrot.lane.b32.xlu0 %v973, 64
    %v980 = vpop.permute.xlu0 %979
    %v982 = vmul.f32 %v972, %v980
    %984 = vrot.lane.b32.xlu0 %v982, 32
    %v985 = vpop.permute.xlu0 %984
    %v987 = vadd.f32 %v977, %v985
    %v988 = vtanh.pop %v987
    %990 = vrot.lane.b32.xlu0 %v988, 64
    %v991 = vpop.permute.xlu0 %990
    %v993 = vmul.f32 %v972, %v991
    %v995 = vrot.slane %v993, 4
    %996 = vrot.lane.b32.xlu0 %v995, 32
    %v997 = vpop.permute.xlu0 %996
    %v998 = vsel %vm258, %v997, 0
    %1000 = vmatprep.subr.mxu0 0.0
    %1001 = vmatpush1.msra.mxu0 %v149
    %1002 = vmatprep.subr.mxu0 0.0
    %1003 = vmatpush1.msra.mxu0 %v150
    %1004 = vmatprep.subr.mxu0 0.0
    %1005 = vmatpush1.msra.mxu0 %v151
    %1006 = vmatprep.subr.mxu0 0.0
    %1007 = vmatpush1.msra.mxu0 %v152
    %1008 = vmatprep.subr.mxu0 0.0
    %1009 = vmatpush1.msra.mxu0 0.0
    %1010 = vmatprep.subr.mxu0 0.0
    %1011 = vmatpush1.msra.mxu0 0.0
    %1012 = vmatprep.subr.mxu0 0.0
    %1013 = vmatpush1.msra.mxu0 0.0
    %1014 = vmatprep.subr.mxu0 0.0
    %1015 = vmatpush1.msra.mxu0 0.0
    %1016 = vmatprep.subr.mxu0 0.0
    %1017 = vmatpush1.msra.mxu0 0.0
    %1018 = vmatprep.subr.mxu0 0.0
    %1019 = vmatpush1.msra.mxu0 0.0
    %1020 = vmatprep.subr.mxu0 0.0
    %1021 = vmatpush1.msra.mxu0 0.0
    %1022 = vmatprep.subr.mxu0 0.0
    %1023 = vmatpush1.msra.mxu0 0.0
    %1024 = vmatprep.subr.mxu0 0.0
    %1025 = vmatpush1.msra.mxu0 0.0
    %1026 = vmatprep.subr.mxu0 0.0
    %1027 = vmatpush1.msra.mxu0 0.0
    %1028 = vmatprep.subr.mxu0 0.0
    %1029 = vmatpush1.msra.mxu0 0.0
    %1030 = vmatprep.subr.mxu0 0.0
    %1031 = vmatpush1.msra.mxu0 0.0
    %1032 = vmatprep.subr.mxu0 0.0
    %1033 = vmatpush1.msra.mxu0 0.0
    %1034 = vmatprep.subr.mxu0 0.0
    %1035 = vmatpush1.msra.mxu0 0.0
    %1036 = vmatprep.subr.mxu0 0.0
    %1037 = vmatpush1.msra.mxu0 0.0
    %1038 = vmatprep.subr.mxu0 0.0
    %1039 = vmatpush1.msra.mxu0 0.0
    %1040 = vmatprep.subr.mxu0 0.0
    %1041 = vmatpush1.msra.mxu0 0.0
    %1042 = vmatprep.subr.mxu0 0.0
    %1043 = vmatpush1.msra.mxu0 0.0
    %1044 = vmatprep.subr.mxu0 0.0
    %1045 = vmatpush1.msra.mxu0 0.0
    %1046 = vmatprep.subr.mxu0 0.0
    %1047 = vmatpush1.msra.mxu0 0.0
    %1048 = vmatprep.subr.mxu0 0.0
    %1049 = vmatpush1.msra.mxu0 0.0
    %1050 = vmatprep.subr.mxu0 0.0
    %1051 = vmatpush1.msra.mxu0 0.0
    %1052 = vmatprep.subr.mxu0 0.0
    %1053 = vmatpush1.msra.mxu0 0.0
    %1054 = vmatprep.subr.mxu0 0.0
    %1055 = vmatpush1.msra.mxu0 0.0
    %1056 = vmatprep.subr.mxu0 0.0
    %1057 = vmatpush1.msra.mxu0 0.0
    %1058 = vmatprep.subr.mxu0 0.0
    %1059 = vmatpush1.msra.mxu0 0.0
    %1060 = vmatprep.subr.mxu0 0.0
    %1061 = vmatpush1.msra.mxu0 0.0
    %1062 = vmatprep.subr.mxu0 0.0
    %1063 = vmatpush1.msra.mxu0 0.0
    %1064 = vmatprep.mubr.f32.mxu0 0.0
    %1065 = vmatmul.mubr.f32.gmra.mrb[0].mxu0 %v998
    %v1066 = vpop.f32.mrb[0].mxu0
    %v1067 = vadd.f32 0.0, %v1066
    %v1068 = vpop.f32.mrb[0].mxu0
    %1069 = vdwg.mxu0
    %v1071 = vrot.slane %v1067, 2
    %v1073 = vadd.f32 %v255, %v1071
    %v1074 = vxor.u32 %v1073, 2147483648
    %v1075 = vmul.f32 %v1074, 1.442695
    %v1076 = vpow.pop %v1075
    %v1077 = vadd.f32 %v1076, 1.0
    %v1078 = vrcp.pop %v1077
    %v1079 = vmul.f32 1.0, %v1078
    %v1080 = vtanh.pop %v1073
    %v1082 = vrot.slane %v987, 6
    %v1084 = vmul.f32 %v1079, %v1082
    %1086 = vrot.lane.b32.xlu0 %v1080, 64
    %v1087 = vpop.permute.xlu0 %1086
    %v1089 = vmul.f32 %v1079, %v1087
    %1091 = vrot.lane.b32.xlu0 %v1089, 32
    %v1092 = vpop.permute.xlu0 %1091
    %v1094 = vadd.f32 %v1084, %v1092
    %v1095 = vtanh.pop %v1094
    %1097 = vrot.lane.b32.xlu0 %v1095, 64
    %v1098 = vpop.permute.xlu0 %1097
    %v1100 = vmul.f32 %v1079, %v1098
    %v1102 = vlaneseq
    %v1103 = vshrl.u32 %v1102, 7
    %v1104 = vsub.s32 0, %v1103
    %v1105 = vrot.slane %v165, %v1104
    %v1108 = vsel %vm179, %v160, 0
    %1110 = vmatprep.subr.mxu0 0.0
    %1111 = vmatpush1.msra.mxu0 %v154
    %1112 = vmatprep.subr.mxu0 0.0
    %1113 = vmatpush1.msra.mxu0 %v155
    %1114 = vmatprep.subr.mxu0 0.0
    %1115 = vmatpush1.msra.mxu0 %v156
    %1116 = vmatprep.subr.mxu0 0.0
    %1117 = vmatpush1.msra.mxu0 %v157
    %1118 = vmatprep.subr.mxu0 0.0
    %1119 = vmatpush1.msra.mxu0 %v158
    %1120 = vmatprep.subr.mxu0 0.0
    %1121 = vmatpush1.msra.mxu0 %v159
    %1122 = vmatprep.subr.mxu0 0.0
    %1123 = vmatpush1.msra.mxu0 %v1108
    %1124 = vmatprep.subr.mxu0 0.0
    %1125 = vmatpush1.msra.mxu0 0.0
    %1126 = vmatprep.subr.mxu0 0.0
    %1127 = vmatpush1.msra.mxu0 0.0
    %1128 = vmatprep.subr.mxu0 0.0
    %1129 = vmatpush1.msra.mxu0 0.0
    %1130 = vmatprep.subr.mxu0 0.0
    %1131 = vmatpush1.msra.mxu0 0.0
    %1132 = vmatprep.subr.mxu0 0.0
    %1133 = vmatpush1.msra.mxu0 0.0
    %1134 = vmatprep.subr.mxu0 0.0
    %1135 = vmatpush1.msra.mxu0 0.0
    %1136 = vmatprep.subr.mxu0 0.0
    %1137 = vmatpush1.msra.mxu0 0.0
    %1138 = vmatprep.subr.mxu0 0.0
    %1139 = vmatpush1.msra.mxu0 0.0
    %1140 = vmatprep.subr.mxu0 0.0
    %1141 = vmatpush1.msra.mxu0 0.0
    %1142 = vmatprep.subr.mxu0 0.0
    %1143 = vmatpush1.msra.mxu0 0.0
    %1144 = vmatprep.subr.mxu0 0.0
    %1145 = vmatpush1.msra.mxu0 0.0
    %1146 = vmatprep.subr.mxu0 0.0
    %1147 = vmatpush1.msra.mxu0 0.0
    %1148 = vmatprep.subr.mxu0 0.0
    %1149 = vmatpush1.msra.mxu0 0.0
    %1150 = vmatprep.subr.mxu0 0.0
    %1151 = vmatpush1.msra.mxu0 0.0
    %1152 = vmatprep.subr.mxu0 0.0
    %1153 = vmatpush1.msra.mxu0 0.0
    %1154 = vmatprep.subr.mxu0 0.0
    %1155 = vmatpush1.msra.mxu0 0.0
    %1156 = vmatprep.subr.mxu0 0.0
    %1157 = vmatpush1.msra.mxu0 0.0
    %1158 = vmatprep.subr.mxu0 0.0
    %1159 = vmatpush1.msra.mxu0 0.0
    %1160 = vmatprep.subr.mxu0 0.0
    %1161 = vmatpush1.msra.mxu0 0.0
    %1162 = vmatprep.subr.mxu0 0.0
    %1163 = vmatpush1.msra.mxu0 0.0
    %1164 = vmatprep.subr.mxu0 0.0
    %1165 = vmatpush1.msra.mxu0 0.0
    %1166 = vmatprep.subr.mxu0 0.0
    %1167 = vmatpush1.msra.mxu0 0.0
    %1168 = vmatprep.subr.mxu0 0.0
    %1169 = vmatpush1.msra.mxu0 0.0
    %1170 = vmatprep.subr.mxu0 0.0
    %1171 = vmatpush1.msra.mxu0 0.0
    %1172 = vmatprep.subr.mxu0 0.0
    %1173 = vmatpush1.msra.mxu0 0.0
    %1174 = vmatprep.mubr.f32.mxu0 0.0
    %1175 = vmatmul.mubr.f32.gmra.mrb[0].mxu0 %v174
    %v1176 = vpop.f32.mrb[0].mxu0
    %v1177 = vadd.f32 %v1105, %v1176
    %v1178 = vpop.f32.mrb[0].mxu0
    %1179 = vmatprep.mubr.f32.mxu0 0.0
    %1180 = vmatmul.mubr.f32.gmra.mrb[0].mxu0 %v177
    %v1181 = vpop.f32.mrb[0].mxu0
    %v1182 = vadd.f32 %v1105, %v1181
    %v1183 = vpop.f32.mrb[0].mxu0
    %1184 = vdwg.mxu0
    %1185 = vmatprep.subr.mxu0 0.0
    %1186 = vmatpush1.msra.mxu0 %v161
    %1187 = vmatprep.subr.mxu0 0.0
    %1188 = vmatpush1.msra.mxu0 %v162
    %1189 = vmatprep.subr.mxu0 0.0
    %1190 = vmatpush1.msra.mxu0 %v163
    %1191 = vmatprep.subr.mxu0 0.0
    %1192 = vmatpush1.msra.mxu0 %v164
    %1193 = vmatprep.subr.mxu0 0.0
    %1194 = vmatpush1.msra.mxu0 0.0
    %1195 = vmatprep.subr.mxu0 0.0
    %1196 = vmatpush1.msra.mxu0 0.0
    %1197 = vmatprep.subr.mxu0 0.0
    %1198 = vmatpush1.msra.mxu0 0.0
    %1199 = vmatprep.subr.mxu0 0.0
    %1200 = vmatpush1.msra.mxu0 0.0
    %1201 = vmatprep.subr.mxu0 0.0
    %1202 = vmatpush1.msra.mxu0 0.0
    %1203 = vmatprep.subr.mxu0 0.0
    %1204 = vmatpush1.msra.mxu0 0.0
    %1205 = vmatprep.subr.mxu0 0.0
    %1206 = vmatpush1.msra.mxu0 0.0
    %1207 = vmatprep.subr.mxu0 0.0
    %1208 = vmatpush1.msra.mxu0 0.0
    %1209 = vmatprep.subr.mxu0 0.0
    %1210 = vmatpush1.msra.mxu0 0.0
    %1211 = vmatprep.subr.mxu0 0.0
    %1212 = vmatpush1.msra.mxu0 0.0
    %1213 = vmatprep.subr.mxu0 0.0
    %1214 = vmatpush1.msra.mxu0 0.0
    %1215 = vmatprep.subr.mxu0 0.0
    %1216 = vmatpush1.msra.mxu0 0.0
    %1217 = vmatprep.subr.mxu0 0.0
    %1218 = vmatpush1.msra.mxu0 0.0
    %1219 = vmatprep.subr.mxu0 0.0
    %1220 = vmatpush1.msra.mxu0 0.0
    %1221 = vmatprep.subr.mxu0 0.0
    %1222 = vmatpush1.msra.mxu0 0.0
    %1223 = vmatprep.subr.mxu0 0.0
    %1224 = vmatpush1.msra.mxu0 0.0
    %1225 = vmatprep.subr.mxu0 0.0
    %1226 = vmatpush1.msra.mxu0 0.0
    %1227 = vmatprep.subr.mxu0 0.0
    %1228 = vmatpush1.msra.mxu0 0.0
    %1229 = vmatprep.subr.mxu0 0.0
    %1230 = vmatpush1.msra.mxu0 0.0
    %1231 = vmatprep.subr.mxu0 0.0
    %1232 = vmatpush1.msra.mxu0 0.0
    %1233 = vmatprep.subr.mxu0 0.0
    %1234 = vmatpush1.msra.mxu0 0.0
    %1235 = vmatprep.subr.mxu0 0.0
    %1236 = vmatpush1.msra.mxu0 0.0
    %1237 = vmatprep.subr.mxu0 0.0
    %1238 = vmatpush1.msra.mxu0 0.0
    %1239 = vmatprep.subr.mxu0 0.0
    %1240 = vmatpush1.msra.mxu0 0.0
    %1241 = vmatprep.subr.mxu0 0.0
    %1242 = vmatpush1.msra.mxu0 0.0
    %1243 = vmatprep.subr.mxu0 0.0
    %1244 = vmatpush1.msra.mxu0 0.0
    %1245 = vmatprep.subr.mxu0 0.0
    %1246 = vmatpush1.msra.mxu0 0.0
    %1247 = vmatprep.subr.mxu0 0.0
    %1248 = vmatpush1.msra.mxu0 0.0
    %1249 = vmatprep.mubr.f32.mxu0 0.0
    %1250 = vmatmul.mubr.f32.gmra.mrb[0].mxu0 %v260
    %v1251 = vpop.f32.mrb[0].mxu0
    %v1252 = vadd.f32 0.0, %v1251
    %v1253 = vpop.f32.mrb[0].mxu0
    %1254 = vdwg.mxu0
    %v1256 = vrot.slane %v1252, 2
    %v1258 = vadd.f32 %v1182, %v1256
    %v1259 = vxor.u32 %v1258, 2147483648
    %v1260 = vmul.f32 %v1259, 1.442695
    %v1261 = vpow.pop %v1260
    %v1262 = vadd.f32 %v1261, 1.0
    %v1263 = vrcp.pop %v1262
    %v1264 = vmul.f32 1.0, %v1263
    %v1265 = vtanh.pop %v1258
    %v1266 = vmul.f32 %v1264, 0.0
    %1268 = vrot.lane.b32.xlu0 %v1265, 64
    %v1269 = vpop.permute.xlu0 %1268
    %v1271 = vmul.f32 %v1264, %v1269
    %1273 = vrot.lane.b32.xlu0 %v1271, 32
    %v1274 = vpop.permute.xlu0 %1273
    %v1276 = vadd.f32 %v1266, %v1274
    %v1277 = vtanh.pop %v1276
    %1279 = vrot.lane.b32.xlu0 %v1277, 64
    %v1280 = vpop.permute.xlu0 %1279
    %v1282 = vmul.f32 %v1264, %v1280
    %v1284 = vrot.slane %v1282, 6
    %1285 = vrot.lane.b32.xlu0 %v1284, 32
    %v1286 = vpop.permute.xlu0 %1285
    %v1287 = vsel %vm258, %v1286, 0
    %1289 = vmatprep.subr.mxu0 0.0
    %1290 = vmatpush1.msra.mxu0 %v161
    %1291 = vmatprep.subr.mxu0 0.0
    %1292 = vmatpush1.msra.mxu0 %v162
    %1293 = vmatprep.subr.mxu0 0.0
    %1294 = vmatpush1.msra.mxu0 %v163
    %1295 = vmatprep.subr.mxu0 0.0
    %1296 = vmatpush1.msra.mxu0 %v164
    %1297 = vmatprep.subr.mxu0 0.0
    %1298 = vmatpush1.msra.mxu0 0.0
    %1299 = vmatprep.subr.mxu0 0.0
    %1300 = vmatpush1.msra.mxu0 0.0
    %1301 = vmatprep.subr.mxu0 0.0
    %1302 = vmatpush1.msra.mxu0 0.0
    %1303 = vmatprep.subr.mxu0 0.0
    %1304 = vmatpush1.msra.mxu0 0.0
    %1305 = vmatprep.subr.mxu0 0.0
    %1306 = vmatpush1.msra.mxu0 0.0
    %1307 = vmatprep.subr.mxu0 0.0
    %1308 = vmatpush1.msra.mxu0 0.0
    %1309 = vmatprep.subr.mxu0 0.0
    %1310 = vmatpush1.msra.mxu0 0.0
    %1311 = vmatprep.subr.mxu0 0.0
    %1312 = vmatpush1.msra.mxu0 0.0
    %1313 = vmatprep.subr.mxu0 0.0
    %1314 = vmatpush1.msra.mxu0 0.0
    %1315 = vmatprep.subr.mxu0 0.0
    %1316 = vmatpush1.msra.mxu0 0.0
    %1317 = vmatprep.subr.mxu0 0.0
    %1318 = vmatpush1.msra.mxu0 0.0
    %1319 = vmatprep.subr.mxu0 0.0
    %1320 = vmatpush1.msra.mxu0 0.0
    %1321 = vmatprep.subr.mxu0 0.0
    %1322 = vmatpush1.msra.mxu0 0.0
    %1323 = vmatprep.subr.mxu0 0.0
    %1324 = vmatpush1.msra.mxu0 0.0
    %1325 = vmatprep.subr.mxu0 0.0
    %1326 = vmatpush1.msra.mxu0 0.0
    %1327 = vmatprep.subr.mxu0 0.0
    %1328 = vmatpush1.msra.mxu0 0.0
    %1329 = vmatprep.subr.mxu0 0.0
    %1330 = vmatpush1.msra.mxu0 0.0
    %1331 = vmatprep.subr.mxu0 0.0
    %1332 = vmatpush1.msra.mxu0 0.0
    %1333 = vmatprep.subr.mxu0 0.0
    %1334 = vmatpush1.msra.mxu0 0.0
    %1335 = vmatprep.subr.mxu0 0.0
    %1336 = vmatpush1.msra.mxu0 0.0
    %1337 = vmatprep.subr.mxu0 0.0
    %1338 = vmatpush1.msra.mxu0 0.0
    %1339 = vmatprep.subr.mxu0 0.0
    %1340 = vmatpush1.msra.mxu0 0.0
    %1341 = vmatprep.subr.mxu0 0.0
    %1342 = vmatpush1.msra.mxu0 0.0
    %1343 = vmatprep.subr.mxu0 0.0
    %1344 = vmatpush1.msra.mxu0 0.0
    %1345 = vmatprep.subr.mxu0 0.0
    %1346 = vmatpush1.msra.mxu0 0.0
    %1347 = vmatprep.subr.mxu0 0.0
    %1348 = vmatpush1.msra.mxu0 0.0
    %1349 = vmatprep.subr.mxu0 0.0
    %1350 = vmatpush1.msra.mxu0 0.0
    %1351 = vmatprep.subr.mxu0 0.0
    %1352 = vmatpush1.msra.mxu0 0.0
    %1353 = vmatprep.mubr.f32.mxu0 0.0
    %1354 = vmatmul.mubr.f32.gmra.mrb[0].mxu0 %v1287
    %v1355 = vpop.f32.mrb[0].mxu0
    %v1356 = vadd.f32 0.0, %v1355
    %v1357 = vpop.f32.mrb[0].mxu0
    %1358 = vdwg.mxu0
    %v1360 = vrot.slane %v1356, 4
    %v1362 = vadd.f32 %v1182, %v1360
    %v1363 = vxor.u32 %v1362, 2147483648
    %v1364 = vmul.f32 %v1363, 1.442695
    %v1365 = vpow.pop %v1364
    %v1366 = vadd.f32 %v1365, 1.0
    %v1367 = vrcp.pop %v1366
    %v1368 = vmul.f32 1.0, %v1367
    %v1369 = vtanh.pop %v1362
    %v1371 = vrot.slane %v1276, 2
    %v1373 = vmul.f32 %v1368, %v1371
    %1375 = vrot.lane.b32.xlu0 %v1369, 64
    %v1376 = vpop.permute.xlu0 %1375
    %v1378 = vmul.f32 %v1368, %v1376
    %1380 = vrot.lane.b32.xlu0 %v1378, 32
    %v1381 = vpop.permute.xlu0 %1380
    %v1383 = vadd.f32 %v1373, %v1381
    %v1384 = vtanh.pop %v1383
    %1386 = vrot.lane.b32.xlu0 %v1384, 64
    %v1387 = vpop.permute.xlu0 %1386
    %v1389 = vmul.f32 %v1368, %v1387
    %v1391 = vrot.slane %v1389, 4
    %1392 = vrot.lane.b32.xlu0 %v1391, 32
    %v1393 = vpop.permute.xlu0 %1392
    %v1394 = vsel %vm258, %v1393, 0
    %1396 = vmatprep.subr.mxu0 0.0
    %1397 = vmatpush1.msra.mxu0 %v161
    %1398 = vmatprep.subr.mxu0 0.0
    %1399 = vmatpush1.msra.mxu0 %v162
    %1400 = vmatprep.subr.mxu0 0.0
    %1401 = vmatpush1.msra.mxu0 %v163
    %1402 = vmatprep.subr.mxu0 0.0
    %1403 = vmatpush1.msra.mxu0 %v164
    %1404 = vmatprep.subr.mxu0 0.0
    %1405 = vmatpush1.msra.mxu0 0.0
    %1406 = vmatprep.subr.mxu0 0.0
    %1407 = vmatpush1.msra.mxu0 0.0
    %1408 = vmatprep.subr.mxu0 0.0
    %1409 = vmatpush1.msra.mxu0 0.0
    %1410 = vmatprep.subr.mxu0 0.0
    %1411 = vmatpush1.msra.mxu0 0.0
    %1412 = vmatprep.subr.mxu0 0.0
    %1413 = vmatpush1.msra.mxu0 0.0
    %1414 = vmatprep.subr.mxu0 0.0
    %1415 = vmatpush1.msra.mxu0 0.0
    %1416 = vmatprep.subr.mxu0 0.0
    %1417 = vmatpush1.msra.mxu0 0.0
    %1418 = vmatprep.subr.mxu0 0.0
    %1419 = vmatpush1.msra.mxu0 0.0
    %1420 = vmatprep.subr.mxu0 0.0
    %1421 = vmatpush1.msra.mxu0 0.0
    %1422 = vmatprep.subr.mxu0 0.0
    %1423 = vmatpush1.msra.mxu0 0.0
    %1424 = vmatprep.subr.mxu0 0.0
    %1425 = vmatpush1.msra.mxu0 0.0
    %1426 = vmatprep.subr.mxu0 0.0
    %1427 = vmatpush1.msra.mxu0 0.0
    %1428 = vmatprep.subr.mxu0 0.0
    %1429 = vmatpush1.msra.mxu0 0.0
    %1430 = vmatprep.subr.mxu0 0.0
    %1431 = vmatpush1.msra.mxu0 0.0
    %1432 = vmatprep.subr.mxu0 0.0
    %1433 = vmatpush1.msra.mxu0 0.0
    %1434 = vmatprep.subr.mxu0 0.0
    %1435 = vmatpush1.msra.mxu0 0.0
    %1436 = vmatprep.subr.mxu0 0.0
    %1437 = vmatpush1.msra.mxu0 0.0
    %1438 = vmatprep.subr.mxu0 0.0
    %1439 = vmatpush1.msra.mxu0 0.0
    %1440 = vmatprep.subr.mxu0 0.0
    %1441 = vmatpush1.msra.mxu0 0.0
    %1442 = vmatprep.subr.mxu0 0.0
    %1443 = vmatpush1.msra.mxu0 0.0
    %1444 = vmatprep.subr.mxu0 0.0
    %1445 = vmatpush1.msra.mxu0 0.0
    %1446 = vmatprep.subr.mxu0 0.0
    %1447 = vmatpush1.msra.mxu0 0.0
    %1448 = vmatprep.subr.mxu0 0.0
    %1449 = vmatpush1.msra.mxu0 0.0
    %1450 = vmatprep.subr.mxu0 0.0
    %1451 = vmatpush1.msra.mxu0 0.0
    %1452 = vmatprep.subr.mxu0 0.0
    %1453 = vmatpush1.msra.mxu0 0.0
    %1454 = vmatprep.subr.mxu0 0.0
    %1455 = vmatpush1.msra.mxu0 0.0
    %1456 = vmatprep.subr.mxu0 0.0
    %1457 = vmatpush1.msra.mxu0 0.0
    %1458 = vmatprep.subr.mxu0 0.0
    %1459 = vmatpush1.msra.mxu0 0.0
    %1460 = vmatprep.mubr.f32.mxu0 0.0
    %1461 = vmatmul.mubr.f32.gmra.mrb[0].mxu0 %v1394
    %v1462 = vpop.f32.mrb[0].mxu0
    %v1463 = vadd.f32 0.0, %v1462
    %v1464 = vpop.f32.mrb[0].mxu0
    %1465 = vdwg.mxu0
    %v1467 = vrot.slane %v1463, 6
    %v1469 = vadd.f32 %v1182, %v1467
    %v1470 = vxor.u32 %v1469, 2147483648
    %v1471 = vmul.f32 %v1470, 1.442695
    %v1472 = vpow.pop %v1471
    %v1473 = vadd.f32 %v1472, 1.0
    %v1474 = vrcp.pop %v1473
    %v1475 = vmul.f32 1.0, %v1474
    %v1476 = vtanh.pop %v1469
    %v1478 = vrot.slane %v1383, 2
    %v1480 = vmul.f32 %v1475, %v1478
    %1482 = vrot.lane.b32.xlu0 %v1476, 64
    %v1483 = vpop.permute.xlu0 %1482
    %v1485 = vmul.f32 %v1475, %v1483
    %1487 = vrot.lane.b32.xlu0 %v1485, 32
    %v1488 = vpop.permute.xlu0 %1487
    %v1490 = vadd.f32 %v1480, %v1488
    %v1491 = vtanh.pop %v1490
    %1493 = vrot.lane.b32.xlu0 %v1491, 64
    %v1494 = vpop.permute.xlu0 %1493
    %v1496 = vmul.f32 %v1475, %v1494
    %v1498 = vrot.slane %v1496, 2
    %1499 = vrot.lane.b32.xlu0 %v1498, 32
    %v1500 = vpop.permute.xlu0 %1499
    %v1501 = vsel %vm258, %v1500, 0
    %1503 = vmatprep.subr.mxu0 0.0
    %1504 = vmatpush1.msra.mxu0 %v161
    %1505 = vmatprep.subr.mxu0 0.0
    %1506 = vmatpush1.msra.mxu0 %v162
    %1507 = vmatprep.subr.mxu0 0.0
    %1508 = vmatpush1.msra.mxu0 %v163
    %1509 = vmatprep.subr.mxu0 0.0
    %1510 = vmatpush1.msra.mxu0 %v164
    %1511 = vmatprep.subr.mxu0 0.0
    %1512 = vmatpush1.msra.mxu0 0.0
    %1513 = vmatprep.subr.mxu0 0.0
    %1514 = vmatpush1.msra.mxu0 0.0
    %1515 = vmatprep.subr.mxu0 0.0
    %1516 = vmatpush1.msra.mxu0 0.0
    %1517 = vmatprep.subr.mxu0 0.0
    %1518 = vmatpush1.msra.mxu0 0.0
    %1519 = vmatprep.subr.mxu0 0.0
    %1520 = vmatpush1.msra.mxu0 0.0
    %1521 = vmatprep.subr.mxu0 0.0
    %1522 = vmatpush1.msra.mxu0 0.0
    %1523 = vmatprep.subr.mxu0 0.0
    %1524 = vmatpush1.msra.mxu0 0.0
    %1525 = vmatprep.subr.mxu0 0.0
    %1526 = vmatpush1.msra.mxu0 0.0
    %1527 = vmatprep.subr.mxu0 0.0
    %1528 = vmatpush1.msra.mxu0 0.0
    %1529 = vmatprep.subr.mxu0 0.0
    %1530 = vmatpush1.msra.mxu0 0.0
    %1531 = vmatprep.subr.mxu0 0.0
    %1532 = vmatpush1.msra.mxu0 0.0
    %1533 = vmatprep.subr.mxu0 0.0
    %1534 = vmatpush1.msra.mxu0 0.0
    %1535 = vmatprep.subr.mxu0 0.0
    %1536 = vmatpush1.msra.mxu0 0.0
    %1537 = vmatprep.subr.mxu0 0.0
    %1538 = vmatpush1.msra.mxu0 0.0
    %1539 = vmatprep.subr.mxu0 0.0
    %1540 = vmatpush1.msra.mxu0 0.0
    %1541 = vmatprep.subr.mxu0 0.0
    %1542 = vmatpush1.msra.mxu0 0.0
    %1543 = vmatprep.subr.mxu0 0.0
    %1544 = vmatpush1.msra.mxu0 0.0
    %1545 = vmatprep.subr.mxu0 0.0
    %1546 = vmatpush1.msra.mxu0 0.0
    %1547 = vmatprep.subr.mxu0 0.0
    %1548 = vmatpush1.msra.mxu0 0.0
    %1549 = vmatprep.subr.mxu0 0.0
    %1550 = vmatpush1.msra.mxu0 0.0
    %1551 = vmatprep.subr.mxu0 0.0
    %1552 = vmatpush1.msra.mxu0 0.0
    %1553 = vmatprep.subr.mxu0 0.0
    %1554 = vmatpush1.msra.mxu0 0.0
    %1555 = vmatprep.subr.mxu0 0.0
    %1556 = vmatpush1.msra.mxu0 0.0
    %1557 = vmatprep.subr.mxu0 0.0
    %1558 = vmatpush1.msra.mxu0 0.0
    %1559 = vmatprep.subr.mxu0 0.0
    %1560 = vmatpush1.msra.mxu0 0.0
    %1561 = vmatprep.subr.mxu0 0.0
    %1562 = vmatpush1.msra.mxu0 0.0
    %1563 = vmatprep.subr.mxu0 0.0
    %1564 = vmatpush1.msra.mxu0 0.0
    %1565 = vmatprep.subr.mxu0 0.0
    %1566 = vmatpush1.msra.mxu0 0.0
    %1567 = vmatprep.mubr.f32.mxu0 0.0
    %1568 = vmatmul.mubr.f32.gmra.mrb[0].mxu0 %v1501
    %v1569 = vpop.f32.mrb[0].mxu0
    %v1570 = vadd.f32 0.0, %v1569
    %v1571 = vpop.f32.mrb[0].mxu0
    %1572 = vdwg.mxu0
    %v1573 = vadd.f32 %v1182, %v1570
    %v1574 = vxor.u32 %v1573, 2147483648
    %v1575 = vmul.f32 %v1574, 1.442695
    %v1576 = vpow.pop %v1575
    %v1577 = vadd.f32 %v1576, 1.0
    %v1578 = vrcp.pop %v1577
    %v1579 = vmul.f32 1.0, %v1578
    %v1580 = vtanh.pop %v1573
    %v1582 = vrot.slane %v1490, 2
    %v1584 = vmul.f32 %v1579, %v1582
    %1586 = vrot.lane.b32.xlu0 %v1580, 64
    %v1587 = vpop.permute.xlu0 %1586
    %v1589 = vmul.f32 %v1579, %v1587
    %1591 = vrot.lane.b32.xlu0 %v1589, 32
    %v1592 = vpop.permute.xlu0 %1591
    %v1594 = vadd.f32 %v1584, %v1592
    %v1595 = vtanh.pop %v1594
    %1597 = vrot.lane.b32.xlu0 %v1595, 64
    %v1598 = vpop.permute.xlu0 %1597
    %v1600 = vmul.f32 %v1579, %v1598
    %1602 = vrot.lane.b32.xlu0 %v1600, 32
    %v1603 = vpop.permute.xlu0 %1602
    %v1604 = vsel %vm258, %v1603, 0
    %1606 = vmatprep.subr.mxu0 0.0
    %1607 = vmatpush1.msra.mxu0 %v161
    %1608 = vmatprep.subr.mxu0 0.0
    %1609 = vmatpush1.msra.mxu0 %v162
    %1610 = vmatprep.subr.mxu0 0.0
    %1611 = vmatpush1.msra.mxu0 %v163
    %1612 = vmatprep.subr.mxu0 0.0
    %1613 = vmatpush1.msra.mxu0 %v164
    %1614 = vmatprep.subr.mxu0 0.0
    %1615 = vmatpush1.msra.mxu0 0.0
    %1616 = vmatprep.subr.mxu0 0.0
    %1617 = vmatpush1.msra.mxu0 0.0
    %1618 = vmatprep.subr.mxu0 0.0
    %1619 = vmatpush1.msra.mxu0 0.0
    %1620 = vmatprep.subr.mxu0 0.0
    %1621 = vmatpush1.msra.mxu0 0.0
    %1622 = vmatprep.subr.mxu0 0.0
    %1623 = vmatpush1.msra.mxu0 0.0
    %1624 = vmatprep.subr.mxu0 0.0
    %1625 = vmatpush1.msra.mxu0 0.0
    %1626 = vmatprep.subr.mxu0 0.0
    %1627 = vmatpush1.msra.mxu0 0.0
    %1628 = vmatprep.subr.mxu0 0.0
    %1629 = vmatpush1.msra.mxu0 0.0
    %1630 = vmatprep.subr.mxu0 0.0
    %1631 = vmatpush1.msra.mxu0 0.0
    %1632 = vmatprep.subr.mxu0 0.0
    %1633 = vmatpush1.msra.mxu0 0.0
    %1634 = vmatprep.subr.mxu0 0.0
    %1635 = vmatpush1.msra.mxu0 0.0
    %1636 = vmatprep.subr.mxu0 0.0
    %1637 = vmatpush1.msra.mxu0 0.0
    %1638 = vmatprep.subr.mxu0 0.0
    %1639 = vmatpush1.msra.mxu0 0.0
    %1640 = vmatprep.subr.mxu0 0.0
    %1641 = vmatpush1.msra.mxu0 0.0
    %1642 = vmatprep.subr.mxu0 0.0
    %1643 = vmatpush1.msra.mxu0 0.0
    %1644 = vmatprep.subr.mxu0 0.0
    %1645 = vmatpush1.msra.mxu0 0.0
    %1646 = vmatprep.subr.mxu0 0.0
    %1647 = vmatpush1.msra.mxu0 0.0
    %1648 = vmatprep.subr.mxu0 0.0
    %1649 = vmatpush1.msra.mxu0 0.0
    %1650 = vmatprep.subr.mxu0 0.0
    %1651 = vmatpush1.msra.mxu0 0.0
    %1652 = vmatprep.subr.mxu0 0.0
    %1653 = vmatpush1.msra.mxu0 0.0
    %1654 = vmatprep.subr.mxu0 0.0
    %1655 = vmatpush1.msra.mxu0 0.0
    %1656 = vmatprep.subr.mxu0 0.0
    %1657 = vmatpush1.msra.mxu0 0.0
    %1658 = vmatprep.subr.mxu0 0.0
    %1659 = vmatpush1.msra.mxu0 0.0
    %1660 = vmatprep.subr.mxu0 0.0
    %1661 = vmatpush1.msra.mxu0 0.0
    %1662 = vmatprep.subr.mxu0 0.0
    %1663 = vmatpush1.msra.mxu0 0.0
    %1664 = vmatprep.subr.mxu0 0.0
    %1665 = vmatpush1.msra.mxu0 0.0
    %1666 = vmatprep.subr.mxu0 0.0
    %1667 = vmatpush1.msra.mxu0 0.0
    %1668 = vmatprep.subr.mxu0 0.0
    %1669 = vmatpush1.msra.mxu0 0.0
    %1670 = vmatprep.mubr.f32.mxu0 0.0
    %1671 = vmatmul.mubr.f32.gmra.mrb[0].mxu0 %v1604
    %v1672 = vpop.f32.mrb[0].mxu0
    %v1673 = vadd.f32 0.0, %v1672
    %v1674 = vpop.f32.mrb[0].mxu0
    %1675 = vdwg.mxu0
    %v1677 = vrot.slane %v1673, 2
    %v1679 = vadd.f32 %v1177, %v1677
    %v1680 = vxor.u32 %v1679, 2147483648
    %v1681 = vmul.f32 %v1680, 1.442695
    %v1682 = vpow.pop %v1681
    %v1683 = vadd.f32 %v1682, 1.0
    %v1684 = vrcp.pop %v1683
    %v1685 = vmul.f32 1.0, %v1684
    %v1686 = vtanh.pop %v1679
    %v1688 = vrot.slane %v1594, 2
    %v1690 = vmul.f32 %v1685, %v1688
    %1692 = vrot.lane.b32.xlu0 %v1686, 64
    %v1693 = vpop.permute.xlu0 %1692
    %v1695 = vmul.f32 %v1685, %v1693
    %1697 = vrot.lane.b32.xlu0 %v1695, 32
    %v1698 = vpop.permute.xlu0 %1697
    %v1700 = vadd.f32 %v1690, %v1698
    %v1701 = vtanh.pop %v1700
    %1703 = vrot.lane.b32.xlu0 %v1701, 64
    %v1704 = vpop.permute.xlu0 %1703
    %v1706 = vmul.f32 %v1685, %v1704
    %v1708 = vrot.slane %v1706, 6
    %1709 = vrot.lane.b32.xlu0 %v1708, 32
    %v1710 = vpop.permute.xlu0 %1709
    %v1711 = vsel %vm258, %v1710, 0
    %1713 = vmatprep.subr.mxu0 0.0
    %1714 = vmatpush1.msra.mxu0 %v161
    %1715 = vmatprep.subr.mxu0 0.0
    %1716 = vmatpush1.msra.mxu0 %v162
    %1717 = vmatprep.subr.mxu0 0.0
    %1718 = vmatpush1.msra.mxu0 %v163
    %1719 = vmatprep.subr.mxu0 0.0
    %1720 = vmatpush1.msra.mxu0 %v164
    %1721 = vmatprep.subr.mxu0 0.0
    %1722 = vmatpush1.msra.mxu0 0.0
    %1723 = vmatprep.subr.mxu0 0.0
    %1724 = vmatpush1.msra.mxu0 0.0
    %1725 = vmatprep.subr.mxu0 0.0
    %1726 = vmatpush1.msra.mxu0 0.0
    %1727 = vmatprep.subr.mxu0 0.0
    %1728 = vmatpush1.msra.mxu0 0.0
    %1729 = vmatprep.subr.mxu0 0.0
    %1730 = vmatpush1.msra.mxu0 0.0
    %1731 = vmatprep.subr.mxu0 0.0
    %1732 = vmatpush1.msra.mxu0 0.0
    %1733 = vmatprep.subr.mxu0 0.0
    %1734 = vmatpush1.msra.mxu0 0.0
    %1735 = vmatprep.subr.mxu0 0.0
    %1736 = vmatpush1.msra.mxu0 0.0
    %1737 = vmatprep.subr.mxu0 0.0
    %1738 = vmatpush1.msra.mxu0 0.0
    %1739 = vmatprep.subr.mxu0 0.0
    %1740 = vmatpush1.msra.mxu0 0.0
    %1741 = vmatprep.subr.mxu0 0.0
    %1742 = vmatpush1.msra.mxu0 0.0
    %1743 = vmatprep.subr.mxu0 0.0
    %1744 = vmatpush1.msra.mxu0 0.0
    %1745 = vmatprep.subr.mxu0 0.0
    %1746 = vmatpush1.msra.mxu0 0.0
    %1747 = vmatprep.subr.mxu0 0.0
    %1748 = vmatpush1.msra.mxu0 0.0
    %1749 = vmatprep.subr.mxu0 0.0
    %1750 = vmatpush1.msra.mxu0 0.0
    %1751 = vmatprep.subr.mxu0 0.0
    %1752 = vmatpush1.msra.mxu0 0.0
    %1753 = vmatprep.subr.mxu0 0.0
    %1754 = vmatpush1.msra.mxu0 0.0
    %1755 = vmatprep.subr.mxu0 0.0
    %1756 = vmatpush1.msra.mxu0 0.0
    %1757 = vmatprep.subr.mxu0 0.0
    %1758 = vmatpush1.msra.mxu0 0.0
    %1759 = vmatprep.subr.mxu0 0.0
    %1760 = vmatpush1.msra.mxu0 0.0
    %1761 = vmatprep.subr.mxu0 0.0
    %1762 = vmatpush1.msra.mxu0 0.0
    %1763 = vmatprep.subr.mxu0 0.0
    %1764 = vmatpush1.msra.mxu0 0.0
    %1765 = vmatprep.subr.mxu0 0.0
    %1766 = vmatpush1.msra.mxu0 0.0
    %1767 = vmatprep.subr.mxu0 0.0
    %1768 = vmatpush1.msra.mxu0 0.0
    %1769 = vmatprep.subr.mxu0 0.0
    %1770 = vmatpush1.msra.mxu0 0.0
    %1771 = vmatprep.subr.mxu0 0.0
    %1772 = vmatpush1.msra.mxu0 0.0
    %1773 = vmatprep.subr.mxu0 0.0
    %1774 = vmatpush1.msra.mxu0 0.0
    %1775 = vmatprep.subr.mxu0 0.0
    %1776 = vmatpush1.msra.mxu0 0.0
    %1777 = vmatprep.mubr.f32.mxu0 0.0
    %1778 = vmatmul.mubr.f32.gmra.mrb[0].mxu0 %v1711
    %v1779 = vpop.f32.mrb[0].mxu0
    %v1780 = vadd.f32 0.0, %v1779
    %v1781 = vpop.f32.mrb[0].mxu0
    %1782 = vdwg.mxu0
    %v1784 = vrot.slane %v1780, 4
    %v1786 = vadd.f32 %v1177, %v1784
    %v1787 = vxor.u32 %v1786, 2147483648
    %v1788 = vmul.f32 %v1787, 1.442695
    %v1789 = vpow.pop %v1788
    %v1790 = vadd.f32 %v1789, 1.0
    %v1791 = vrcp.pop %v1790
    %v1792 = vmul.f32 1.0, %v1791
    %v1793 = vtanh.pop %v1786
    %v1795 = vrot.slane %v1700, 2
    %v1797 = vmul.f32 %v1792, %v1795
    %1799 = vrot.lane.b32.xlu0 %v1793, 64
    %v1800 = vpop.permute.xlu0 %1799
    %v1802 = vmul.f32 %v1792, %v1800
    %1804 = vrot.lane.b32.xlu0 %v1802, 32
    %v1805 = vpop.permute.xlu0 %1804
    %v1807 = vadd.f32 %v1797, %v1805
    %v1808 = vtanh.pop %v1807
    %1810 = vrot.lane.b32.xlu0 %v1808, 64
    %v1811 = vpop.permute.xlu0 %1810
    %v1813 = vmul.f32 %v1792, %v1811
    %v1815 = vrot.slane %v1813, 4
    %1816 = vrot.lane.b32.xlu0 %v1815, 32
    %v1817 = vpop.permute.xlu0 %1816
    %v1818 = vsel %vm258, %v1817, 0
    %1820 = vmatprep.subr.mxu0 0.0
    %1821 = vmatpush1.msra.mxu0 %v161
    %1822 = vmatprep.subr.mxu0 0.0
    %1823 = vmatpush1.msra.mxu0 %v162
    %1824 = vmatprep.subr.mxu0 0.0
    %1825 = vmatpush1.msra.mxu0 %v163
    %1826 = vmatprep.subr.mxu0 0.0
    %1827 = vmatpush1.msra.mxu0 %v164
    %1828 = vmatprep.subr.mxu0 0.0
    %1829 = vmatpush1.msra.mxu0 0.0
    %1830 = vmatprep.subr.mxu0 0.0
    %1831 = vmatpush1.msra.mxu0 0.0
    %1832 = vmatprep.subr.mxu0 0.0
    %1833 = vmatpush1.msra.mxu0 0.0
    %1834 = vmatprep.subr.mxu0 0.0
    %1835 = vmatpush1.msra.mxu0 0.0
    %1836 = vmatprep.subr.mxu0 0.0
    %1837 = vmatpush1.msra.mxu0 0.0
    %1838 = vmatprep.subr.mxu0 0.0
    %1839 = vmatpush1.msra.mxu0 0.0
    %1840 = vmatprep.subr.mxu0 0.0
    %1841 = vmatpush1.msra.mxu0 0.0
    %1842 = vmatprep.subr.mxu0 0.0
    %1843 = vmatpush1.msra.mxu0 0.0
    %1844 = vmatprep.subr.mxu0 0.0
    %1845 = vmatpush1.msra.mxu0 0.0
    %1846 = vmatprep.subr.mxu0 0.0
    %1847 = vmatpush1.msra.mxu0 0.0
    %1848 = vmatprep.subr.mxu0 0.0
    %1849 = vmatpush1.msra.mxu0 0.0
    %1850 = vmatprep.subr.mxu0 0.0
    %1851 = vmatpush1.msra.mxu0 0.0
    %1852 = vmatprep.subr.mxu0 0.0
    %1853 = vmatpush1.msra.mxu0 0.0
    %1854 = vmatprep.subr.mxu0 0.0
    %1855 = vmatpush1.msra.mxu0 0.0
    %1856 = vmatprep.subr.mxu0 0.0
    %1857 = vmatpush1.msra.mxu0 0.0
    %1858 = vmatprep.subr.mxu0 0.0
    %1859 = vmatpush1.msra.mxu0 0.0
    %1860 = vmatprep.subr.mxu0 0.0
    %1861 = vmatpush1.msra.mxu0 0.0
    %1862 = vmatprep.subr.mxu0 0.0
    %1863 = vmatpush1.msra.mxu0 0.0
    %1864 = vmatprep.subr.mxu0 0.0
    %1865 = vmatpush1.msra.mxu0 0.0
    %1866 = vmatprep.subr.mxu0 0.0
    %1867 = vmatpush1.msra.mxu0 0.0
    %1868 = vmatprep.subr.mxu0 0.0
    %1869 = vmatpush1.msra.mxu0 0.0
    %1870 = vmatprep.subr.mxu0 0.0
    %1871 = vmatpush1.msra.mxu0 0.0
    %1872 = vmatprep.subr.mxu0 0.0
    %1873 = vmatpush1.msra.mxu0 0.0
    %1874 = vmatprep.subr.mxu0 0.0
    %1875 = vmatpush1.msra.mxu0 0.0
    %1876 = vmatprep.subr.mxu0 0.0
    %1877 = vmatpush1.msra.mxu0 0.0
    %1878 = vmatprep.subr.mxu0 0.0
    %1879 = vmatpush1.msra.mxu0 0.0
    %1880 = vmatprep.subr.mxu0 0.0
    %1881 = vmatpush1.msra.mxu0 0.0
    %1882 = vmatprep.subr.mxu0 0.0
    %1883 = vmatpush1.msra.mxu0 0.0
    %1884 = vmatprep.mubr.f32.mxu0 0.0
    %1885 = vmatmul.mubr.f32.gmra.mrb[0].mxu0 %v1818
    %v1886 = vpop.f32.mrb[0].mxu0
    %v1887 = vadd.f32 0.0, %v1886
    %v1888 = vpop.f32.mrb[0].mxu0
    %1889 = vdwg.mxu0
    %v1891 = vrot.slane %v1887, 6
    %v1893 = vadd.f32 %v1177, %v1891
    %v1894 = vxor.u32 %v1893, 2147483648
    %v1895 = vmul.f32 %v1894, 1.442695
    %v1896 = vpow.pop %v1895
    %v1897 = vadd.f32 %v1896, 1.0
    %v1898 = vrcp.pop %v1897
    %v1899 = vmul.f32 1.0, %v1898
    %v1900 = vtanh.pop %v1893
    %v1902 = vrot.slane %v1807, 2
    %v1904 = vmul.f32 %v1899, %v1902
    %1906 = vrot.lane.b32.xlu0 %v1900, 64
    %v1907 = vpop.permute.xlu0 %1906
    %v1909 = vmul.f32 %v1899, %v1907
    %1911 = vrot.lane.b32.xlu0 %v1909, 32
    %v1912 = vpop.permute.xlu0 %1911
    %v1914 = vadd.f32 %v1904, %v1912
    %v1915 = vtanh.pop %v1914
    %1917 = vrot.lane.b32.xlu0 %v1915, 64
    %v1918 = vpop.permute.xlu0 %1917
    %v1920 = vmul.f32 %v1899, %v1918
    %v1922 = vrot.slane %v1920, 2
    %1923 = vrot.lane.b32.xlu0 %v1922, 32
    %v1924 = vpop.permute.xlu0 %1923
    %v1925 = vsel %vm258, %v1924, 0
    %1927 = vmatprep.subr.mxu0 0.0
    %1928 = vmatpush1.msra.mxu0 %v161
    %1929 = vmatprep.subr.mxu0 0.0
    %1930 = vmatpush1.msra.mxu0 %v162
    %1931 = vmatprep.subr.mxu0 0.0
    %1932 = vmatpush1.msra.mxu0 %v163
    %1933 = vmatprep.subr.mxu0 0.0
    %1934 = vmatpush1.msra.mxu0 %v164
    %1935 = vmatprep.subr.mxu0 0.0
    %1936 = vmatpush1.msra.mxu0 0.0
    %1937 = vmatprep.subr.mxu0 0.0
    %1938 = vmatpush1.msra.mxu0 0.0
    %1939 = vmatprep.subr.mxu0 0.0
    %1940 = vmatpush1.msra.mxu0 0.0
    %1941 = vmatprep.subr.mxu0 0.0
    %1942 = vmatpush1.msra.mxu0 0.0
    %1943 = vmatprep.subr.mxu0 0.0
    %1944 = vmatpush1.msra.mxu0 0.0
    %1945 = vmatprep.subr.mxu0 0.0
    %1946 = vmatpush1.msra.mxu0 0.0
    %1947 = vmatprep.subr.mxu0 0.0
    %1948 = vmatpush1.msra.mxu0 0.0
    %1949 = vmatprep.subr.mxu0 0.0
    %1950 = vmatpush1.msra.mxu0 0.0
    %1951 = vmatprep.subr.mxu0 0.0
    %1952 = vmatpush1.msra.mxu0 0.0
    %1953 = vmatprep.subr.mxu0 0.0
    %1954 = vmatpush1.msra.mxu0 0.0
    %1955 = vmatprep.subr.mxu0 0.0
    %1956 = vmatpush1.msra.mxu0 0.0
    %1957 = vmatprep.subr.mxu0 0.0
    %1958 = vmatpush1.msra.mxu0 0.0
    %1959 = vmatprep.subr.mxu0 0.0
    %1960 = vmatpush1.msra.mxu0 0.0
    %1961 = vmatprep.subr.mxu0 0.0
    %1962 = vmatpush1.msra.mxu0 0.0
    %1963 = vmatprep.subr.mxu0 0.0
    %1964 = vmatpush1.msra.mxu0 0.0
    %1965 = vmatprep.subr.mxu0 0.0
    %1966 = vmatpush1.msra.mxu0 0.0
    %1967 = vmatprep.subr.mxu0 0.0
    %1968 = vmatpush1.msra.mxu0 0.0
    %1969 = vmatprep.subr.mxu0 0.0
    %1970 = vmatpush1.msra.mxu0 0.0
    %1971 = vmatprep.subr.mxu0 0.0
    %1972 = vmatpush1.msra.mxu0 0.0
    %1973 = vmatprep.subr.mxu0 0.0
    %1974 = vmatpush1.msra.mxu0 0.0
    %1975 = vmatprep.subr.mxu0 0.0
    %1976 = vmatpush1.msra.mxu0 0.0
    %1977 = vmatprep.subr.mxu0 0.0
    %1978 = vmatpush1.msra.mxu0 0.0
    %1979 = vmatprep.subr.mxu0 0.0
    %1980 = vmatpush1.msra.mxu0 0.0
    %1981 = vmatprep.subr.mxu0 0.0
    %1982 = vmatpush1.msra.mxu0 0.0
    %1983 = vmatprep.subr.mxu0 0.0
    %1984 = vmatpush1.msra.mxu0 0.0
    %1985 = vmatprep.subr.mxu0 0.0
    %1986 = vmatpush1.msra.mxu0 0.0
    %1987 = vmatprep.subr.mxu0 0.0
    %1988 = vmatpush1.msra.mxu0 0.0
    %1989 = vmatprep.subr.mxu0 0.0
    %1990 = vmatpush1.msra.mxu0 0.0
    %1991 = vmatprep.mubr.f32.mxu0 0.0
    %1992 = vmatmul.mubr.f32.gmra.mrb[0].mxu0 %v1925
    %v1993 = vpop.f32.mrb[0].mxu0
    %v1994 = vadd.f32 0.0, %v1993
    %v1995 = vpop.f32.mrb[0].mxu0
    %1996 = vdwg.mxu0
    %v1997 = vadd.f32 %v1177, %v1994
    %v1998 = vxor.u32 %v1997, 2147483648
    %v1999 = vmul.f32 %v1998, 1.442695
    %v2000 = vpow.pop %v1999
    %v2001 = vadd.f32 %v2000, 1.0
    %v2002 = vrcp.pop %v2001
    %v2003 = vmul.f32 1.0, %v2002
    %v2004 = vtanh.pop %v1997
    %v2006 = vrot.slane %v1914, 2
    %v2008 = vmul.f32 %v2003, %v2006
    %2010 = vrot.lane.b32.xlu0 %v2004, 64
    %v2011 = vpop.permute.xlu0 %2010
    %v2013 = vmul.f32 %v2003, %v2011
    %2015 = vrot.lane.b32.xlu0 %v2013, 32
    %v2016 = vpop.permute.xlu0 %2015
    %v2018 = vadd.f32 %v2008, %v2016
    %v2019 = vtanh.pop %v2018
    %2021 = vrot.lane.b32.xlu0 %v2019, 64
    %v2022 = vpop.permute.xlu0 %2021
    %v2024 = vmul.f32 %v2003, %v2022
    %2027 = vrot.lane.b32.xlu0 %v2024, 64
    %v2028 = vpop.permute.xlu0 %2027
    %v2030 = vsel %vm258, %v359, %v2028
    %2031 = vrot.lane.b32.xlu0 %v462, 32
    %v2032 = vpop.permute.xlu0 %2031
    %2034 = vrot.lane.b32.xlu0 %v1920, 64
    %v2035 = vpop.permute.xlu0 %2034
    %v2037 = vsel %vm258, %v2032, %v2035
    %2038 = vrot.lane.b32.xlu0 %v569, 32
    %v2039 = vpop.permute.xlu0 %2038
    %2041 = vrot.lane.b32.xlu0 %v1813, 64
    %v2042 = vpop.permute.xlu0 %2041
    %v2044 = vsel %vm258, %v2039, %v2042
    %2045 = vrot.lane.b32.xlu0 %v676, 32
    %v2046 = vpop.permute.xlu0 %2045
    %2048 = vrot.lane.b32.xlu0 %v1706, 64
    %v2049 = vpop.permute.xlu0 %2048
    %v2051 = vsel %vm258, %v2046, %v2049
    %2053 = vrot.lane.b32.xlu0 %v1600, 64
    %v2054 = vpop.permute.xlu0 %2053
    %v2056 = vsel %vm258, %v783, %v2054
    %2057 = vrot.lane.b32.xlu0 %v886, 32
    %v2058 = vpop.permute.xlu0 %2057
    %2060 = vrot.lane.b32.xlu0 %v1496, 64
    %v2061 = vpop.permute.xlu0 %2060
    %v2063 = vsel %vm258, %v2058, %v2061
    %2064 = vrot.lane.b32.xlu0 %v993, 32
    %v2065 = vpop.permute.xlu0 %2064
    %2067 = vrot.lane.b32.xlu0 %v1389, 64
    %v2068 = vpop.permute.xlu0 %2067
    %v2070 = vsel %vm258, %v2065, %v2068
    %2072 = vrot.lane.b32.xlu0 %v1100, 32
    %v2073 = vpop.permute.xlu0 %2072
    %2075 = vrot.lane.b32.xlu0 %v1282, 64
    %v2076 = vpop.permute.xlu0 %2075
    %v2078 = vsel %vm258, %v2073, %v2076
    %v2079 = vsel %vm179, %v2030, %v2037
    %vm2080 = vcmask 1043456
    %v2081 = vsel %vm2080, %v2079, %v2044
    %vm2082 = vcmask 1045504
    %v2083 = vsel %vm2082, %v2081, %v2051
    %v2084 = vsel %vm179, %v2056, %v2063
    %v2085 = vsel %vm2080, %v2084, %v2070
    %v2086 = vsel %vm2082, %v2085, %v2078
    %v2087 = vld [vmem:[%s7] sm:$0xff]
    %v2088 = vld [vmem:[%s7 + $0x8] sm:$0xff]
    %v2089 = vld [vmem:[%s7 + $0x10] sm:$0xff]
    %v2090 = vld [vmem:[%s7 + $0x18] sm:$0xff]
    %v2091 = vld [vmem:[%s7 + $0x20] sm:$0xff]
    %v2092 = vld [vmem:[%s7 + $0x28] sm:$0xff]
    %v2093 = vld [vmem:[%s7 + $0x30] sm:$0xff]
    %v2094 = vld [vmem:[%s7 + $0x38] sm:$0xff]
    %v2095 = vld [vmem:[#allocation10] sm:$0xff]
    %v2096 = vld [vmem:[#allocation10 + $0x8] sm:$0xff]
    %v2097 = vld [vmem:[#allocation10 + $0x10] sm:$0xff]
    %v2098 = vld [vmem:[#allocation10 + $0x18] sm:$0xff]
    %v2099 = vld [vmem:[%s9] sm:$0x1]
    %v2100 = vld [vmem:[#allocation11] sm:$0xff]
    %v2101 = vld [vmem:[#allocation11 + $0x8] sm:$0xff]
    %v2102 = vld [vmem:[#allocation11 + $0x10] sm:$0xff]
    %v2103 = vld [vmem:[#allocation11 + $0x18] sm:$0xff]
    %v2104 = vld [vmem:[#allocation11 + $0x20] sm:$0xff]
    %v2105 = vld [vmem:[#allocation11 + $0x28] sm:$0xff]
    %v2106 = vld [vmem:[#allocation11 + $0x30] sm:$0xff]
    %v2107 = vld [vmem:[#allocation11 + $0x38] sm:$0xff]
    %v2108 = vld [vmem:[#allocation13] sm:$0xff]
    %v2109 = vld [vmem:[#allocation13 + $0x8] sm:$0xff]
    %v2110 = vld [vmem:[#allocation13 + $0x10] sm:$0xff]
    %v2111 = vld [vmem:[#allocation13 + $0x18] sm:$0xff]
    %v2112 = vld [vmem:[%s12] sm:$0x1]
    %v2114 = vlaneseq
    %v2115 = vshrl.u32 %v2114, 7
    %v2116 = vsub.s32 0, %v2115
    %v2117 = vrot.slane %v2099, %v2116
    %vm2119 = vcmask 523264
    %v2121 = vsel %vm2119, %v2083, 0
    %v2124 = vsel %vm2119, %v2086, 0
    %2126 = vmatprep.subr.mxu0 0.0
    %2127 = vmatpush1.msra.mxu0 %v2087
    %2128 = vmatprep.subr.mxu0 0.0
    %2129 = vmatpush1.msra.mxu0 %v2088
    %2130 = vmatprep.subr.mxu0 0.0
    %2131 = vmatpush1.msra.mxu0 %v2089
    %2132 = vmatprep.subr.mxu0 0.0
    %2133 = vmatpush1.msra.mxu0 %v2090
    %2134 = vmatprep.subr.mxu0 0.0
    %2135 = vmatpush1.msra.mxu0 %v2091
    %2136 = vmatprep.subr.mxu0 0.0
    %2137 = vmatpush1.msra.mxu0 %v2092
    %2138 = vmatprep.subr.mxu0 0.0
    %2139 = vmatpush1.msra.mxu0 %v2093
    %2140 = vmatprep.subr.mxu0 0.0
    %2141 = vmatpush1.msra.mxu0 %v2094
    %2142 = vmatprep.subr.mxu0 0.0
    %2143 = vmatpush1.msra.mxu0 0.0
    %2144 = vmatprep.subr.mxu0 0.0
    %2145 = vmatpush1.msra.mxu0 0.0
    %2146 = vmatprep.subr.mxu0 0.0
    %2147 = vmatpush1.msra.mxu0 0.0
    %2148 = vmatprep.subr.mxu0 0.0
    %2149 = vmatpush1.msra.mxu0 0.0
    %2150 = vmatprep.subr.mxu0 0.0
    %2151 = vmatpush1.msra.mxu0 0.0
    %2152 = vmatprep.subr.mxu0 0.0
    %2153 = vmatpush1.msra.mxu0 0.0
    %2154 = vmatprep.subr.mxu0 0.0
    %2155 = vmatpush1.msra.mxu0 0.0
    %2156 = vmatprep.subr.mxu0 0.0
    %2157 = vmatpush1.msra.mxu0 0.0
    %2158 = vmatprep.subr.mxu0 0.0
    %2159 = vmatpush1.msra.mxu0 0.0
    %2160 = vmatprep.subr.mxu0 0.0
    %2161 = vmatpush1.msra.mxu0 0.0
    %2162 = vmatprep.subr.mxu0 0.0
    %2163 = vmatpush1.msra.mxu0 0.0
    %2164 = vmatprep.subr.mxu0 0.0
    %2165 = vmatpush1.msra.mxu0 0.0
    %2166 = vmatprep.subr.mxu0 0.0
    %2167 = vmatpush1.msra.mxu0 0.0
    %2168 = vmatprep.subr.mxu0 0.0
    %2169 = vmatpush1.msra.mxu0 0.0
    %2170 = vmatprep.subr.mxu0 0.0
    %2171 = vmatpush1.msra.mxu0 0.0
    %2172 = vmatprep.subr.mxu0 0.0
    %2173 = vmatpush1.msra.mxu0 0.0
    %2174 = vmatprep.subr.mxu0 0.0
    %2175 = vmatpush1.msra.mxu0 0.0
    %2176 = vmatprep.subr.mxu0 0.0
    %2177 = vmatpush1.msra.mxu0 0.0
    %2178 = vmatprep.subr.mxu0 0.0
    %2179 = vmatpush1.msra.mxu0 0.0
    %2180 = vmatprep.subr.mxu0 0.0
    %2181 = vmatpush1.msra.mxu0 0.0
    %2182 = vmatprep.subr.mxu0 0.0
    %2183 = vmatpush1.msra.mxu0 0.0
    %2184 = vmatprep.subr.mxu0 0.0
    %2185 = vmatpush1.msra.mxu0 0.0
    %2186 = vmatprep.subr.mxu0 0.0
    %2187 = vmatpush1.msra.mxu0 0.0
    %2188 = vmatprep.subr.mxu0 0.0
    %2189 = vmatpush1.msra.mxu0 0.0
    %2190 = vmatprep.mubr.f32.mxu0 0.0
    %2191 = vmatmul.mubr.f32.gmra.mrb[0].mxu0 %v2121
    %v2192 = vpop.f32.mrb[0].mxu0
    %v2193 = vadd.f32 %v2117, %v2192
    %v2194 = vpop.f32.mrb[0].mxu0
    %2195 = vmatprep.mubr.f32.mxu0 0.0
    %2196 = vmatmul.mubr.f32.gmra.mrb[0].mxu0 %v2124
    %v2197 = vpop.f32.mrb[0].mxu0
    %v2198 = vadd.f32 %v2117, %v2197
    %v2199 = vpop.f32.mrb[0].mxu0
    %2200 = vdwg.mxu0
    %2201 = vmatprep.subr.mxu0 0.0
    %2202 = vmatpush1.msra.mxu0 %v2095
    %2203 = vmatprep.subr.mxu0 0.0
    %2204 = vmatpush1.msra.mxu0 %v2096
    %2205 = vmatprep.subr.mxu0 0.0
    %2206 = vmatpush1.msra.mxu0 %v2097
    %2207 = vmatprep.subr.mxu0 0.0
    %2208 = vmatpush1.msra.mxu0 %v2098
    %2209 = vmatprep.subr.mxu0 0.0
    %2210 = vmatpush1.msra.mxu0 0.0
    %2211 = vmatprep.subr.mxu0 0.0
    %2212 = vmatpush1.msra.mxu0 0.0
    %2213 = vmatprep.subr.mxu0 0.0
    %2214 = vmatpush1.msra.mxu0 0.0
    %2215 = vmatprep.subr.mxu0 0.0
    %2216 = vmatpush1.msra.mxu0 0.0
    %2217 = vmatprep.subr.mxu0 0.0
    %2218 = vmatpush1.msra.mxu0 0.0
    %2219 = vmatprep.subr.mxu0 0.0
    %2220 = vmatpush1.msra.mxu0 0.0
    %2221 = vmatprep.subr.mxu0 0.0
    %2222 = vmatpush1.msra.mxu0 0.0
    %2223 = vmatprep.subr.mxu0 0.0
    %2224 = vmatpush1.msra.mxu0 0.0
    %2225 = vmatprep.subr.mxu0 0.0
    %2226 = vmatpush1.msra.mxu0 0.0
    %2227 = vmatprep.subr.mxu0 0.0
    %2228 = vmatpush1.msra.mxu0 0.0
    %2229 = vmatprep.subr.mxu0 0.0
    %2230 = vmatpush1.msra.mxu0 0.0
    %2231 = vmatprep.subr.mxu0 0.0
    %2232 = vmatpush1.msra.mxu0 0.0
    %2233 = vmatprep.subr.mxu0 0.0
    %2234 = vmatpush1.msra.mxu0 0.0
    %2235 = vmatprep.subr.mxu0 0.0
    %2236 = vmatpush1.msra.mxu0 0.0
    %2237 = vmatprep.subr.mxu0 0.0
    %2238 = vmatpush1.msra.mxu0 0.0
    %2239 = vmatprep.subr.mxu0 0.0
    %2240 = vmatpush1.msra.mxu0 0.0
    %2241 = vmatprep.subr.mxu0 0.0
    %2242 = vmatpush1.msra.mxu0 0.0
    %2243 = vmatprep.subr.mxu0 0.0
    %2244 = vmatpush1.msra.mxu0 0.0
    %2245 = vmatprep.subr.mxu0 0.0
    %2246 = vmatpush1.msra.mxu0 0.0
    %2247 = vmatprep.subr.mxu0 0.0
    %2248 = vmatpush1.msra.mxu0 0.0
    %2249 = vmatprep.subr.mxu0 0.0
    %2250 = vmatpush1.msra.mxu0 0.0
    %2251 = vmatprep.subr.mxu0 0.0
    %2252 = vmatpush1.msra.mxu0 0.0
    %2253 = vmatprep.subr.mxu0 0.0
    %2254 = vmatpush1.msra.mxu0 0.0
    %2255 = vmatprep.subr.mxu0 0.0
    %2256 = vmatpush1.msra.mxu0 0.0
    %2257 = vmatprep.subr.mxu0 0.0
    %2258 = vmatpush1.msra.mxu0 0.0
    %2259 = vmatprep.subr.mxu0 0.0
    %2260 = vmatpush1.msra.mxu0 0.0
    %2261 = vmatprep.subr.mxu0 0.0
    %2262 = vmatpush1.msra.mxu0 0.0
    %2263 = vmatprep.subr.mxu0 0.0
    %2264 = vmatpush1.msra.mxu0 0.0
    %2265 = vmatprep.mubr.f32.mxu0 0.0
    %2266 = vmatmul.mubr.f32.gmra.mrb[0].mxu0 %v260
    %v2267 = vpop.f32.mrb[0].mxu0
    %v2268 = vadd.f32 0.0, %v2267
    %v2269 = vpop.f32.mrb[0].mxu0
    %2270 = vdwg.mxu0
    %v2271 = vadd.f32 %v2193, %v2268
    %v2272 = vxor.u32 %v2271, 2147483648
    %v2273 = vmul.f32 %v2272, 1.442695
    %v2274 = vpow.pop %v2273
    %v2275 = vadd.f32 %v2274, 1.0
    %v2276 = vrcp.pop %v2275
    %v2277 = vmul.f32 1.0, %v2276
    %v2278 = vtanh.pop %v2271
    %v2279 = vmul.f32 %v2277, 0.0
    %2281 = vrot.lane.b32.xlu0 %v2278, 64
    %v2282 = vpop.permute.xlu0 %2281
    %v2284 = vmul.f32 %v2277, %v2282
    %2286 = vrot.lane.b32.xlu0 %v2284, 32
    %v2287 = vpop.permute.xlu0 %2286
    %v2289 = vadd.f32 %v2279, %v2287
    %v2290 = vtanh.pop %v2289
    %2292 = vrot.lane.b32.xlu0 %v2290, 64
    %v2293 = vpop.permute.xlu0 %2292
    %v2295 = vmul.f32 %v2277, %v2293
    %2297 = vrot.lane.b32.xlu0 %v2295, 32
    %v2298 = vpop.permute.xlu0 %2297
    %v2299 = vsel %vm258, %v2298, 0
    %2301 = vmatprep.subr.mxu0 0.0
    %2302 = vmatpush1.msra.mxu0 %v2095
    %2303 = vmatprep.subr.mxu0 0.0
    %2304 = vmatpush1.msra.mxu0 %v2096
    %2305 = vmatprep.subr.mxu0 0.0
    %2306 = vmatpush1.msra.mxu0 %v2097
    %2307 = vmatprep.subr.mxu0 0.0
    %2308 = vmatpush1.msra.mxu0 %v2098
    %2309 = vmatprep.subr.mxu0 0.0
    %2310 = vmatpush1.msra.mxu0 0.0
    %2311 = vmatprep.subr.mxu0 0.0
    %2312 = vmatpush1.msra.mxu0 0.0
    %2313 = vmatprep.subr.mxu0 0.0
    %2314 = vmatpush1.msra.mxu0 0.0
    %2315 = vmatprep.subr.mxu0 0.0
    %2316 = vmatpush1.msra.mxu0 0.0
    %2317 = vmatprep.subr.mxu0 0.0
    %2318 = vmatpush1.msra.mxu0 0.0
    %2319 = vmatprep.subr.mxu0 0.0
    %2320 = vmatpush1.msra.mxu0 0.0
    %2321 = vmatprep.subr.mxu0 0.0
    %2322 = vmatpush1.msra.mxu0 0.0
    %2323 = vmatprep.subr.mxu0 0.0
    %2324 = vmatpush1.msra.mxu0 0.0
    %2325 = vmatprep.subr.mxu0 0.0
    %2326 = vmatpush1.msra.mxu0 0.0
    %2327 = vmatprep.subr.mxu0 0.0
    %2328 = vmatpush1.msra.mxu0 0.0
    %2329 = vmatprep.subr.mxu0 0.0
    %2330 = vmatpush1.msra.mxu0 0.0
    %2331 = vmatprep.subr.mxu0 0.0
    %2332 = vmatpush1.msra.mxu0 0.0
    %2333 = vmatprep.subr.mxu0 0.0
    %2334 = vmatpush1.msra.mxu0 0.0
    %2335 = vmatprep.subr.mxu0 0.0
    %2336 = vmatpush1.msra.mxu0 0.0
    %2337 = vmatprep.subr.mxu0 0.0
    %2338 = vmatpush1.msra.mxu0 0.0
    %2339 = vmatprep.subr.mxu0 0.0
    %2340 = vmatpush1.msra.mxu0 0.0
    %2341 = vmatprep.subr.mxu0 0.0
    %2342 = vmatpush1.msra.mxu0 0.0
    %2343 = vmatprep.subr.mxu0 0.0
    %2344 = vmatpush1.msra.mxu0 0.0
    %2345 = vmatprep.subr.mxu0 0.0
    %2346 = vmatpush1.msra.mxu0 0.0
    %2347 = vmatprep.subr.mxu0 0.0
    %2348 = vmatpush1.msra.mxu0 0.0
    %2349 = vmatprep.subr.mxu0 0.0
    %2350 = vmatpush1.msra.mxu0 0.0
    %2351 = vmatprep.subr.mxu0 0.0
    %2352 = vmatpush1.msra.mxu0 0.0
    %2353 = vmatprep.subr.mxu0 0.0
    %2354 = vmatpush1.msra.mxu0 0.0
    %2355 = vmatprep.subr.mxu0 0.0
    %2356 = vmatpush1.msra.mxu0 0.0
    %2357 = vmatprep.subr.mxu0 0.0
    %2358 = vmatpush1.msra.mxu0 0.0
    %2359 = vmatprep.subr.mxu0 0.0
    %2360 = vmatpush1.msra.mxu0 0.0
    %2361 = vmatprep.subr.mxu0 0.0
    %2362 = vmatpush1.msra.mxu0 0.0
    %2363 = vmatprep.subr.mxu0 0.0
    %2364 = vmatpush1.msra.mxu0 0.0
    %2365 = vmatprep.mubr.f32.mxu0 0.0
    %2366 = vmatmul.mubr.f32.gmra.mrb[0].mxu0 %v2299
    %v2367 = vpop.f32.mrb[0].mxu0
    %v2368 = vadd.f32 0.0, %v2367
    %v2369 = vpop.f32.mrb[0].mxu0
    %2370 = vdwg.mxu0
    %v2372 = vrot.slane %v2368, 6
    %v2374 = vadd.f32 %v2193, %v2372
    %v2375 = vxor.u32 %v2374, 2147483648
    %v2376 = vmul.f32 %v2375, 1.442695
    %v2377 = vpow.pop %v2376
    %v2378 = vadd.f32 %v2377, 1.0
    %v2379 = vrcp.pop %v2378
    %v2380 = vmul.f32 1.0, %v2379
    %v2381 = vtanh.pop %v2374
    %v2383 = vrot.slane %v2289, 6
    %v2385 = vmul.f32 %v2380, %v2383
    %2387 = vrot.lane.b32.xlu0 %v2381, 64
    %v2388 = vpop.permute.xlu0 %2387
    %v2390 = vmul.f32 %v2380, %v2388
    %2392 = vrot.lane.b32.xlu0 %v2390, 32
    %v2393 = vpop.permute.xlu0 %2392
    %v2395 = vadd.f32 %v2385, %v2393
    %v2396 = vtanh.pop %v2395
    %2398 = vrot.lane.b32.xlu0 %v2396, 64
    %v2399 = vpop.permute.xlu0 %2398
    %v2401 = vmul.f32 %v2380, %v2399
    %v2403 = vrot.slane %v2401, 2
    %2404 = vrot.lane.b32.xlu0 %v2403, 32
    %v2405 = vpop.permute.xlu0 %2404
    %v2406 = vsel %vm258, %v2405, 0
    %2408 = vmatprep.subr.mxu0 0.0
    %2409 = vmatpush1.msra.mxu0 %v2095
    %2410 = vmatprep.subr.mxu0 0.0
    %2411 = vmatpush1.msra.mxu0 %v2096
    %2412 = vmatprep.subr.mxu0 0.0
    %2413 = vmatpush1.msra.mxu0 %v2097
    %2414 = vmatprep.subr.mxu0 0.0
    %2415 = vmatpush1.msra.mxu0 %v2098
    %2416 = vmatprep.subr.mxu0 0.0
    %2417 = vmatpush1.msra.mxu0 0.0
    %2418 = vmatprep.subr.mxu0 0.0
    %2419 = vmatpush1.msra.mxu0 0.0
    %2420 = vmatprep.subr.mxu0 0.0
    %2421 = vmatpush1.msra.mxu0 0.0
    %2422 = vmatprep.subr.mxu0 0.0
    %2423 = vmatpush1.msra.mxu0 0.0
    %2424 = vmatprep.subr.mxu0 0.0
    %2425 = vmatpush1.msra.mxu0 0.0
    %2426 = vmatprep.subr.mxu0 0.0
    %2427 = vmatpush1.msra.mxu0 0.0
    %2428 = vmatprep.subr.mxu0 0.0
    %2429 = vmatpush1.msra.mxu0 0.0
    %2430 = vmatprep.subr.mxu0 0.0
    %2431 = vmatpush1.msra.mxu0 0.0
    %2432 = vmatprep.subr.mxu0 0.0
    %2433 = vmatpush1.msra.mxu0 0.0
    %2434 = vmatprep.subr.mxu0 0.0
    %2435 = vmatpush1.msra.mxu0 0.0
    %2436 = vmatprep.subr.mxu0 0.0
    %2437 = vmatpush1.msra.mxu0 0.0
    %2438 = vmatprep.subr.mxu0 0.0
    %2439 = vmatpush1.msra.mxu0 0.0
    %2440 = vmatprep.subr.mxu0 0.0
    %2441 = vmatpush1.msra.mxu0 0.0
    %2442 = vmatprep.subr.mxu0 0.0
    %2443 = vmatpush1.msra.mxu0 0.0
    %2444 = vmatprep.subr.mxu0 0.0
    %2445 = vmatpush1.msra.mxu0 0.0
    %2446 = vmatprep.subr.mxu0 0.0
    %2447 = vmatpush1.msra.mxu0 0.0
    %2448 = vmatprep.subr.mxu0 0.0
    %2449 = vmatpush1.msra.mxu0 0.0
    %2450 = vmatprep.subr.mxu0 0.0
    %2451 = vmatpush1.msra.mxu0 0.0
    %2452 = vmatprep.subr.mxu0 0.0
    %2453 = vmatpush1.msra.mxu0 0.0
    %2454 = vmatprep.subr.mxu0 0.0
    %2455 = vmatpush1.msra.mxu0 0.0
    %2456 = vmatprep.subr.mxu0 0.0
    %2457 = vmatpush1.msra.mxu0 0.0
    %2458 = vmatprep.subr.mxu0 0.0
    %2459 = vmatpush1.msra.mxu0 0.0
    %2460 = vmatprep.subr.mxu0 0.0
    %2461 = vmatpush1.msra.mxu0 0.0
    %2462 = vmatprep.subr.mxu0 0.0
    %2463 = vmatpush1.msra.mxu0 0.0
    %2464 = vmatprep.subr.mxu0 0.0
    %2465 = vmatpush1.msra.mxu0 0.0
    %2466 = vmatprep.subr.mxu0 0.0
    %2467 = vmatpush1.msra.mxu0 0.0
    %2468 = vmatprep.subr.mxu0 0.0
    %2469 = vmatpush1.msra.mxu0 0.0
    %2470 = vmatprep.subr.mxu0 0.0
    %2471 = vmatpush1.msra.mxu0 0.0
    %2472 = vmatprep.mubr.f32.mxu0 0.0
    %2473 = vmatmul.mubr.f32.gmra.mrb[0].mxu0 %v2406
    %v2474 = vpop.f32.mrb[0].mxu0
    %v2475 = vadd.f32 0.0, %v2474
    %v2476 = vpop.f32.mrb[0].mxu0
    %2477 = vdwg.mxu0
    %v2479 = vrot.slane %v2475, 4
    %v2481 = vadd.f32 %v2193, %v2479
    %v2482 = vxor.u32 %v2481, 2147483648
    %v2483 = vmul.f32 %v2482, 1.442695
    %v2484 = vpow.pop %v2483
    %v2485 = vadd.f32 %v2484, 1.0
    %v2486 = vrcp.pop %v2485
    %v2487 = vmul.f32 1.0, %v2486
    %v2488 = vtanh.pop %v2481
    %v2490 = vrot.slane %v2395, 6
    %v2492 = vmul.f32 %v2487, %v2490
    %2494 = vrot.lane.b32.xlu0 %v2488, 64
    %v2495 = vpop.permute.xlu0 %2494
    %v2497 = vmul.f32 %v2487, %v2495
    %2499 = vrot.lane.b32.xlu0 %v2497, 32
    %v2500 = vpop.permute.xlu0 %2499
    %v2502 = vadd.f32 %v2492, %v2500
    %v2503 = vtanh.pop %v2502
    %2505 = vrot.lane.b32.xlu0 %v2503, 64
    %v2506 = vpop.permute.xlu0 %2505
    %v2508 = vmul.f32 %v2487, %v2506
    %v2510 = vrot.slane %v2508, 4
    %2511 = vrot.lane.b32.xlu0 %v2510, 32
    %v2512 = vpop.permute.xlu0 %2511
    %v2513 = vsel %vm258, %v2512, 0
    %2515 = vmatprep.subr.mxu0 0.0
    %2516 = vmatpush1.msra.mxu0 %v2095
    %2517 = vmatprep.subr.mxu0 0.0
    %2518 = vmatpush1.msra.mxu0 %v2096
    %2519 = vmatprep.subr.mxu0 0.0
    %2520 = vmatpush1.msra.mxu0 %v2097
    %2521 = vmatprep.subr.mxu0 0.0
    %2522 = vmatpush1.msra.mxu0 %v2098
    %2523 = vmatprep.subr.mxu0 0.0
    %2524 = vmatpush1.msra.mxu0 0.0
    %2525 = vmatprep.subr.mxu0 0.0
    %2526 = vmatpush1.msra.mxu0 0.0
    %2527 = vmatprep.subr.mxu0 0.0
    %2528 = vmatpush1.msra.mxu0 0.0
    %2529 = vmatprep.subr.mxu0 0.0
    %2530 = vmatpush1.msra.mxu0 0.0
    %2531 = vmatprep.subr.mxu0 0.0
    %2532 = vmatpush1.msra.mxu0 0.0
    %2533 = vmatprep.subr.mxu0 0.0
    %2534 = vmatpush1.msra.mxu0 0.0
    %2535 = vmatprep.subr.mxu0 0.0
    %2536 = vmatpush1.msra.mxu0 0.0
    %2537 = vmatprep.subr.mxu0 0.0
    %2538 = vmatpush1.msra.mxu0 0.0
    %2539 = vmatprep.subr.mxu0 0.0
    %2540 = vmatpush1.msra.mxu0 0.0
    %2541 = vmatprep.subr.mxu0 0.0
    %2542 = vmatpush1.msra.mxu0 0.0
    %2543 = vmatprep.subr.mxu0 0.0
    %2544 = vmatpush1.msra.mxu0 0.0
    %2545 = vmatprep.subr.mxu0 0.0
    %2546 = vmatpush1.msra.mxu0 0.0
    %2547 = vmatprep.subr.mxu0 0.0
    %2548 = vmatpush1.msra.mxu0 0.0
    %2549 = vmatprep.subr.mxu0 0.0
    %2550 = vmatpush1.msra.mxu0 0.0
    %2551 = vmatprep.subr.mxu0 0.0
    %2552 = vmatpush1.msra.mxu0 0.0
    %2553 = vmatprep.subr.mxu0 0.0
    %2554 = vmatpush1.msra.mxu0 0.0
    %2555 = vmatprep.subr.mxu0 0.0
    %2556 = vmatpush1.msra.mxu0 0.0
    %2557 = vmatprep.subr.mxu0 0.0
    %2558 = vmatpush1.msra.mxu0 0.0
    %2559 = vmatprep.subr.mxu0 0.0
    %2560 = vmatpush1.msra.mxu0 0.0
    %2561 = vmatprep.subr.mxu0 0.0
    %2562 = vmatpush1.msra.mxu0 0.0
    %2563 = vmatprep.subr.mxu0 0.0
    %2564 = vmatpush1.msra.mxu0 0.0
    %2565 = vmatprep.subr.mxu0 0.0
    %2566 = vmatpush1.msra.mxu0 0.0
    %2567 = vmatprep.subr.mxu0 0.0
    %2568 = vmatpush1.msra.mxu0 0.0
    %2569 = vmatprep.subr.mxu0 0.0
    %2570 = vmatpush1.msra.mxu0 0.0
    %2571 = vmatprep.subr.mxu0 0.0
    %2572 = vmatpush1.msra.mxu0 0.0
    %2573 = vmatprep.subr.mxu0 0.0
    %2574 = vmatpush1.msra.mxu0 0.0
    %2575 = vmatprep.subr.mxu0 0.0
    %2576 = vmatpush1.msra.mxu0 0.0
    %2577 = vmatprep.subr.mxu0 0.0
    %2578 = vmatpush1.msra.mxu0 0.0
    %2579 = vmatprep.mubr.f32.mxu0 0.0
    %2580 = vmatmul.mubr.f32.gmra.mrb[0].mxu0 %v2513
    %v2581 = vpop.f32.mrb[0].mxu0
    %v2582 = vadd.f32 0.0, %v2581
    %v2583 = vpop.f32.mrb[0].mxu0
    %2584 = vdwg.mxu0
    %v2586 = vrot.slane %v2582, 2
    %v2588 = vadd.f32 %v2193, %v2586
    %v2589 = vxor.u32 %v2588, 2147483648
    %v2590 = vmul.f32 %v2589, 1.442695
    %v2591 = vpow.pop %v2590
    %v2592 = vadd.f32 %v2591, 1.0
    %v2593 = vrcp.pop %v2592
    %v2594 = vmul.f32 1.0, %v2593
    %v2595 = vtanh.pop %v2588
    %v2597 = vrot.slane %v2502, 6
    %v2599 = vmul.f32 %v2594, %v2597
    %2601 = vrot.lane.b32.xlu0 %v2595, 64
    %v2602 = vpop.permute.xlu0 %2601
    %v2604 = vmul.f32 %v2594, %v2602
    %2606 = vrot.lane.b32.xlu0 %v2604, 32
    %v2607 = vpop.permute.xlu0 %2606
    %v2609 = vadd.f32 %v2599, %v2607
    %v2610 = vtanh.pop %v2609
    %2612 = vrot.lane.b32.xlu0 %v2610, 64
    %v2613 = vpop.permute.xlu0 %2612
    %v2615 = vmul.f32 %v2594, %v2613
    %v2617 = vrot.slane %v2615, 6
    %2618 = vrot.lane.b32.xlu0 %v2617, 32
    %v2619 = vpop.permute.xlu0 %2618
    %v2620 = vsel %vm258, %v2619, 0
    %2622 = vmatprep.subr.mxu0 0.0
    %2623 = vmatpush1.msra.mxu0 %v2095
    %2624 = vmatprep.subr.mxu0 0.0
    %2625 = vmatpush1.msra.mxu0 %v2096
    %2626 = vmatprep.subr.mxu0 0.0
    %2627 = vmatpush1.msra.mxu0 %v2097
    %2628 = vmatprep.subr.mxu0 0.0
    %2629 = vmatpush1.msra.mxu0 %v2098
    %2630 = vmatprep.subr.mxu0 0.0
    %2631 = vmatpush1.msra.mxu0 0.0
    %2632 = vmatprep.subr.mxu0 0.0
    %2633 = vmatpush1.msra.mxu0 0.0
    %2634 = vmatprep.subr.mxu0 0.0
    %2635 = vmatpush1.msra.mxu0 0.0
    %2636 = vmatprep.subr.mxu0 0.0
    %2637 = vmatpush1.msra.mxu0 0.0
    %2638 = vmatprep.subr.mxu0 0.0
    %2639 = vmatpush1.msra.mxu0 0.0
    %2640 = vmatprep.subr.mxu0 0.0
    %2641 = vmatpush1.msra.mxu0 0.0
    %2642 = vmatprep.subr.mxu0 0.0
    %2643 = vmatpush1.msra.mxu0 0.0
    %2644 = vmatprep.subr.mxu0 0.0
    %2645 = vmatpush1.msra.mxu0 0.0
    %2646 = vmatprep.subr.mxu0 0.0
    %2647 = vmatpush1.msra.mxu0 0.0
    %2648 = vmatprep.subr.mxu0 0.0
    %2649 = vmatpush1.msra.mxu0 0.0
    %2650 = vmatprep.subr.mxu0 0.0
    %2651 = vmatpush1.msra.mxu0 0.0
    %2652 = vmatprep.subr.mxu0 0.0
    %2653 = vmatpush1.msra.mxu0 0.0
    %2654 = vmatprep.subr.mxu0 0.0
    %2655 = vmatpush1.msra.mxu0 0.0
    %2656 = vmatprep.subr.mxu0 0.0
    %2657 = vmatpush1.msra.mxu0 0.0
    %2658 = vmatprep.subr.mxu0 0.0
    %2659 = vmatpush1.msra.mxu0 0.0
    %2660 = vmatprep.subr.mxu0 0.0
    %2661 = vmatpush1.msra.mxu0 0.0
    %2662 = vmatprep.subr.mxu0 0.0
    %2663 = vmatpush1.msra.mxu0 0.0
    %2664 = vmatprep.subr.mxu0 0.0
    %2665 = vmatpush1.msra.mxu0 0.0
    %2666 = vmatprep.subr.mxu0 0.0
    %2667 = vmatpush1.msra.mxu0 0.0
    %2668 = vmatprep.subr.mxu0 0.0
    %2669 = vmatpush1.msra.mxu0 0.0
    %2670 = vmatprep.subr.mxu0 0.0
    %2671 = vmatpush1.msra.mxu0 0.0
    %2672 = vmatprep.subr.mxu0 0.0
    %2673 = vmatpush1.msra.mxu0 0.0
    %2674 = vmatprep.subr.mxu0 0.0
    %2675 = vmatpush1.msra.mxu0 0.0
    %2676 = vmatprep.subr.mxu0 0.0
    %2677 = vmatpush1.msra.mxu0 0.0
    %2678 = vmatprep.subr.mxu0 0.0
    %2679 = vmatpush1.msra.mxu0 0.0
    %2680 = vmatprep.subr.mxu0 0.0
    %2681 = vmatpush1.msra.mxu0 0.0
    %2682 = vmatprep.subr.mxu0 0.0
    %2683 = vmatpush1.msra.mxu0 0.0
    %2684 = vmatprep.subr.mxu0 0.0
    %2685 = vmatpush1.msra.mxu0 0.0
    %2686 = vmatprep.mubr.f32.mxu0 0.0
    %2687 = vmatmul.mubr.f32.gmra.mrb[0].mxu0 %v2620
    %v2688 = vpop.f32.mrb[0].mxu0
    %v2689 = vadd.f32 0.0, %v2688
    %v2690 = vpop.f32.mrb[0].mxu0
    %2691 = vdwg.mxu0
    %v2692 = vadd.f32 %v2198, %v2689
    %v2693 = vxor.u32 %v2692, 2147483648
    %v2694 = vmul.f32 %v2693, 1.442695
    %v2695 = vpow.pop %v2694
    %v2696 = vadd.f32 %v2695, 1.0
    %v2697 = vrcp.pop %v2696
    %v2698 = vmul.f32 1.0, %v2697
    %v2699 = vtanh.pop %v2692
    %v2701 = vrot.slane %v2609, 6
    %v2703 = vmul.f32 %v2698, %v2701
    %2705 = vrot.lane.b32.xlu0 %v2699, 64
    %v2706 = vpop.permute.xlu0 %2705
    %v2708 = vmul.f32 %v2698, %v2706
    %2710 = vrot.lane.b32.xlu0 %v2708, 32
    %v2711 = vpop.permute.xlu0 %2710
    %v2713 = vadd.f32 %v2703, %v2711
    %v2714 = vtanh.pop %v2713
    %2716 = vrot.lane.b32.xlu0 %v2714, 64
    %v2717 = vpop.permute.xlu0 %2716
    %v2719 = vmul.f32 %v2698, %v2717
    %2721 = vrot.lane.b32.xlu0 %v2719, 32
    %v2722 = vpop.permute.xlu0 %2721
    %v2723 = vsel %vm258, %v2722, 0
    %2725 = vmatprep.subr.mxu0 0.0
    %2726 = vmatpush1.msra.mxu0 %v2095
    %2727 = vmatprep.subr.mxu0 0.0
    %2728 = vmatpush1.msra.mxu0 %v2096
    %2729 = vmatprep.subr.mxu0 0.0
    %2730 = vmatpush1.msra.mxu0 %v2097
    %2731 = vmatprep.subr.mxu0 0.0
    %2732 = vmatpush1.msra.mxu0 %v2098
    %2733 = vmatprep.subr.mxu0 0.0
    %2734 = vmatpush1.msra.mxu0 0.0
    %2735 = vmatprep.subr.mxu0 0.0
    %2736 = vmatpush1.msra.mxu0 0.0
    %2737 = vmatprep.subr.mxu0 0.0
    %2738 = vmatpush1.msra.mxu0 0.0
    %2739 = vmatprep.subr.mxu0 0.0
    %2740 = vmatpush1.msra.mxu0 0.0
    %2741 = vmatprep.subr.mxu0 0.0
    %2742 = vmatpush1.msra.mxu0 0.0
    %2743 = vmatprep.subr.mxu0 0.0
    %2744 = vmatpush1.msra.mxu0 0.0
    %2745 = vmatprep.subr.mxu0 0.0
    %2746 = vmatpush1.msra.mxu0 0.0
    %2747 = vmatprep.subr.mxu0 0.0
    %2748 = vmatpush1.msra.mxu0 0.0
    %2749 = vmatprep.subr.mxu0 0.0
    %2750 = vmatpush1.msra.mxu0 0.0
    %2751 = vmatprep.subr.mxu0 0.0
    %2752 = vmatpush1.msra.mxu0 0.0
    %2753 = vmatprep.subr.mxu0 0.0
    %2754 = vmatpush1.msra.mxu0 0.0
    %2755 = vmatprep.subr.mxu0 0.0
    %2756 = vmatpush1.msra.mxu0 0.0
    %2757 = vmatprep.subr.mxu0 0.0
    %2758 = vmatpush1.msra.mxu0 0.0
    %2759 = vmatprep.subr.mxu0 0.0
    %2760 = vmatpush1.msra.mxu0 0.0
    %2761 = vmatprep.subr.mxu0 0.0
    %2762 = vmatpush1.msra.mxu0 0.0
    %2763 = vmatprep.subr.mxu0 0.0
    %2764 = vmatpush1.msra.mxu0 0.0
    %2765 = vmatprep.subr.mxu0 0.0
    %2766 = vmatpush1.msra.mxu0 0.0
    %2767 = vmatprep.subr.mxu0 0.0
    %2768 = vmatpush1.msra.mxu0 0.0
    %2769 = vmatprep.subr.mxu0 0.0
    %2770 = vmatpush1.msra.mxu0 0.0
    %2771 = vmatprep.subr.mxu0 0.0
    %2772 = vmatpush1.msra.mxu0 0.0
    %2773 = vmatprep.subr.mxu0 0.0
    %2774 = vmatpush1.msra.mxu0 0.0
    %2775 = vmatprep.subr.mxu0 0.0
    %2776 = vmatpush1.msra.mxu0 0.0
    %2777 = vmatprep.subr.mxu0 0.0
    %2778 = vmatpush1.msra.mxu0 0.0
    %2779 = vmatprep.subr.mxu0 0.0
    %2780 = vmatpush1.msra.mxu0 0.0
    %2781 = vmatprep.subr.mxu0 0.0
    %2782 = vmatpush1.msra.mxu0 0.0
    %2783 = vmatprep.subr.mxu0 0.0
    %2784 = vmatpush1.msra.mxu0 0.0
    %2785 = vmatprep.subr.mxu0 0.0
    %2786 = vmatpush1.msra.mxu0 0.0
    %2787 = vmatprep.subr.mxu0 0.0
    %2788 = vmatpush1.msra.mxu0 0.0
    %2789 = vmatprep.mubr.f32.mxu0 0.0
    %2790 = vmatmul.mubr.f32.gmra.mrb[0].mxu0 %v2723
    %v2791 = vpop.f32.mrb[0].mxu0
    %v2792 = vadd.f32 0.0, %v2791
    %v2793 = vpop.f32.mrb[0].mxu0
    %2794 = vdwg.mxu0
    %v2796 = vrot.slane %v2792, 6
    %v2798 = vadd.f32 %v2198, %v2796
    %v2799 = vxor.u32 %v2798, 2147483648
    %v2800 = vmul.f32 %v2799, 1.442695
    %v2801 = vpow.pop %v2800
    %v2802 = vadd.f32 %v2801, 1.0
    %v2803 = vrcp.pop %v2802
    %v2804 = vmul.f32 1.0, %v2803
    %v2805 = vtanh.pop %v2798
    %v2807 = vrot.slane %v2713, 6
    %v2809 = vmul.f32 %v2804, %v2807
    %2811 = vrot.lane.b32.xlu0 %v2805, 64
    %v2812 = vpop.permute.xlu0 %2811
    %v2814 = vmul.f32 %v2804, %v2812
    %2816 = vrot.lane.b32.xlu0 %v2814, 32
    %v2817 = vpop.permute.xlu0 %2816
    %v2819 = vadd.f32 %v2809, %v2817
    %v2820 = vtanh.pop %v2819
    %2822 = vrot.lane.b32.xlu0 %v2820, 64
    %v2823 = vpop.permute.xlu0 %2822
    %v2825 = vmul.f32 %v2804, %v2823
    %v2827 = vrot.slane %v2825, 2
    %2828 = vrot.lane.b32.xlu0 %v2827, 32
    %v2829 = vpop.permute.xlu0 %2828
    %v2830 = vsel %vm258, %v2829, 0
    %2832 = vmatprep.subr.mxu0 0.0
    %2833 = vmatpush1.msra.mxu0 %v2095
    %2834 = vmatprep.subr.mxu0 0.0
    %2835 = vmatpush1.msra.mxu0 %v2096
    %2836 = vmatprep.subr.mxu0 0.0
    %2837 = vmatpush1.msra.mxu0 %v2097
    %2838 = vmatprep.subr.mxu0 0.0
    %2839 = vmatpush1.msra.mxu0 %v2098
    %2840 = vmatprep.subr.mxu0 0.0
    %2841 = vmatpush1.msra.mxu0 0.0
    %2842 = vmatprep.subr.mxu0 0.0
    %2843 = vmatpush1.msra.mxu0 0.0
    %2844 = vmatprep.subr.mxu0 0.0
    %2845 = vmatpush1.msra.mxu0 0.0
    %2846 = vmatprep.subr.mxu0 0.0
    %2847 = vmatpush1.msra.mxu0 0.0
    %2848 = vmatprep.subr.mxu0 0.0
    %2849 = vmatpush1.msra.mxu0 0.0
    %2850 = vmatprep.subr.mxu0 0.0
    %2851 = vmatpush1.msra.mxu0 0.0
    %2852 = vmatprep.subr.mxu0 0.0
    %2853 = vmatpush1.msra.mxu0 0.0
    %2854 = vmatprep.subr.mxu0 0.0
    %2855 = vmatpush1.msra.mxu0 0.0
    %2856 = vmatprep.subr.mxu0 0.0
    %2857 = vmatpush1.msra.mxu0 0.0
    %2858 = vmatprep.subr.mxu0 0.0
    %2859 = vmatpush1.msra.mxu0 0.0
    %2860 = vmatprep.subr.mxu0 0.0
    %2861 = vmatpush1.msra.mxu0 0.0
    %2862 = vmatprep.subr.mxu0 0.0
    %2863 = vmatpush1.msra.mxu0 0.0
    %2864 = vmatprep.subr.mxu0 0.0
    %2865 = vmatpush1.msra.mxu0 0.0
    %2866 = vmatprep.subr.mxu0 0.0
    %2867 = vmatpush1.msra.mxu0 0.0
    %2868 = vmatprep.subr.mxu0 0.0
    %2869 = vmatpush1.msra.mxu0 0.0
    %2870 = vmatprep.subr.mxu0 0.0
    %2871 = vmatpush1.msra.mxu0 0.0
    %2872 = vmatprep.subr.mxu0 0.0
    %2873 = vmatpush1.msra.mxu0 0.0
    %2874 = vmatprep.subr.mxu0 0.0
    %2875 = vmatpush1.msra.mxu0 0.0
    %2876 = vmatprep.subr.mxu0 0.0
    %2877 = vmatpush1.msra.mxu0 0.0
    %2878 = vmatprep.subr.mxu0 0.0
    %2879 = vmatpush1.msra.mxu0 0.0
    %2880 = vmatprep.subr.mxu0 0.0
    %2881 = vmatpush1.msra.mxu0 0.0
    %2882 = vmatprep.subr.mxu0 0.0
    %2883 = vmatpush1.msra.mxu0 0.0
    %2884 = vmatprep.subr.mxu0 0.0
    %2885 = vmatpush1.msra.mxu0 0.0
    %2886 = vmatprep.subr.mxu0 0.0
    %2887 = vmatpush1.msra.mxu0 0.0
    %2888 = vmatprep.subr.mxu0 0.0
    %2889 = vmatpush1.msra.mxu0 0.0
    %2890 = vmatprep.subr.mxu0 0.0
    %2891 = vmatpush1.msra.mxu0 0.0
    %2892 = vmatprep.subr.mxu0 0.0
    %2893 = vmatpush1.msra.mxu0 0.0
    %2894 = vmatprep.subr.mxu0 0.0
    %2895 = vmatpush1.msra.mxu0 0.0
    %2896 = vmatprep.mubr.f32.mxu0 0.0
    %2897 = vmatmul.mubr.f32.gmra.mrb[0].mxu0 %v2830
    %v2898 = vpop.f32.mrb[0].mxu0
    %v2899 = vadd.f32 0.0, %v2898
    %v2900 = vpop.f32.mrb[0].mxu0
    %2901 = vdwg.mxu0
    %v2903 = vrot.slane %v2899, 4
    %v2905 = vadd.f32 %v2198, %v2903
    %v2906 = vxor.u32 %v2905, 2147483648
    %v2907 = vmul.f32 %v2906, 1.442695
    %v2908 = vpow.pop %v2907
    %v2909 = vadd.f32 %v2908, 1.0
    %v2910 = vrcp.pop %v2909
    %v2911 = vmul.f32 1.0, %v2910
    %v2912 = vtanh.pop %v2905
    %v2914 = vrot.slane %v2819, 6
    %v2916 = vmul.f32 %v2911, %v2914
    %2918 = vrot.lane.b32.xlu0 %v2912, 64
    %v2919 = vpop.permute.xlu0 %2918
    %v2921 = vmul.f32 %v2911, %v2919
    %2923 = vrot.lane.b32.xlu0 %v2921, 32
    %v2924 = vpop.permute.xlu0 %2923
    %v2926 = vadd.f32 %v2916, %v2924
    %v2927 = vtanh.pop %v2926
    %2929 = vrot.lane.b32.xlu0 %v2927, 64
    %v2930 = vpop.permute.xlu0 %2929
    %v2932 = vmul.f32 %v2911, %v2930
    %v2934 = vrot.slane %v2932, 4
    %2935 = vrot.lane.b32.xlu0 %v2934, 32
    %v2936 = vpop.permute.xlu0 %2935
    %v2937 = vsel %vm258, %v2936, 0
    %2939 = vmatprep.subr.mxu0 0.0
    %2940 = vmatpush1.msra.mxu0 %v2095
    %2941 = vmatprep.subr.mxu0 0.0
    %2942 = vmatpush1.msra.mxu0 %v2096
    %2943 = vmatprep.subr.mxu0 0.0
    %2944 = vmatpush1.msra.mxu0 %v2097
    %2945 = vmatprep.subr.mxu0 0.0
    %2946 = vmatpush1.msra.mxu0 %v2098
    %2947 = vmatprep.subr.mxu0 0.0
    %2948 = vmatpush1.msra.mxu0 0.0
    %2949 = vmatprep.subr.mxu0 0.0
    %2950 = vmatpush1.msra.mxu0 0.0
    %2951 = vmatprep.subr.mxu0 0.0
    %2952 = vmatpush1.msra.mxu0 0.0
    %2953 = vmatprep.subr.mxu0 0.0
    %2954 = vmatpush1.msra.mxu0 0.0
    %2955 = vmatprep.subr.mxu0 0.0
    %2956 = vmatpush1.msra.mxu0 0.0
    %2957 = vmatprep.subr.mxu0 0.0
    %2958 = vmatpush1.msra.mxu0 0.0
    %2959 = vmatprep.subr.mxu0 0.0
    %2960 = vmatpush1.msra.mxu0 0.0
    %2961 = vmatprep.subr.mxu0 0.0
    %2962 = vmatpush1.msra.mxu0 0.0
    %2963 = vmatprep.subr.mxu0 0.0
    %2964 = vmatpush1.msra.mxu0 0.0
    %2965 = vmatprep.subr.mxu0 0.0
    %2966 = vmatpush1.msra.mxu0 0.0
    %2967 = vmatprep.subr.mxu0 0.0
    %2968 = vmatpush1.msra.mxu0 0.0
    %2969 = vmatprep.subr.mxu0 0.0
    %2970 = vmatpush1.msra.mxu0 0.0
    %2971 = vmatprep.subr.mxu0 0.0
    %2972 = vmatpush1.msra.mxu0 0.0
    %2973 = vmatprep.subr.mxu0 0.0
    %2974 = vmatpush1.msra.mxu0 0.0
    %2975 = vmatprep.subr.mxu0 0.0
    %2976 = vmatpush1.msra.mxu0 0.0
    %2977 = vmatprep.subr.mxu0 0.0
    %2978 = vmatpush1.msra.mxu0 0.0
    %2979 = vmatprep.subr.mxu0 0.0
    %2980 = vmatpush1.msra.mxu0 0.0
    %2981 = vmatprep.subr.mxu0 0.0
    %2982 = vmatpush1.msra.mxu0 0.0
    %2983 = vmatprep.subr.mxu0 0.0
    %2984 = vmatpush1.msra.mxu0 0.0
    %2985 = vmatprep.subr.mxu0 0.0
    %2986 = vmatpush1.msra.mxu0 0.0
    %2987 = vmatprep.subr.mxu0 0.0
    %2988 = vmatpush1.msra.mxu0 0.0
    %2989 = vmatprep.subr.mxu0 0.0
    %2990 = vmatpush1.msra.mxu0 0.0
    %2991 = vmatprep.subr.mxu0 0.0
    %2992 = vmatpush1.msra.mxu0 0.0
    %2993 = vmatprep.subr.mxu0 0.0
    %2994 = vmatpush1.msra.mxu0 0.0
    %2995 = vmatprep.subr.mxu0 0.0
    %2996 = vmatpush1.msra.mxu0 0.0
    %2997 = vmatprep.subr.mxu0 0.0
    %2998 = vmatpush1.msra.mxu0 0.0
    %2999 = vmatprep.subr.mxu0 0.0
    %3000 = vmatpush1.msra.mxu0 0.0
    %3001 = vmatprep.subr.mxu0 0.0
    %3002 = vmatpush1.msra.mxu0 0.0
    %3003 = vmatprep.mubr.f32.mxu0 0.0
    %3004 = vmatmul.mubr.f32.gmra.mrb[0].mxu0 %v2937
    %v3005 = vpop.f32.mrb[0].mxu0
    %v3006 = vadd.f32 0.0, %v3005
    %v3007 = vpop.f32.mrb[0].mxu0
    %3008 = vdwg.mxu0
    %v3010 = vrot.slane %v3006, 2
    %v3012 = vadd.f32 %v2198, %v3010
    %v3013 = vxor.u32 %v3012, 2147483648
    %v3014 = vmul.f32 %v3013, 1.442695
    %v3015 = vpow.pop %v3014
    %v3016 = vadd.f32 %v3015, 1.0
    %v3017 = vrcp.pop %v3016
    %v3018 = vmul.f32 1.0, %v3017
    %v3019 = vtanh.pop %v3012
    %v3021 = vrot.slane %v2926, 6
    %v3023 = vmul.f32 %v3018, %v3021
    %3025 = vrot.lane.b32.xlu0 %v3019, 64
    %v3026 = vpop.permute.xlu0 %3025
    %v3028 = vmul.f32 %v3018, %v3026
    %3030 = vrot.lane.b32.xlu0 %v3028, 32
    %v3031 = vpop.permute.xlu0 %3030
    %v3033 = vadd.f32 %v3023, %v3031
    %v3034 = vtanh.pop %v3033
    %3036 = vrot.lane.b32.xlu0 %v3034, 64
    %v3037 = vpop.permute.xlu0 %3036
    %v3039 = vmul.f32 %v3018, %v3037
    %v3041 = vlaneseq
    %v3042 = vshrl.u32 %v3041, 7
    %v3043 = vsub.s32 0, %v3042
    %v3044 = vrot.slane %v2112, %v3043
    %3046 = vmatprep.subr.mxu0 0.0
    %3047 = vmatpush1.msra.mxu0 %v2100
    %3048 = vmatprep.subr.mxu0 0.0
    %3049 = vmatpush1.msra.mxu0 %v2101
    %3050 = vmatprep.subr.mxu0 0.0
    %3051 = vmatpush1.msra.mxu0 %v2102
    %3052 = vmatprep.subr.mxu0 0.0
    %3053 = vmatpush1.msra.mxu0 %v2103
    %3054 = vmatprep.subr.mxu0 0.0
    %3055 = vmatpush1.msra.mxu0 %v2104
    %3056 = vmatprep.subr.mxu0 0.0
    %3057 = vmatpush1.msra.mxu0 %v2105
    %3058 = vmatprep.subr.mxu0 0.0
    %3059 = vmatpush1.msra.mxu0 %v2106
    %3060 = vmatprep.subr.mxu0 0.0
    %3061 = vmatpush1.msra.mxu0 %v2107
    %3062 = vmatprep.subr.mxu0 0.0
    %3063 = vmatpush1.msra.mxu0 0.0
    %3064 = vmatprep.subr.mxu0 0.0
    %3065 = vmatpush1.msra.mxu0 0.0
    %3066 = vmatprep.subr.mxu0 0.0
    %3067 = vmatpush1.msra.mxu0 0.0
    %3068 = vmatprep.subr.mxu0 0.0
    %3069 = vmatpush1.msra.mxu0 0.0
    %3070 = vmatprep.subr.mxu0 0.0
    %3071 = vmatpush1.msra.mxu0 0.0
    %3072 = vmatprep.subr.mxu0 0.0
    %3073 = vmatpush1.msra.mxu0 0.0
    %3074 = vmatprep.subr.mxu0 0.0
    %3075 = vmatpush1.msra.mxu0 0.0
    %3076 = vmatprep.subr.mxu0 0.0
    %3077 = vmatpush1.msra.mxu0 0.0
    %3078 = vmatprep.subr.mxu0 0.0
    %3079 = vmatpush1.msra.mxu0 0.0
    %3080 = vmatprep.subr.mxu0 0.0
    %3081 = vmatpush1.msra.mxu0 0.0
    %3082 = vmatprep.subr.mxu0 0.0
    %3083 = vmatpush1.msra.mxu0 0.0
    %3084 = vmatprep.subr.mxu0 0.0
    %3085 = vmatpush1.msra.mxu0 0.0
    %3086 = vmatprep.subr.mxu0 0.0
    %3087 = vmatpush1.msra.mxu0 0.0
    %3088 = vmatprep.subr.mxu0 0.0
    %3089 = vmatpush1.msra.mxu0 0.0
    %3090 = vmatprep.subr.mxu0 0.0
    %3091 = vmatpush1.msra.mxu0 0.0
    %3092 = vmatprep.subr.mxu0 0.0
    %3093 = vmatpush1.msra.mxu0 0.0
    %3094 = vmatprep.subr.mxu0 0.0
    %3095 = vmatpush1.msra.mxu0 0.0
    %3096 = vmatprep.subr.mxu0 0.0
    %3097 = vmatpush1.msra.mxu0 0.0
    %3098 = vmatprep.subr.mxu0 0.0
    %3099 = vmatpush1.msra.mxu0 0.0
    %3100 = vmatprep.subr.mxu0 0.0
    %3101 = vmatpush1.msra.mxu0 0.0
    %3102 = vmatprep.subr.mxu0 0.0
    %3103 = vmatpush1.msra.mxu0 0.0
    %3104 = vmatprep.subr.mxu0 0.0
    %3105 = vmatpush1.msra.mxu0 0.0
    %3106 = vmatprep.subr.mxu0 0.0
    %3107 = vmatpush1.msra.mxu0 0.0
    %3108 = vmatprep.subr.mxu0 0.0
    %3109 = vmatpush1.msra.mxu0 0.0
    %3110 = vmatprep.mubr.f32.mxu0 0.0
    %3111 = vmatmul.mubr.f32.gmra.mrb[0].mxu0 %v2121
    %v3112 = vpop.f32.mrb[0].mxu0
    %v3113 = vadd.f32 %v3044, %v3112
    %v3114 = vpop.f32.mrb[0].mxu0
    %3115 = vmatprep.mubr.f32.mxu0 0.0
    %3116 = vmatmul.mubr.f32.gmra.mrb[0].mxu0 %v2124
    %v3117 = vpop.f32.mrb[0].mxu0
    %v3118 = vadd.f32 %v3044, %v3117
    %v3119 = vpop.f32.mrb[0].mxu0
    %3120 = vdwg.mxu0
    %3121 = vmatprep.subr.mxu0 0.0
    %3122 = vmatpush1.msra.mxu0 %v2108
    %3123 = vmatprep.subr.mxu0 0.0
    %3124 = vmatpush1.msra.mxu0 %v2109
    %3125 = vmatprep.subr.mxu0 0.0
    %3126 = vmatpush1.msra.mxu0 %v2110
    %3127 = vmatprep.subr.mxu0 0.0
    %3128 = vmatpush1.msra.mxu0 %v2111
    %3129 = vmatprep.subr.mxu0 0.0
    %3130 = vmatpush1.msra.mxu0 0.0
    %3131 = vmatprep.subr.mxu0 0.0
    %3132 = vmatpush1.msra.mxu0 0.0
    %3133 = vmatprep.subr.mxu0 0.0
    %3134 = vmatpush1.msra.mxu0 0.0
    %3135 = vmatprep.subr.mxu0 0.0
    %3136 = vmatpush1.msra.mxu0 0.0
    %3137 = vmatprep.subr.mxu0 0.0
    %3138 = vmatpush1.msra.mxu0 0.0
    %3139 = vmatprep.subr.mxu0 0.0
    %3140 = vmatpush1.msra.mxu0 0.0
    %3141 = vmatprep.subr.mxu0 0.0
    %3142 = vmatpush1.msra.mxu0 0.0
    %3143 = vmatprep.subr.mxu0 0.0
    %3144 = vmatpush1.msra.mxu0 0.0
    %3145 = vmatprep.subr.mxu0 0.0
    %3146 = vmatpush1.msra.mxu0 0.0
    %3147 = vmatprep.subr.mxu0 0.0
    %3148 = vmatpush1.msra.mxu0 0.0
    %3149 = vmatprep.subr.mxu0 0.0
    %3150 = vmatpush1.msra.mxu0 0.0
    %3151 = vmatprep.subr.mxu0 0.0
    %3152 = vmatpush1.msra.mxu0 0.0
    %3153 = vmatprep.subr.mxu0 0.0
    %3154 = vmatpush1.msra.mxu0 0.0
    %3155 = vmatprep.subr.mxu0 0.0
    %3156 = vmatpush1.msra.mxu0 0.0
    %3157 = vmatprep.subr.mxu0 0.0
    %3158 = vmatpush1.msra.mxu0 0.0
    %3159 = vmatprep.subr.mxu0 0.0
    %3160 = vmatpush1.msra.mxu0 0.0
    %3161 = vmatprep.subr.mxu0 0.0
    %3162 = vmatpush1.msra.mxu0 0.0
    %3163 = vmatprep.subr.mxu0 0.0
    %3164 = vmatpush1.msra.mxu0 0.0
    %3165 = vmatprep.subr.mxu0 0.0
    %3166 = vmatpush1.msra.mxu0 0.0
    %3167 = vmatprep.subr.mxu0 0.0
    %3168 = vmatpush1.msra.mxu0 0.0
    %3169 = vmatprep.subr.mxu0 0.0
    %3170 = vmatpush1.msra.mxu0 0.0
    %3171 = vmatprep.subr.mxu0 0.0
    %3172 = vmatpush1.msra.mxu0 0.0
    %3173 = vmatprep.subr.mxu0 0.0
    %3174 = vmatpush1.msra.mxu0 0.0
    %3175 = vmatprep.subr.mxu0 0.0
    %3176 = vmatpush1.msra.mxu0 0.0
    %3177 = vmatprep.subr.mxu0 0.0
    %3178 = vmatpush1.msra.mxu0 0.0
    %3179 = vmatprep.subr.mxu0 0.0
    %3180 = vmatpush1.msra.mxu0 0.0
    %3181 = vmatprep.subr.mxu0 0.0
    %3182 = vmatpush1.msra.mxu0 0.0
    %3183 = vmatprep.subr.mxu0 0.0
    %3184 = vmatpush1.msra.mxu0 0.0
    %3185 = vmatprep.mubr.f32.mxu0 0.0
    %3186 = vmatmul.mubr.f32.gmra.mrb[0].mxu0 %v260
    %v3187 = vpop.f32.mrb[0].mxu0
    %v3188 = vadd.f32 0.0, %v3187
    %v3189 = vpop.f32.mrb[0].mxu0
    %3190 = vdwg.mxu0
    %v3192 = vrot.slane %v3188, 2
    %v3194 = vadd.f32 %v3118, %v3192
    %v3195 = vxor.u32 %v3194, 2147483648
    %v3196 = vmul.f32 %v3195, 1.442695
    %v3197 = vpow.pop %v3196
    %v3198 = vadd.f32 %v3197, 1.0
    %v3199 = vrcp.pop %v3198
    %v3200 = vmul.f32 1.0, %v3199
    %v3201 = vtanh.pop %v3194
    %v3202 = vmul.f32 %v3200, 0.0
    %3204 = vrot.lane.b32.xlu0 %v3201, 64
    %v3205 = vpop.permute.xlu0 %3204
    %v3207 = vmul.f32 %v3200, %v3205
    %3209 = vrot.lane.b32.xlu0 %v3207, 32
    %v3210 = vpop.permute.xlu0 %3209
    %v3212 = vadd.f32 %v3202, %v3210
    %v3213 = vtanh.pop %v3212
    %3215 = vrot.lane.b32.xlu0 %v3213, 64
    %v3216 = vpop.permute.xlu0 %3215
    %v3218 = vmul.f32 %v3200, %v3216
    %v3220 = vrot.slane %v3218, 6
    %3221 = vrot.lane.b32.xlu0 %v3220, 32
    %v3222 = vpop.permute.xlu0 %3221
    %v3223 = vsel %vm258, %v3222, 0
    %3225 = vmatprep.subr.mxu0 0.0
    %3226 = vmatpush1.msra.mxu0 %v2108
    %3227 = vmatprep.subr.mxu0 0.0
    %3228 = vmatpush1.msra.mxu0 %v2109
    %3229 = vmatprep.subr.mxu0 0.0
    %3230 = vmatpush1.msra.mxu0 %v2110
    %3231 = vmatprep.subr.mxu0 0.0
    %3232 = vmatpush1.msra.mxu0 %v2111
    %3233 = vmatprep.subr.mxu0 0.0
    %3234 = vmatpush1.msra.mxu0 0.0
    %3235 = vmatprep.subr.mxu0 0.0
    %3236 = vmatpush1.msra.mxu0 0.0
    %3237 = vmatprep.subr.mxu0 0.0
    %3238 = vmatpush1.msra.mxu0 0.0
    %3239 = vmatprep.subr.mxu0 0.0
    %3240 = vmatpush1.msra.mxu0 0.0
    %3241 = vmatprep.subr.mxu0 0.0
    %3242 = vmatpush1.msra.mxu0 0.0
    %3243 = vmatprep.subr.mxu0 0.0
    %3244 = vmatpush1.msra.mxu0 0.0
    %3245 = vmatprep.subr.mxu0 0.0
    %3246 = vmatpush1.msra.mxu0 0.0
    %3247 = vmatprep.subr.mxu0 0.0
    %3248 = vmatpush1.msra.mxu0 0.0
    %3249 = vmatprep.subr.mxu0 0.0
    %3250 = vmatpush1.msra.mxu0 0.0
    %3251 = vmatprep.subr.mxu0 0.0
    %3252 = vmatpush1.msra.mxu0 0.0
    %3253 = vmatprep.subr.mxu0 0.0
    %3254 = vmatpush1.msra.mxu0 0.0
    %3255 = vmatprep.subr.mxu0 0.0
    %3256 = vmatpush1.msra.mxu0 0.0
    %3257 = vmatprep.subr.mxu0 0.0
    %3258 = vmatpush1.msra.mxu0 0.0
    %3259 = vmatprep.subr.mxu0 0.0
    %3260 = vmatpush1.msra.mxu0 0.0
    %3261 = vmatprep.subr.mxu0 0.0
    %3262 = vmatpush1.msra.mxu0 0.0
    %3263 = vmatprep.subr.mxu0 0.0
    %3264 = vmatpush1.msra.mxu0 0.0
    %3265 = vmatprep.subr.mxu0 0.0
    %3266 = vmatpush1.msra.mxu0 0.0
    %3267 = vmatprep.subr.mxu0 0.0
    %3268 = vmatpush1.msra.mxu0 0.0
    %3269 = vmatprep.subr.mxu0 0.0
    %3270 = vmatpush1.msra.mxu0 0.0
    %3271 = vmatprep.subr.mxu0 0.0
    %3272 = vmatpush1.msra.mxu0 0.0
    %3273 = vmatprep.subr.mxu0 0.0
    %3274 = vmatpush1.msra.mxu0 0.0
    %3275 = vmatprep.subr.mxu0 0.0
    %3276 = vmatpush1.msra.mxu0 0.0
    %3277 = vmatprep.subr.mxu0 0.0
    %3278 = vmatpush1.msra.mxu0 0.0
    %3279 = vmatprep.subr.mxu0 0.0
    %3280 = vmatpush1.msra.mxu0 0.0
    %3281 = vmatprep.subr.mxu0 0.0
    %3282 = vmatpush1.msra.mxu0 0.0
    %3283 = vmatprep.subr.mxu0 0.0
    %3284 = vmatpush1.msra.mxu0 0.0
    %3285 = vmatprep.subr.mxu0 0.0
    %3286 = vmatpush1.msra.mxu0 0.0
    %3287 = vmatprep.subr.mxu0 0.0
    %3288 = vmatpush1.msra.mxu0 0.0
    %3289 = vmatprep.mubr.f32.mxu0 0.0
    %3290 = vmatmul.mubr.f32.gmra.mrb[0].mxu0 %v3223
    %v3291 = vpop.f32.mrb[0].mxu0
    %v3292 = vadd.f32 0.0, %v3291
    %v3293 = vpop.f32.mrb[0].mxu0
    %3294 = vdwg.mxu0
    %v3296 = vrot.slane %v3292, 4
    %v3298 = vadd.f32 %v3118, %v3296
    %v3299 = vxor.u32 %v3298, 2147483648
    %v3300 = vmul.f32 %v3299, 1.442695
    %v3301 = vpow.pop %v3300
    %v3302 = vadd.f32 %v3301, 1.0
    %v3303 = vrcp.pop %v3302
    %v3304 = vmul.f32 1.0, %v3303
    %v3305 = vtanh.pop %v3298
    %v3307 = vrot.slane %v3212, 2
    %v3309 = vmul.f32 %v3304, %v3307
    %3311 = vrot.lane.b32.xlu0 %v3305, 64
    %v3312 = vpop.permute.xlu0 %3311
    %v3314 = vmul.f32 %v3304, %v3312
    %3316 = vrot.lane.b32.xlu0 %v3314, 32
    %v3317 = vpop.permute.xlu0 %3316
    %v3319 = vadd.f32 %v3309, %v3317
    %v3320 = vtanh.pop %v3319
    %3322 = vrot.lane.b32.xlu0 %v3320, 64
    %v3323 = vpop.permute.xlu0 %3322
    %v3325 = vmul.f32 %v3304, %v3323
    %v3327 = vrot.slane %v3325, 4
    %3328 = vrot.lane.b32.xlu0 %v3327, 32
    %v3329 = vpop.permute.xlu0 %3328
    %v3330 = vsel %vm258, %v3329, 0
    %3332 = vmatprep.subr.mxu0 0.0
    %3333 = vmatpush1.msra.mxu0 %v2108
    %3334 = vmatprep.subr.mxu0 0.0
    %3335 = vmatpush1.msra.mxu0 %v2109
    %3336 = vmatprep.subr.mxu0 0.0
    %3337 = vmatpush1.msra.mxu0 %v2110
    %3338 = vmatprep.subr.mxu0 0.0
    %3339 = vmatpush1.msra.mxu0 %v2111
    %3340 = vmatprep.subr.mxu0 0.0
    %3341 = vmatpush1.msra.mxu0 0.0
    %3342 = vmatprep.subr.mxu0 0.0
    %3343 = vmatpush1.msra.mxu0 0.0
    %3344 = vmatprep.subr.mxu0 0.0
    %3345 = vmatpush1.msra.mxu0 0.0
    %3346 = vmatprep.subr.mxu0 0.0
    %3347 = vmatpush1.msra.mxu0 0.0
    %3348 = vmatprep.subr.mxu0 0.0
    %3349 = vmatpush1.msra.mxu0 0.0
    %3350 = vmatprep.subr.mxu0 0.0
    %3351 = vmatpush1.msra.mxu0 0.0
    %3352 = vmatprep.subr.mxu0 0.0
    %3353 = vmatpush1.msra.mxu0 0.0
    %3354 = vmatprep.subr.mxu0 0.0
    %3355 = vmatpush1.msra.mxu0 0.0
    %3356 = vmatprep.subr.mxu0 0.0
    %3357 = vmatpush1.msra.mxu0 0.0
    %3358 = vmatprep.subr.mxu0 0.0
    %3359 = vmatpush1.msra.mxu0 0.0
    %3360 = vmatprep.subr.mxu0 0.0
    %3361 = vmatpush1.msra.mxu0 0.0
    %3362 = vmatprep.subr.mxu0 0.0
    %3363 = vmatpush1.msra.mxu0 0.0
    %3364 = vmatprep.subr.mxu0 0.0
    %3365 = vmatpush1.msra.mxu0 0.0
    %3366 = vmatprep.subr.mxu0 0.0
    %3367 = vmatpush1.msra.mxu0 0.0
    %3368 = vmatprep.subr.mxu0 0.0
    %3369 = vmatpush1.msra.mxu0 0.0
    %3370 = vmatprep.subr.mxu0 0.0
    %3371 = vmatpush1.msra.mxu0 0.0
    %3372 = vmatprep.subr.mxu0 0.0
    %3373 = vmatpush1.msra.mxu0 0.0
    %3374 = vmatprep.subr.mxu0 0.0
    %3375 = vmatpush1.msra.mxu0 0.0
    %3376 = vmatprep.subr.mxu0 0.0
    %3377 = vmatpush1.msra.mxu0 0.0
    %3378 = vmatprep.subr.mxu0 0.0
    %3379 = vmatpush1.msra.mxu0 0.0
    %3380 = vmatprep.subr.mxu0 0.0
    %3381 = vmatpush1.msra.mxu0 0.0
    %3382 = vmatprep.subr.mxu0 0.0
    %3383 = vmatpush1.msra.mxu0 0.0
    %3384 = vmatprep.subr.mxu0 0.0
    %3385 = vmatpush1.msra.mxu0 0.0
    %3386 = vmatprep.subr.mxu0 0.0
    %3387 = vmatpush1.msra.mxu0 0.0
    %3388 = vmatprep.subr.mxu0 0.0
    %3389 = vmatpush1.msra.mxu0 0.0
    %3390 = vmatprep.subr.mxu0 0.0
    %3391 = vmatpush1.msra.mxu0 0.0
    %3392 = vmatprep.subr.mxu0 0.0
    %3393 = vmatpush1.msra.mxu0 0.0
    %3394 = vmatprep.subr.mxu0 0.0
    %3395 = vmatpush1.msra.mxu0 0.0
    %3396 = vmatprep.mubr.f32.mxu0 0.0
    %3397 = vmatmul.mubr.f32.gmra.mrb[0].mxu0 %v3330
    %v3398 = vpop.f32.mrb[0].mxu0
    %v3399 = vadd.f32 0.0, %v3398
    %v3400 = vpop.f32.mrb[0].mxu0
    %3401 = vdwg.mxu0
    %v3403 = vrot.slane %v3399, 6
    %v3405 = vadd.f32 %v3118, %v3403
    %v3406 = vxor.u32 %v3405, 2147483648
    %v3407 = vmul.f32 %v3406, 1.442695
    %v3408 = vpow.pop %v3407
    %v3409 = vadd.f32 %v3408, 1.0
    %v3410 = vrcp.pop %v3409
    %v3411 = vmul.f32 1.0, %v3410
    %v3412 = vtanh.pop %v3405
    %v3414 = vrot.slane %v3319, 2
    %v3416 = vmul.f32 %v3411, %v3414
    %3418 = vrot.lane.b32.xlu0 %v3412, 64
    %v3419 = vpop.permute.xlu0 %3418
    %v3421 = vmul.f32 %v3411, %v3419
    %3423 = vrot.lane.b32.xlu0 %v3421, 32
    %v3424 = vpop.permute.xlu0 %3423
    %v3426 = vadd.f32 %v3416, %v3424
    %v3427 = vtanh.pop %v3426
    %3429 = vrot.lane.b32.xlu0 %v3427, 64
    %v3430 = vpop.permute.xlu0 %3429
    %v3432 = vmul.f32 %v3411, %v3430
    %v3434 = vrot.slane %v3432, 2
    %3435 = vrot.lane.b32.xlu0 %v3434, 32
    %v3436 = vpop.permute.xlu0 %3435
    %v3437 = vsel %vm258, %v3436, 0
    %3439 = vmatprep.subr.mxu0 0.0
    %3440 = vmatpush1.msra.mxu0 %v2108
    %3441 = vmatprep.subr.mxu0 0.0
    %3442 = vmatpush1.msra.mxu0 %v2109
    %3443 = vmatprep.subr.mxu0 0.0
    %3444 = vmatpush1.msra.mxu0 %v2110
    %3445 = vmatprep.subr.mxu0 0.0
    %3446 = vmatpush1.msra.mxu0 %v2111
    %3447 = vmatprep.subr.mxu0 0.0
    %3448 = vmatpush1.msra.mxu0 0.0
    %3449 = vmatprep.subr.mxu0 0.0
    %3450 = vmatpush1.msra.mxu0 0.0
    %3451 = vmatprep.subr.mxu0 0.0
    %3452 = vmatpush1.msra.mxu0 0.0
    %3453 = vmatprep.subr.mxu0 0.0
    %3454 = vmatpush1.msra.mxu0 0.0
    %3455 = vmatprep.subr.mxu0 0.0
    %3456 = vmatpush1.msra.mxu0 0.0
    %3457 = vmatprep.subr.mxu0 0.0
    %3458 = vmatpush1.msra.mxu0 0.0
    %3459 = vmatprep.subr.mxu0 0.0
    %3460 = vmatpush1.msra.mxu0 0.0
    %3461 = vmatprep.subr.mxu0 0.0
    %3462 = vmatpush1.msra.mxu0 0.0
    %3463 = vmatprep.subr.mxu0 0.0
    %3464 = vmatpush1.msra.mxu0 0.0
    %3465 = vmatprep.subr.mxu0 0.0
    %3466 = vmatpush1.msra.mxu0 0.0
    %3467 = vmatprep.subr.mxu0 0.0
    %3468 = vmatpush1.msra.mxu0 0.0
    %3469 = vmatprep.subr.mxu0 0.0
    %3470 = vmatpush1.msra.mxu0 0.0
    %3471 = vmatprep.subr.mxu0 0.0
    %3472 = vmatpush1.msra.mxu0 0.0
    %3473 = vmatprep.subr.mxu0 0.0
    %3474 = vmatpush1.msra.mxu0 0.0
    %3475 = vmatprep.subr.mxu0 0.0
    %3476 = vmatpush1.msra.mxu0 0.0
    %3477 = vmatprep.subr.mxu0 0.0
    %3478 = vmatpush1.msra.mxu0 0.0
    %3479 = vmatprep.subr.mxu0 0.0
    %3480 = vmatpush1.msra.mxu0 0.0
    %3481 = vmatprep.subr.mxu0 0.0
    %3482 = vmatpush1.msra.mxu0 0.0
    %3483 = vmatprep.subr.mxu0 0.0
    %3484 = vmatpush1.msra.mxu0 0.0
    %3485 = vmatprep.subr.mxu0 0.0
    %3486 = vmatpush1.msra.mxu0 0.0
    %3487 = vmatprep.subr.mxu0 0.0
    %3488 = vmatpush1.msra.mxu0 0.0
    %3489 = vmatprep.subr.mxu0 0.0
    %3490 = vmatpush1.msra.mxu0 0.0
    %3491 = vmatprep.subr.mxu0 0.0
    %3492 = vmatpush1.msra.mxu0 0.0
    %3493 = vmatprep.subr.mxu0 0.0
    %3494 = vmatpush1.msra.mxu0 0.0
    %3495 = vmatprep.subr.mxu0 0.0
    %3496 = vmatpush1.msra.mxu0 0.0
    %3497 = vmatprep.subr.mxu0 0.0
    %3498 = vmatpush1.msra.mxu0 0.0
    %3499 = vmatprep.subr.mxu0 0.0
    %3500 = vmatpush1.msra.mxu0 0.0
    %3501 = vmatprep.subr.mxu0 0.0
    %3502 = vmatpush1.msra.mxu0 0.0
    %3503 = vmatprep.mubr.f32.mxu0 0.0
    %3504 = vmatmul.mubr.f32.gmra.mrb[0].mxu0 %v3437
    %v3505 = vpop.f32.mrb[0].mxu0
    %v3506 = vadd.f32 0.0, %v3505
    %v3507 = vpop.f32.mrb[0].mxu0
    %3508 = vdwg.mxu0
    %v3509 = vadd.f32 %v3118, %v3506
    %v3510 = vxor.u32 %v3509, 2147483648
    %v3511 = vmul.f32 %v3510, 1.442695
    %v3512 = vpow.pop %v3511
    %v3513 = vadd.f32 %v3512, 1.0
    %v3514 = vrcp.pop %v3513
    %v3515 = vmul.f32 1.0, %v3514
    %v3516 = vtanh.pop %v3509
    %v3518 = vrot.slane %v3426, 2
    %v3520 = vmul.f32 %v3515, %v3518
    %3522 = vrot.lane.b32.xlu0 %v3516, 64
    %v3523 = vpop.permute.xlu0 %3522
    %v3525 = vmul.f32 %v3515, %v3523
    %3527 = vrot.lane.b32.xlu0 %v3525, 32
    %v3528 = vpop.permute.xlu0 %3527
    %v3530 = vadd.f32 %v3520, %v3528
    %v3531 = vtanh.pop %v3530
    %3533 = vrot.lane.b32.xlu0 %v3531, 64
    %v3534 = vpop.permute.xlu0 %3533
    %v3536 = vmul.f32 %v3515, %v3534
    %3538 = vrot.lane.b32.xlu0 %v3536, 32
    %v3539 = vpop.permute.xlu0 %3538
    %v3540 = vsel %vm258, %v3539, 0
    %3542 = vmatprep.subr.mxu0 0.0
    %3543 = vmatpush1.msra.mxu0 %v2108
    %3544 = vmatprep.subr.mxu0 0.0
    %3545 = vmatpush1.msra.mxu0 %v2109
    %3546 = vmatprep.subr.mxu0 0.0
    %3547 = vmatpush1.msra.mxu0 %v2110
    %3548 = vmatprep.subr.mxu0 0.0
    %3549 = vmatpush1.msra.mxu0 %v2111
    %3550 = vmatprep.subr.mxu0 0.0
    %3551 = vmatpush1.msra.mxu0 0.0
    %3552 = vmatprep.subr.mxu0 0.0
    %3553 = vmatpush1.msra.mxu0 0.0
    %3554 = vmatprep.subr.mxu0 0.0
    %3555 = vmatpush1.msra.mxu0 0.0
    %3556 = vmatprep.subr.mxu0 0.0
    %3557 = vmatpush1.msra.mxu0 0.0
    %3558 = vmatprep.subr.mxu0 0.0
    %3559 = vmatpush1.msra.mxu0 0.0
    %3560 = vmatprep.subr.mxu0 0.0
    %3561 = vmatpush1.msra.mxu0 0.0
    %3562 = vmatprep.subr.mxu0 0.0
    %3563 = vmatpush1.msra.mxu0 0.0
    %3564 = vmatprep.subr.mxu0 0.0
    %3565 = vmatpush1.msra.mxu0 0.0
    %3566 = vmatprep.subr.mxu0 0.0
    %3567 = vmatpush1.msra.mxu0 0.0
    %3568 = vmatprep.subr.mxu0 0.0
    %3569 = vmatpush1.msra.mxu0 0.0
    %3570 = vmatprep.subr.mxu0 0.0
    %3571 = vmatpush1.msra.mxu0 0.0
    %3572 = vmatprep.subr.mxu0 0.0
    %3573 = vmatpush1.msra.mxu0 0.0
    %3574 = vmatprep.subr.mxu0 0.0
    %3575 = vmatpush1.msra.mxu0 0.0
    %3576 = vmatprep.subr.mxu0 0.0
    %3577 = vmatpush1.msra.mxu0 0.0
    %3578 = vmatprep.subr.mxu0 0.0
    %3579 = vmatpush1.msra.mxu0 0.0
    %3580 = vmatprep.subr.mxu0 0.0
    %3581 = vmatpush1.msra.mxu0 0.0
    %3582 = vmatprep.subr.mxu0 0.0
    %3583 = vmatpush1.msra.mxu0 0.0
    %3584 = vmatprep.subr.mxu0 0.0
    %3585 = vmatpush1.msra.mxu0 0.0
    %3586 = vmatprep.subr.mxu0 0.0
    %3587 = vmatpush1.msra.mxu0 0.0
    %3588 = vmatprep.subr.mxu0 0.0
    %3589 = vmatpush1.msra.mxu0 0.0
    %3590 = vmatprep.subr.mxu0 0.0
    %3591 = vmatpush1.msra.mxu0 0.0
    %3592 = vmatprep.subr.mxu0 0.0
    %3593 = vmatpush1.msra.mxu0 0.0
    %3594 = vmatprep.subr.mxu0 0.0
    %3595 = vmatpush1.msra.mxu0 0.0
    %3596 = vmatprep.subr.mxu0 0.0
    %3597 = vmatpush1.msra.mxu0 0.0
    %3598 = vmatprep.subr.mxu0 0.0
    %3599 = vmatpush1.msra.mxu0 0.0
    %3600 = vmatprep.subr.mxu0 0.0
    %3601 = vmatpush1.msra.mxu0 0.0
    %3602 = vmatprep.subr.mxu0 0.0
    %3603 = vmatpush1.msra.mxu0 0.0
    %3604 = vmatprep.subr.mxu0 0.0
    %3605 = vmatpush1.msra.mxu0 0.0
    %3606 = vmatprep.mubr.f32.mxu0 0.0
    %3607 = vmatmul.mubr.f32.gmra.mrb[0].mxu0 %v3540
    %v3608 = vpop.f32.mrb[0].mxu0
    %v3609 = vadd.f32 0.0, %v3608
    %v3610 = vpop.f32.mrb[0].mxu0
    %3611 = vdwg.mxu0
    %v3613 = vrot.slane %v3609, 2
    %v3615 = vadd.f32 %v3113, %v3613
    %v3616 = vxor.u32 %v3615, 2147483648
    %v3617 = vmul.f32 %v3616, 1.442695
    %v3618 = vpow.pop %v3617
    %v3619 = vadd.f32 %v3618, 1.0
    %v3620 = vrcp.pop %v3619
    %v3621 = vmul.f32 1.0, %v3620
    %v3622 = vtanh.pop %v3615
    %v3624 = vrot.slane %v3530, 2
    %v3626 = vmul.f32 %v3621, %v3624
    %3628 = vrot.lane.b32.xlu0 %v3622, 64
    %v3629 = vpop.permute.xlu0 %3628
    %v3631 = vmul.f32 %v3621, %v3629
    %3633 = vrot.lane.b32.xlu0 %v3631, 32
    %v3634 = vpop.permute.xlu0 %3633
    %v3636 = vadd.f32 %v3626, %v3634
    %v3637 = vtanh.pop %v3636
    %3639 = vrot.lane.b32.xlu0 %v3637, 64
    %v3640 = vpop.permute.xlu0 %3639
    %v3642 = vmul.f32 %v3621, %v3640
    %v3644 = vrot.slane %v3642, 6
    %3645 = vrot.lane.b32.xlu0 %v3644, 32
    %v3646 = vpop.permute.xlu0 %3645
    %v3647 = vsel %vm258, %v3646, 0
    %3649 = vmatprep.subr.mxu0 0.0
    %3650 = vmatpush1.msra.mxu0 %v2108
    %3651 = vmatprep.subr.mxu0 0.0
    %3652 = vmatpush1.msra.mxu0 %v2109
    %3653 = vmatprep.subr.mxu0 0.0
    %3654 = vmatpush1.msra.mxu0 %v2110
    %3655 = vmatprep.subr.mxu0 0.0
    %3656 = vmatpush1.msra.mxu0 %v2111
    %3657 = vmatprep.subr.mxu0 0.0
    %3658 = vmatpush1.msra.mxu0 0.0
    %3659 = vmatprep.subr.mxu0 0.0
    %3660 = vmatpush1.msra.mxu0 0.0
    %3661 = vmatprep.subr.mxu0 0.0
    %3662 = vmatpush1.msra.mxu0 0.0
    %3663 = vmatprep.subr.mxu0 0.0
    %3664 = vmatpush1.msra.mxu0 0.0
    %3665 = vmatprep.subr.mxu0 0.0
    %3666 = vmatpush1.msra.mxu0 0.0
    %3667 = vmatprep.subr.mxu0 0.0
    %3668 = vmatpush1.msra.mxu0 0.0
    %3669 = vmatprep.subr.mxu0 0.0
    %3670 = vmatpush1.msra.mxu0 0.0
    %3671 = vmatprep.subr.mxu0 0.0
    %3672 = vmatpush1.msra.mxu0 0.0
    %3673 = vmatprep.subr.mxu0 0.0
    %3674 = vmatpush1.msra.mxu0 0.0
    %3675 = vmatprep.subr.mxu0 0.0
    %3676 = vmatpush1.msra.mxu0 0.0
    %3677 = vmatprep.subr.mxu0 0.0
    %3678 = vmatpush1.msra.mxu0 0.0
    %3679 = vmatprep.subr.mxu0 0.0
    %3680 = vmatpush1.msra.mxu0 0.0
    %3681 = vmatprep.subr.mxu0 0.0
    %3682 = vmatpush1.msra.mxu0 0.0
    %3683 = vmatprep.subr.mxu0 0.0
    %3684 = vmatpush1.msra.mxu0 0.0
    %3685 = vmatprep.subr.mxu0 0.0
    %3686 = vmatpush1.msra.mxu0 0.0
    %3687 = vmatprep.subr.mxu0 0.0
    %3688 = vmatpush1.msra.mxu0 0.0
    %3689 = vmatprep.subr.mxu0 0.0
    %3690 = vmatpush1.msra.mxu0 0.0
    %3691 = vmatprep.subr.mxu0 0.0
    %3692 = vmatpush1.msra.mxu0 0.0
    %3693 = vmatprep.subr.mxu0 0.0
    %3694 = vmatpush1.msra.mxu0 0.0
    %3695 = vmatprep.subr.mxu0 0.0
    %3696 = vmatpush1.msra.mxu0 0.0
    %3697 = vmatprep.subr.mxu0 0.0
    %3698 = vmatpush1.msra.mxu0 0.0
    %3699 = vmatprep.subr.mxu0 0.0
    %3700 = vmatpush1.msra.mxu0 0.0
    %3701 = vmatprep.subr.mxu0 0.0
    %3702 = vmatpush1.msra.mxu0 0.0
    %3703 = vmatprep.subr.mxu0 0.0
    %3704 = vmatpush1.msra.mxu0 0.0
    %3705 = vmatprep.subr.mxu0 0.0
    %3706 = vmatpush1.msra.mxu0 0.0
    %3707 = vmatprep.subr.mxu0 0.0
    %3708 = vmatpush1.msra.mxu0 0.0
    %3709 = vmatprep.subr.mxu0 0.0
    %3710 = vmatpush1.msra.mxu0 0.0
    %3711 = vmatprep.subr.mxu0 0.0
    %3712 = vmatpush1.msra.mxu0 0.0
    %3713 = vmatprep.mubr.f32.mxu0 0.0
    %3714 = vmatmul.mubr.f32.gmra.mrb[0].mxu0 %v3647
    %v3715 = vpop.f32.mrb[0].mxu0
    %v3716 = vadd.f32 0.0, %v3715
    %v3717 = vpop.f32.mrb[0].mxu0
    %3718 = vdwg.mxu0
    %v3720 = vrot.slane %v3716, 4
    %v3722 = vadd.f32 %v3113, %v3720
    %v3723 = vxor.u32 %v3722, 2147483648
    %v3724 = vmul.f32 %v3723, 1.442695
    %v3725 = vpow.pop %v3724
    %v3726 = vadd.f32 %v3725, 1.0
    %v3727 = vrcp.pop %v3726
    %v3728 = vmul.f32 1.0, %v3727
    %v3729 = vtanh.pop %v3722
    %v3731 = vrot.slane %v3636, 2
    %v3733 = vmul.f32 %v3728, %v3731
    %3735 = vrot.lane.b32.xlu0 %v3729, 64
    %v3736 = vpop.permute.xlu0 %3735
    %v3738 = vmul.f32 %v3728, %v3736
    %3740 = vrot.lane.b32.xlu0 %v3738, 32
    %v3741 = vpop.permute.xlu0 %3740
    %v3743 = vadd.f32 %v3733, %v3741
    %v3744 = vtanh.pop %v3743
    %3746 = vrot.lane.b32.xlu0 %v3744, 64
    %v3747 = vpop.permute.xlu0 %3746
    %v3749 = vmul.f32 %v3728, %v3747
    %v3751 = vrot.slane %v3749, 4
    %3752 = vrot.lane.b32.xlu0 %v3751, 32
    %v3753 = vpop.permute.xlu0 %3752
    %v3754 = vsel %vm258, %v3753, 0
    %3756 = vmatprep.subr.mxu0 0.0
    %3757 = vmatpush1.msra.mxu0 %v2108
    %3758 = vmatprep.subr.mxu0 0.0
    %3759 = vmatpush1.msra.mxu0 %v2109
    %3760 = vmatprep.subr.mxu0 0.0
    %3761 = vmatpush1.msra.mxu0 %v2110
    %3762 = vmatprep.subr.mxu0 0.0
    %3763 = vmatpush1.msra.mxu0 %v2111
    %3764 = vmatprep.subr.mxu0 0.0
    %3765 = vmatpush1.msra.mxu0 0.0
    %3766 = vmatprep.subr.mxu0 0.0
    %3767 = vmatpush1.msra.mxu0 0.0
    %3768 = vmatprep.subr.mxu0 0.0
    %3769 = vmatpush1.msra.mxu0 0.0
    %3770 = vmatprep.subr.mxu0 0.0
    %3771 = vmatpush1.msra.mxu0 0.0
    %3772 = vmatprep.subr.mxu0 0.0
    %3773 = vmatpush1.msra.mxu0 0.0
    %3774 = vmatprep.subr.mxu0 0.0
    %3775 = vmatpush1.msra.mxu0 0.0
    %3776 = vmatprep.subr.mxu0 0.0
    %3777 = vmatpush1.msra.mxu0 0.0
    %3778 = vmatprep.subr.mxu0 0.0
    %3779 = vmatpush1.msra.mxu0 0.0
    %3780 = vmatprep.subr.mxu0 0.0
    %3781 = vmatpush1.msra.mxu0 0.0
    %3782 = vmatprep.subr.mxu0 0.0
    %3783 = vmatpush1.msra.mxu0 0.0
    %3784 = vmatprep.subr.mxu0 0.0
    %3785 = vmatpush1.msra.mxu0 0.0
    %3786 = vmatprep.subr.mxu0 0.0
    %3787 = vmatpush1.msra.mxu0 0.0
    %3788 = vmatprep.subr.mxu0 0.0
    %3789 = vmatpush1.msra.mxu0 0.0
    %3790 = vmatprep.subr.mxu0 0.0
    %3791 = vmatpush1.msra.mxu0 0.0
    %3792 = vmatprep.subr.mxu0 0.0
    %3793 = vmatpush1.msra.mxu0 0.0
    %3794 = vmatprep.subr.mxu0 0.0
    %3795 = vmatpush1.msra.mxu0 0.0
    %3796 = vmatprep.subr.mxu0 0.0
    %3797 = vmatpush1.msra.mxu0 0.0
    %3798 = vmatprep.subr.mxu0 0.0
    %3799 = vmatpush1.msra.mxu0 0.0
    %3800 = vmatprep.subr.mxu0 0.0
    %3801 = vmatpush1.msra.mxu0 0.0
    %3802 = vmatprep.subr.mxu0 0.0
    %3803 = vmatpush1.msra.mxu0 0.0
    %3804 = vmatprep.subr.mxu0 0.0
    %3805 = vmatpush1.msra.mxu0 0.0
    %3806 = vmatprep.subr.mxu0 0.0
    %3807 = vmatpush1.msra.mxu0 0.0
    %3808 = vmatprep.subr.mxu0 0.0
    %3809 = vmatpush1.msra.mxu0 0.0
    %3810 = vmatprep.subr.mxu0 0.0
    %3811 = vmatpush1.msra.mxu0 0.0
    %3812 = vmatprep.subr.mxu0 0.0
    %3813 = vmatpush1.msra.mxu0 0.0
    %3814 = vmatprep.subr.mxu0 0.0
    %3815 = vmatpush1.msra.mxu0 0.0
    %3816 = vmatprep.subr.mxu0 0.0
    %3817 = vmatpush1.msra.mxu0 0.0
    %3818 = vmatprep.subr.mxu0 0.0
    %3819 = vmatpush1.msra.mxu0 0.0
    %3820 = vmatprep.mubr.f32.mxu0 0.0
    %3821 = vmatmul.mubr.f32.gmra.mrb[0].mxu0 %v3754
    %v3822 = vpop.f32.mrb[0].mxu0
    %v3823 = vadd.f32 0.0, %v3822
    %v3824 = vpop.f32.mrb[0].mxu0
    %3825 = vdwg.mxu0
    %v3827 = vrot.slane %v3823, 6
    %v3829 = vadd.f32 %v3113, %v3827
    %v3830 = vxor.u32 %v3829, 2147483648
    %v3831 = vmul.f32 %v3830, 1.442695
    %v3832 = vpow.pop %v3831
    %v3833 = vadd.f32 %v3832, 1.0
    %v3834 = vrcp.pop %v3833
    %v3835 = vmul.f32 1.0, %v3834
    %v3836 = vtanh.pop %v3829
    %v3838 = vrot.slane %v3743, 2
    %v3840 = vmul.f32 %v3835, %v3838
    %3842 = vrot.lane.b32.xlu0 %v3836, 64
    %v3843 = vpop.permute.xlu0 %3842
    %v3845 = vmul.f32 %v3835, %v3843
    %3847 = vrot.lane.b32.xlu0 %v3845, 32
    %v3848 = vpop.permute.xlu0 %3847
    %v3850 = vadd.f32 %v3840, %v3848
    %v3851 = vtanh.pop %v3850
    %3853 = vrot.lane.b32.xlu0 %v3851, 64
    %v3854 = vpop.permute.xlu0 %3853
    %v3856 = vmul.f32 %v3835, %v3854
    %v3858 = vrot.slane %v3856, 2
    %3859 = vrot.lane.b32.xlu0 %v3858, 32
    %v3860 = vpop.permute.xlu0 %3859
    %v3861 = vsel %vm258, %v3860, 0
    %3863 = vmatprep.subr.mxu0 0.0
    %3864 = vmatpush1.msra.mxu0 %v2108
    %3865 = vmatprep.subr.mxu0 0.0
    %3866 = vmatpush1.msra.mxu0 %v2109
    %3867 = vmatprep.subr.mxu0 0.0
    %3868 = vmatpush1.msra.mxu0 %v2110
    %3869 = vmatprep.subr.mxu0 0.0
    %3870 = vmatpush1.msra.mxu0 %v2111
    %3871 = vmatprep.subr.mxu0 0.0
    %3872 = vmatpush1.msra.mxu0 0.0
    %3873 = vmatprep.subr.mxu0 0.0
    %3874 = vmatpush1.msra.mxu0 0.0
    %3875 = vmatprep.subr.mxu0 0.0
    %3876 = vmatpush1.msra.mxu0 0.0
    %3877 = vmatprep.subr.mxu0 0.0
    %3878 = vmatpush1.msra.mxu0 0.0
    %3879 = vmatprep.subr.mxu0 0.0
    %3880 = vmatpush1.msra.mxu0 0.0
    %3881 = vmatprep.subr.mxu0 0.0
    %3882 = vmatpush1.msra.mxu0 0.0
    %3883 = vmatprep.subr.mxu0 0.0
    %3884 = vmatpush1.msra.mxu0 0.0
    %3885 = vmatprep.subr.mxu0 0.0
    %3886 = vmatpush1.msra.mxu0 0.0
    %3887 = vmatprep.subr.mxu0 0.0
    %3888 = vmatpush1.msra.mxu0 0.0
    %3889 = vmatprep.subr.mxu0 0.0
    %3890 = vmatpush1.msra.mxu0 0.0
    %3891 = vmatprep.subr.mxu0 0.0
    %3892 = vmatpush1.msra.mxu0 0.0
    %3893 = vmatprep.subr.mxu0 0.0
    %3894 = vmatpush1.msra.mxu0 0.0
    %3895 = vmatprep.subr.mxu0 0.0
    %3896 = vmatpush1.msra.mxu0 0.0
    %3897 = vmatprep.subr.mxu0 0.0
    %3898 = vmatpush1.msra.mxu0 0.0
    %3899 = vmatprep.subr.mxu0 0.0
    %3900 = vmatpush1.msra.mxu0 0.0
    %3901 = vmatprep.subr.mxu0 0.0
    %3902 = vmatpush1.msra.mxu0 0.0
    %3903 = vmatprep.subr.mxu0 0.0
    %3904 = vmatpush1.msra.mxu0 0.0
    %3905 = vmatprep.subr.mxu0 0.0
    %3906 = vmatpush1.msra.mxu0 0.0
    %3907 = vmatprep.subr.mxu0 0.0
    %3908 = vmatpush1.msra.mxu0 0.0
    %3909 = vmatprep.subr.mxu0 0.0
    %3910 = vmatpush1.msra.mxu0 0.0
    %3911 = vmatprep.subr.mxu0 0.0
    %3912 = vmatpush1.msra.mxu0 0.0
    %3913 = vmatprep.subr.mxu0 0.0
    %3914 = vmatpush1.msra.mxu0 0.0
    %3915 = vmatprep.subr.mxu0 0.0
    %3916 = vmatpush1.msra.mxu0 0.0
    %3917 = vmatprep.subr.mxu0 0.0
    %3918 = vmatpush1.msra.mxu0 0.0
    %3919 = vmatprep.subr.mxu0 0.0
    %3920 = vmatpush1.msra.mxu0 0.0
    %3921 = vmatprep.subr.mxu0 0.0
    %3922 = vmatpush1.msra.mxu0 0.0
    %3923 = vmatprep.subr.mxu0 0.0
    %3924 = vmatpush1.msra.mxu0 0.0
    %3925 = vmatprep.subr.mxu0 0.0
    %3926 = vmatpush1.msra.mxu0 0.0
    %3927 = vmatprep.mubr.f32.mxu0 0.0
    %3928 = vmatmul.mubr.f32.gmra.mrb[0].mxu0 %v3861
    %v3929 = vpop.f32.mrb[0].mxu0
    %v3930 = vadd.f32 0.0, %v3929
    %v3931 = vpop.f32.mrb[0].mxu0
    %3932 = vdwg.mxu0
    %v3933 = vadd.f32 %v3113, %v3930
    %v3934 = vxor.u32 %v3933, 2147483648
    %v3935 = vmul.f32 %v3934, 1.442695
    %v3936 = vpow.pop %v3935
    %v3937 = vadd.f32 %v3936, 1.0
    %v3938 = vrcp.pop %v3937
    %v3939 = vmul.f32 1.0, %v3938
    %v3940 = vtanh.pop %v3933
    %v3942 = vrot.slane %v3850, 2
    %v3944 = vmul.f32 %v3939, %v3942
    %3946 = vrot.lane.b32.xlu0 %v3940, 64
    %v3947 = vpop.permute.xlu0 %3946
    %v3949 = vmul.f32 %v3939, %v3947
    %3951 = vrot.lane.b32.xlu0 %v3949, 32
    %v3952 = vpop.permute.xlu0 %3951
    %v3954 = vadd.f32 %v3944, %v3952
    %v3955 = vtanh.pop %v3954
    %3957 = vrot.lane.b32.xlu0 %v3955, 64
    %v3958 = vpop.permute.xlu0 %3957
    %v3960 = vmul.f32 %v3939, %v3958
    %3963 = vrot.lane.b32.xlu0 %v3960, 64
    %v3964 = vpop.permute.xlu0 %3963
    %v3966 = vsel %vm258, %v2298, %v3964
    %v3967 = vadd.f32 %v3966, 0.0
    %3968 = vrot.lane.b32.xlu0 %v2401, 32
    %v3969 = vpop.permute.xlu0 %3968
    %3971 = vrot.lane.b32.xlu0 %v3856, 64
    %v3972 = vpop.permute.xlu0 %3971
    %v3974 = vsel %vm258, %v3969, %v3972
    %v3976 = vrot.slane %v3974, 2
    %v3978 = vadd.f32 %v3967, %v3976
    %3979 = vrot.lane.b32.xlu0 %v2508, 32
    %v3980 = vpop.permute.xlu0 %3979
    %3982 = vrot.lane.b32.xlu0 %v3749, 64
    %v3983 = vpop.permute.xlu0 %3982
    %v3985 = vsel %vm258, %v3980, %v3983
    %v3987 = vrot.slane %v3985, 4
    %v3989 = vadd.f32 %v3978, %v3987
    %3990 = vrot.lane.b32.xlu0 %v2615, 32
    %v3991 = vpop.permute.xlu0 %3990
    %3993 = vrot.lane.b32.xlu0 %v3642, 64
    %v3994 = vpop.permute.xlu0 %3993
    %v3996 = vsel %vm258, %v3991, %v3994
    %v3998 = vrot.slane %v3996, 6
    %v4000 = vadd.f32 %v3989, %v3998
    %4002 = vrot.lane.b32.xlu0 %v3536, 64
    %v4003 = vpop.permute.xlu0 %4002
    %v4005 = vsel %vm258, %v2722, %v4003
    %v4006 = vadd.f32 %v4000, %v4005
    %4007 = vrot.lane.b32.xlu0 %v2825, 32
    %v4008 = vpop.permute.xlu0 %4007
    %4010 = vrot.lane.b32.xlu0 %v3432, 64
    %v4011 = vpop.permute.xlu0 %4010
    %v4013 = vsel %vm258, %v4008, %v4011
    %v4015 = vrot.slane %v4013, 2
    %v4017 = vadd.f32 %v4006, %v4015
    %4018 = vrot.lane.b32.xlu0 %v2932, 32
    %v4019 = vpop.permute.xlu0 %4018
    %4021 = vrot.lane.b32.xlu0 %v3325, 64
    %v4022 = vpop.permute.xlu0 %4021
    %v4024 = vsel %vm258, %v4019, %v4022
    %v4026 = vrot.slane %v4024, 4
    %v4028 = vadd.f32 %v4017, %v4026
    %4030 = vrot.lane.b32.xlu0 %v3039, 32
    %v4031 = vpop.permute.xlu0 %4030
    %4033 = vrot.lane.b32.xlu0 %v3218, 64
    %v4034 = vpop.permute.xlu0 %4033
    %v4036 = vsel %vm258, %v4031, %v4034
    %v4038 = vrot.slane %v4036, 6
    %v4040 = vadd.f32 %v4028, %v4038
    %v4041 = vmul.f32 %v4040, 0.125
    %vm4042 = vcmask 517120
    %4043 = vst.msk [vmem:[#allocation14] sm:$0x3] %vm4042, %v4041
    // Predicated region
    $region82: #{semantic_model_forward.1} parent=1 // pred_check
      _
    $region83: #{semantic_model_forward.1} parent=1 // pred_check_branch
      %4045 = sbr.rel (0) target = $region85
    $region84: #{semantic_model_forward.1} parent=1 // pred_region
      %s4047 = ssub.s32 32, 32
      %4048 = vsyncadd [#allocation4], %s4047
      %s4050 = sshll.u32 [#allocation14], 4
      %s4051 = int_to_ptr.vmem [resolvable:$true] %s4050
      %4053 = dma.vmem_to_hbm [thread:$0]  %s4051, 32, %s13, [#allocation4]
    $region85: #{semantic_model_forward.1} parent=1 // pred_fallthru
      _
    // Predicated region
    $region86: #{semantic_model_forward.1} parent=1 // pred_check
      _
    $region87: #{semantic_model_forward.1} parent=1 // pred_check_branch
      %4055 = sbr.rel (0) target = $region89
    $region88: #{semantic_model_forward.1} parent=1 // pred_region
      %4056 = dma.done [#allocation4], 32
    $region89: #{semantic_model_forward.1} parent=1 // pred_fallthru
      _
    %4057 = vsyncpa [#allocation3], 1
    %4058 = vsyncpa [#allocation6], 1
    %4059 = vsyncpa [#allocation9], 1
    %4060 = vsyncpa [#allocation12], 1
    %4061 = vsyncpa [#allocation4], 1

</llo_original>
